<compile_context>
chip_gen: v5e
topology: v5e:2x2
jax: 0.10.0
libtpu: 0.0.40
codegen_flags: <defaults>
</compile_context>

<pallas_src>
import functools

import jax
import jax.numpy as jnp
from jax.experimental import pallas as pl
from jax.experimental.pallas import tpu as pltpu


def _round_up(x, m):
    return ((x + m - 1) // m) * m


def _pad2(w, rows, cols):
    return jnp.pad(w, ((0, rows - w.shape[0]), (0, cols - w.shape[1])))


def _grud_classifier_kernel(
    seq_ref,        # (3, T, Bp, Dp) f32   channels = [values, mask, delta]
    lo_ref,         # (Bp, 1) int32        last_obs per batch row
    xmean_ref,      # (1, Dp)  f32
    wg_ref,         # (Dp, Hp + Dp) f32    packed [Wgh | Wgx]  (decay path kept f32)
    bg_ref,         # (1, Hp + Dp)  f32    packed [bgh | bgx]
    wxm_ref,        # (2*Dp, 3*Hp)  mm-dtype  packed [[Wzx|Wrx|Whx],[Wzm|Wrm|Whm]]
    bzrh_ref,       # (1, 3*Hp)     f32    packed [bz | br | bh]
    whzr_ref,       # (Hp, 2*Hp)    mm-dtype  packed [Wzh | Wrh]
    whh_ref,        # (Hp, Hp)      mm-dtype
    wfc_ref,        # (Hp, Op)      mm-dtype
    bfc_ref,        # (1, Op)       f32
    out_ref,        # (Bp, Op)      f32
    gam_scr,        # (T*Bp, Hp + Dp) f32 scratch   [gamma_h | gamma_x]
    xm_scr,         # (T*Bp, 2*Dp)    f32 scratch   [x_hat   | mask   ]
    pre_scr,        # (T*Bp, 3*Hp)    f32 scratch   fused z/r/h~ pre-activations
):
    f32 = jnp.float32
    _, T, Bp, Dp = seq_ref.shape
    Hp = whh_ref.shape[0]
    wdt = whh_ref.dtype          # matmul operand dtype (bf16 by default)

    # ---- Phase A1: input & hidden decay factors for ALL timesteps, one matmul.
    d_flat = seq_ref[2].reshape(T * Bp, Dp)
    g_pre = jnp.dot(d_flat, wg_ref[...], preferred_element_type=f32) + bg_ref[...]
    gam_scr[...] = jnp.exp(-jnp.maximum(0.0, g_pre))        # (T*Bp, Hp+Dp)

    # ---- Phase A2: x_last / x_hat elementwise scan (fully unrolled, carries in
    #      vregs). Also packs [x_hat | m] into the fused A3 matmul operand.
    xmean_b = jnp.broadcast_to(xmean_ref[...], (Bp, Dp))    # hoisted once
    x_last = xmean_b
    for t in range(T):
        x_t = seq_ref[0, t]                                  # (Bp, Dp) values
        m_t = seq_ref[1, t]                                  # (Bp, Dp) mask
        gx = gam_scr[t * Bp:(t + 1) * Bp, Hp:]               # (Bp, Dp) gamma_x
        xm_scr[t * Bp:(t + 1) * Bp, :Dp] = (
            m_t * x_t + (1.0 - m_t) * (gx * x_last + (1.0 - gx) * xmean_b))
        xm_scr[t * Bp:(t + 1) * Bp, Dp:] = m_t
        x_last = m_t * x_t + (1.0 - m_t) * x_last

    # ---- Phase A3: all non-recurrent gate pre-activations, one fused matmul:
    #      [x_hat | m] @ [[Wx],[Wm]]  ==  x_hat@Wx + m@Wm.
    pre_scr[...] = (jnp.dot(xm_scr[...].astype(wdt), wxm_ref[...],
                            preferred_element_type=f32) + bzrh_ref[...])

    # ---- Phase B: serial GRU-D recurrence, fully unrolled (one basic block).
    lo = lo_ref[...]                                         # (Bp, 1) int32
    h = jnp.zeros((Bp, Hp), f32)
    gath = jnp.zeros((Bp, Hp), f32)
    for t in range(T):
        gh = gam_scr[t * Bp:(t + 1) * Bp, :Hp]               # (Bp, Hp) gamma_h
        h_dec = gh * h
        pre_t = pre_scr[t * Bp:(t + 1) * Bp, :]              # (Bp, 3*Hp)
        zr = jax.nn.sigmoid(
            pre_t[:, :2 * Hp]
            + jnp.dot(h_dec.astype(wdt), whzr_ref[...], preferred_element_type=f32))
        z = zr[:, :Hp]
        r = zr[:, Hp:]
        h_tilde = jnp.tanh(
            pre_t[:, 2 * Hp:]
            + jnp.dot((r * h_dec).astype(wdt), whh_ref[...],
                      preferred_element_type=f32))
        h = (1.0 - z) * h_dec + z * h_tilde
        # torch.gather(x, 0, last_obs...): keep h_t for rows where last_obs[b]==t
        gath = jnp.where(lo == t, h, gath)

    # ---- Phase C: classification head (lane-dense (Bp, Op) store).
    out_ref[...] = (jnp.dot(gath.astype(wdt), wfc_ref[...],
                            preferred_element_type=f32) + bfc_ref[...])


@functools.partial(jax.jit, static_argnames=("matmul_dtype",))
def grud_classifier_forward(inp, last_obs, params, matmul_dtype=jnp.bfloat16):
    """inp: (B, 3, T, D) float [values, mask, delta]; last_obs: (B,) int -> (B, O)."""
    B, C, T, D = inp.shape
    assert C == 3
    H = params["wzh"].shape[0]
    O = params["wfc"].shape[1]
    f32 = jnp.float32
    mm_dt = jnp.dtype(matmul_dtype)
    is_bf16 = mm_dt == jnp.dtype(jnp.bfloat16)

    Bp = _round_up(B, 16 if is_bf16 else 8)   # bf16 packs 16 sublanes per vreg
    Hp = _round_up(H, 128)                    # lane multiple for hidden / gates
    Dp = _round_up(D, 128)                    # lane multiple for features
    Op = _round_up(O, 128)                    # lane-dense output store

    p = {k: v.astype(f32) for k, v in params.items()}

    # Fused / zero-padded parameters (zero padding keeps padded lanes inert).
    wg = jnp.concatenate([_pad2(p["wgh"], Dp, Hp),
                          _pad2(p["wgx"], Dp, Dp)], axis=1)              # f32
    bg = jnp.concatenate([_pad2(p["bgh"], 1, Hp),
                          _pad2(p["bgx"], 1, Dp)], axis=1)
    wx = jnp.concatenate([_pad2(p["wzx"], Dp, Hp), _pad2(p["wrx"], Dp, Hp),
                          _pad2(p["whx"], Dp, Hp)], axis=1)
    wm = jnp.concatenate([_pad2(p["wzm"], Dp, Hp), _pad2(p["wrm"], Dp, Hp),
                          _pad2(p["whm"], Dp, Hp)], axis=1)
    wxm = jnp.concatenate([wx, wm], axis=0).astype(matmul_dtype)         # (2Dp,3Hp)
    bzrh = jnp.concatenate([_pad2(p["bz"], 1, Hp), _pad2(p["br"], 1, Hp),
                            _pad2(p["bh"], 1, Hp)], axis=1)
    whzr = jnp.concatenate([_pad2(p["wzh"], Hp, Hp),
                            _pad2(p["wrh"], Hp, Hp)], axis=1).astype(matmul_dtype)
    whh = _pad2(p["whh"], Hp, Hp).astype(matmul_dtype)
    wfc = _pad2(p["wfc"], Hp, Op).astype(matmul_dtype)
    bfc = _pad2(p["bfc"], 1, Op)
    x_mean = _pad2(p["x_mean"], 1, Dp)

    # Single layout op: (B,3,T,D) -> (3,T,Bp,Dp), batch/feature zero-padded.
    inp_p = jnp.pad(inp.astype(f32),
                    ((0, Bp - B), (0, 0), (0, 0), (0, Dp - D)))
    seq = jnp.transpose(inp_p, (1, 2, 0, 3))

    lo = jnp.pad(last_obs.astype(jnp.int32), (0, Bp - B)).reshape(Bp, 1)

    # Explicit scoped-VMEM budget (defaults are 16-32 MiB; cap below v7x 64 MiB).
    mm_b = mm_dt.itemsize
    need = 4 * (3 * T * Bp * Dp                  # seq
                + T * Bp * (Hp + Dp)             # gam_scr
                + T * Bp * 2 * Dp                # xm_scr
                + T * Bp * 3 * Hp                # pre_scr
                + Dp * (Hp + Dp)                 # wg (f32)
                + (Hp + Dp) + 3 * Hp + Op + Dp   # biases + x_mean
                + Bp * Op + Bp)                  # out + lo
    need += mm_b * (2 * Dp * 3 * Hp + Hp * 2 * Hp + Hp * Hp + Hp * Op)
    vmem_limit = int(min(max(2 * need + (2 << 20), 16 << 20), 48 << 20))

    vmem = pl.BlockSpec(memory_space=pltpu.MemorySpace.VMEM)
    out = pl.pallas_call(
        _grud_classifier_kernel,
        out_shape=jax.ShapeDtypeStruct((Bp, Op), f32),
        in_specs=[vmem] * 11,
        out_specs=vmem,
        scratch_shapes=[
            pltpu.VMEM((T * Bp, Hp + Dp), f32),   # [gamma_h | gamma_x]
            pltpu.VMEM((T * Bp, 2 * Dp), f32),    # [x_hat   | mask   ]
            pltpu.VMEM((T * Bp, 3 * Hp), f32),    # fused z/r/h~ pre-activations
        ],
        compiler_params=pltpu.CompilerParams(vmem_limit_bytes=vmem_limit),
    )(seq, lo, x_mean, wg, bg, wxm, bzrh, whzr, whh, wfc, bfc)
    return out[:B, :O]


def grud_classifier_reference(inp, last_obs, params):
    """Plain-JAX reference (lax.scan) mirroring the kernel semantics."""
    B, _, T, D = inp.shape
    H = params["wzh"].shape[0]
    x_seq = jnp.transpose(inp[:, 0], (1, 0, 2)).astype(jnp.float32)
    m_seq = jnp.transpose(inp[:, 1], (1, 0, 2)).astype(jnp.float32)
    d_seq = jnp.transpose(inp[:, 2], (1, 0, 2)).astype(jnp.float32)
    x_mean = params["x_mean"]
    p = params

    def step(carry, xs):
        h, x_last = carry
        x, m, d = xs
        gamma_x = jnp.exp(-jnp.maximum(0.0, d @ p["wgx"] + p["bgx"]))
        gamma_h = jnp.exp(-jnp.maximum(0.0, d @ p["wgh"] + p["bgh"]))
        x_hat = m * x + (1.0 - m) * (gamma_x * x_last + (1.0 - gamma_x) * x_mean)
        h = gamma_h * h
        z = jax.nn.sigmoid(x_hat @ p["wzx"] + h @ p["wzh"] + m @ p["wzm"] + p["bz"])
        r = jax.nn.sigmoid(x_hat @ p["wrx"] + h @ p["wrh"] + m @ p["wrm"] + p["br"])
        h_tilde = jnp.tanh(x_hat @ p["whx"] + (r * h) @ p["whh"] + m @ p["whm"] + p["bh"])
        h_new = (1.0 - z) * h + z * h_tilde
        x_last_new = m * x + (1.0 - m) * x_last
        return (h_new, x_last_new), h_new

    h0 = jnp.zeros((B, H), jnp.float32)
    xl0 = jnp.broadcast_to(x_mean, (B, D))
    _, hs = jax.lax.scan(step, (h0, xl0), (x_seq, m_seq, d_seq))   # hs: (T,B,H)
    idx = last_obs.astype(jnp.int32).reshape(1, B, 1)
    gathered = jnp.take_along_axis(hs, jnp.broadcast_to(idx, (1, B, H)), axis=0)[0]
    return gathered @ p["wfc"] + p["bfc"]


def init_params(key, D, H, O):
    ks = jax.random.split(key, 19)
    w = lambda k, shape, s=0.2: jax.random.normal(k, shape, jnp.float32) * s
    return {
        "x_mean": w(ks[0], (1, D)),
        "wgx": w(ks[1], (D, D)), "bgx": w(ks[2], (1, D)),
        "wgh": w(ks[3], (D, H)), "bgh": w(ks[4], (1, H)),
        "wzx": w(ks[5], (D, H)), "wzh": w(ks[6], (H, H)),
        "wzm": w(ks[7], (D, H)), "bz": w(ks[8], (1, H)),
        "wrx": w(ks[9], (D, H)), "wrh": w(ks[10], (H, H)),
        "wrm": w(ks[11], (D, H)), "br": w(ks[12], (1, H)),
        "whx": w(ks[13], (D, H)), "whh": w(ks[14], (H, H)),
        "whm": w(ks[15], (D, H)), "bh": w(ks[16], (1, H)),
        "wfc": w(ks[17], (H, O)), "bfc": w(ks[18], (1, O)),
    }


if __name__ == "__main__":
    B, D, H, O, T = 4, 8, 32, 3, 12
    key = jax.random.PRNGKey(0)
    k_val, k_mask, k_delta, k_lo, k_par = jax.random.split(key, 5)

    values = jax.random.normal(k_val, (B, T, D), jnp.float32)
    mask = (jax.random.uniform(k_mask, (B, T, D)) > 0.3).astype(jnp.float32)
    delta = jax.random.uniform(k_delta, (B, T, D), jnp.float32, 0.0, 2.0)
    inp = jnp.stack([values, mask, delta], axis=1)           # (B, 3, T, D)
    last_obs = jax.random.randint(k_lo, (B,), 0, T)          # (B,)

    params = init_params(k_par, D, H, O)

    ref = jax.block_until_ready(grud_classifier_reference(inp, last_obs, params))

    # f32 matmul path: tight check.
    out32 = jax.block_until_ready(
        grud_classifier_forward(inp, last_obs, params, matmul_dtype=jnp.float32))
    assert out32.shape == (B, O), out32.shape
    if not bool(jnp.allclose(out32, ref, atol=1e-2, rtol=1e-2)):
        raise AssertionError(
            f"f32 kernel mismatch: max abs diff {float(jnp.max(jnp.abs(out32 - ref)))}")

    # Default bf16 matmul path (MXU-native): looser check, matmul operands only.
    out16 = jax.block_until_ready(grud_classifier_forward(inp, last_obs, params))
    assert out16.shape == (B, O), out16.shape
    if not bool(jnp.allclose(out16, ref, atol=8e-2, rtol=8e-2)):
        raise AssertionError(
            f"bf16 kernel mismatch: max abs diff {float(jnp.max(jnp.abs(out16 - ref)))}")

    print("KERNEL_OK")
</pallas_src>

<mosaic_0001>
module attributes {stable_mosaic.version = 11 : i64} {
  func.func @_grud_classifier_kernel(%arg0: memref<3x12x8x128xf32, #tpu.memory_space<vmem>>, %arg1: memref<8x1xi32, #tpu.memory_space<vmem>>, %arg2: memref<1x128xf32, #tpu.memory_space<vmem>>, %arg3: memref<128x256xf32, #tpu.memory_space<vmem>>, %arg4: memref<1x256xf32, #tpu.memory_space<vmem>>, %arg5: memref<256x384xf32, #tpu.memory_space<vmem>>, %arg6: memref<1x384xf32, #tpu.memory_space<vmem>>, %arg7: memref<128x256xf32, #tpu.memory_space<vmem>>, %arg8: memref<128x128xf32, #tpu.memory_space<vmem>>, %arg9: memref<128x128xf32, #tpu.memory_space<vmem>>, %arg10: memref<1x128xf32, #tpu.memory_space<vmem>>, %arg11: memref<8x128xf32, #tpu.memory_space<vmem>>, %arg12: memref<96x256xf32, #tpu.memory_space<vmem>>, %arg13: memref<96x256xf32, #tpu.memory_space<vmem>>, %arg14: memref<96x384xf32, #tpu.memory_space<vmem>>) attributes {dimension_semantics = [], scalar_prefetch = 0 : i64, scratch_operands = 3 : i64, tpu.core_type = #tpu.core_type<tc>} {
    %c2 = arith.constant 2 : index
    %c0 = arith.constant 0 : index
    %c0_0 = arith.constant 0 : index
    %c0_1 = arith.constant 0 : index
    %0 = vector.load %arg0[%c2, %c0, %c0_0, %c0_1] : memref<3x12x8x128xf32, #tpu.memory_space<vmem>>, vector<1x12x8x128xf32>
    %1 = vector.shape_cast %0 : vector<1x12x8x128xf32> to vector<12x8x128xf32>
    %2 = vector.shape_cast %1 : vector<12x8x128xf32> to vector<96x128xf32>
    %c0_2 = arith.constant 0 : index
    %c0_3 = arith.constant 0 : index
    %3 = vector.load %arg3[%c0_2, %c0_3] : memref<128x256xf32, #tpu.memory_space<vmem>>, vector<128x256xf32>
    %cst = arith.constant dense<0.000000e+00> : vector<96x256xf32>
    %4 = tpu.matmul %2, %3, %cst {dimension_numbers = #tpu.dot_dimension_numbers<[1], [0], [0], [1], [0, 0, 1, 1], [], []>} : vector<96x128xf32>, vector<128x256xf32>, vector<96x256xf32> -> vector<96x256xf32>
    %c0_4 = arith.constant 0 : index
    %c0_5 = arith.constant 0 : index
    %5 = vector.load %arg4[%c0_4, %c0_5] : memref<1x256xf32, #tpu.memory_space<vmem>>, vector<1x256xf32>
    %6 = vector.broadcast %5 : vector<1x256xf32> to vector<96x256xf32>
    %7 = arith.addf %4, %6 : vector<96x256xf32>
    %cst_6 = arith.constant 0.000000e+00 : f32
    %8 = vector.broadcast %cst_6 : f32 to vector<96x256xf32>
    %9 = arith.maximumf %8, %7 : vector<96x256xf32>
    %cst_7 = arith.constant 0.000000e+00 : f32
    %10 = vector.broadcast %cst_7 : f32 to vector<96x256xf32>
    %11 = arith.subf %10, %9 : vector<96x256xf32>
    %12 = math.exp %11 : vector<96x256xf32>
    %c0_8 = arith.constant 0 : index
    %c0_9 = arith.constant 0 : index
    %13 = vector.load %arg12[%c0_8, %c0_9] : memref<96x256xf32, #tpu.memory_space<vmem>>, vector<96x256xf32>
    tpu.vector_store %arg12[%c0_8, %c0_9], %12 {strides = array<i32>} : memref<96x256xf32, #tpu.memory_space<vmem>>, vector<96x256xf32>,
    %c0_10 = arith.constant 0 : index
    %c0_11 = arith.constant 0 : index
    %14 = vector.load %arg2[%c0_10, %c0_11] : memref<1x128xf32, #tpu.memory_space<vmem>>, vector<1x128xf32>
    %15 = vector.shape_cast %14 : vector<1x128xf32> to vector<1x128xf32>
    %16 = vector.broadcast %15 : vector<1x128xf32> to vector<8x128xf32>
    %c0_12 = arith.constant 0 : index
    %c0_13 = arith.constant 0 : index
    %c0_14 = arith.constant 0 : index
    %c0_15 = arith.constant 0 : index
    %17 = vector.load %arg0[%c0_12, %c0_13, %c0_14, %c0_15] : memref<3x12x8x128xf32, #tpu.memory_space<vmem>>, vector<1x1x8x128xf32>
    %18 = vector.shape_cast %17 : vector<1x1x8x128xf32> to vector<8x128xf32>
    %c1 = arith.constant 1 : index
    %c0_16 = arith.constant 0 : index
    %c0_17 = arith.constant 0 : index
    %c0_18 = arith.constant 0 : index
    %19 = vector.load %arg0[%c1, %c0_16, %c0_17, %c0_18] : memref<3x12x8x128xf32, #tpu.memory_space<vmem>>, vector<1x1x8x128xf32>
    %20 = vector.shape_cast %19 : vector<1x1x8x128xf32> to vector<8x128xf32>
    %c0_19 = arith.constant 0 : index
    %c128 = arith.constant 128 : index
    %21 = vector.load %arg12[%c0_19, %c128] : memref<96x256xf32, #tpu.memory_space<vmem>>, vector<8x128xf32>
    %22 = arith.mulf %20, %18 : vector<8x128xf32>
    %cst_20 = arith.constant 1.000000e+00 : f32
    %23 = vector.broadcast %cst_20 : f32 to vector<8x128xf32>
    %24 = arith.subf %23, %20 : vector<8x128xf32>
    %25 = arith.mulf %21, %16 : vector<8x128xf32>
    %cst_21 = arith.constant 1.000000e+00 : f32
    %26 = vector.broadcast %cst_21 : f32 to vector<8x128xf32>
    %27 = arith.subf %26, %21 : vector<8x128xf32>
    %28 = arith.mulf %27, %16 : vector<8x128xf32>
    %29 = arith.addf %25, %28 : vector<8x128xf32>
    %30 = arith.mulf %24, %29 : vector<8x128xf32>
    %31 = arith.addf %22, %30 : vector<8x128xf32>
    %c0_22 = arith.constant 0 : index
    %c0_23 = arith.constant 0 : index
    %32 = vector.load %arg13[%c0_22, %c0_23] : memref<96x256xf32, #tpu.memory_space<vmem>>, vector<8x128xf32>
    tpu.vector_store %arg13[%c0_22, %c0_23], %31 {strides = array<i32>} : memref<96x256xf32, #tpu.memory_space<vmem>>, vector<8x128xf32>,
    %c0_24 = arith.constant 0 : index
    %c128_25 = arith.constant 128 : index
    %33 = vector.load %arg13[%c0_24, %c128_25] : memref<96x256xf32, #tpu.memory_space<vmem>>, vector<8x128xf32>
    tpu.vector_store %arg13[%c0_24, %c128_25], %20 {strides = array<i32>} : memref<96x256xf32, #tpu.memory_space<vmem>>, vector<8x128xf32>,
    %34 = arith.mulf %20, %18 : vector<8x128xf32>
    %cst_26 = arith.constant 1.000000e+00 : f32
    %35 = vector.broadcast %cst_26 : f32 to vector<8x128xf32>
    %36 = arith.subf %35, %20 : vector<8x128xf32>
    %37 = arith.mulf %36, %16 : vector<8x128xf32>
    %38 = arith.addf %34, %37 : vector<8x128xf32>
    %c0_27 = arith.constant 0 : index
    %c1_28 = arith.constant 1 : index
    %c0_29 = arith.constant 0 : index
    %c0_30 = arith.constant 0 : index
    %39 = vector.load %arg0[%c0_27, %c1_28, %c0_29, %c0_30] : memref<3x12x8x128xf32, #tpu.memory_space<vmem>>, vector<1x1x8x128xf32>
    %40 = vector.shape_cast %39 : vector<1x1x8x128xf32> to vector<8x128xf32>
    %c1_31 = arith.constant 1 : index
    %c1_32 = arith.constant 1 : index
    %c0_33 = arith.constant 0 : index
    %c0_34 = arith.constant 0 : index
    %41 = vector.load %arg0[%c1_31, %c1_32, %c0_33, %c0_34] : memref<3x12x8x128xf32, #tpu.memory_space<vmem>>, vector<1x1x8x128xf32>
    %42 = vector.shape_cast %41 : vector<1x1x8x128xf32> to vector<8x128xf32>
    %c8 = arith.constant 8 : index
    %c128_35 = arith.constant 128 : index
    %43 = vector.load %arg12[%c8, %c128_35] : memref<96x256xf32, #tpu.memory_space<vmem>>, vector<8x128xf32>
    %44 = arith.mulf %42, %40 : vector<8x128xf32>
    %cst_36 = arith.constant 1.000000e+00 : f32
    %45 = vector.broadcast %cst_36 : f32 to vector<8x128xf32>
    %46 = arith.subf %45, %42 : vector<8x128xf32>
    %47 = arith.mulf %43, %38 : vector<8x128xf32>
    %cst_37 = arith.constant 1.000000e+00 : f32
    %48 = vector.broadcast %cst_37 : f32 to vector<8x128xf32>
    %49 = arith.subf %48, %43 : vector<8x128xf32>
    %50 = arith.mulf %49, %16 : vector<8x128xf32>
    %51 = arith.addf %47, %50 : vector<8x128xf32>
    %52 = arith.mulf %46, %51 : vector<8x128xf32>
    %53 = arith.addf %44, %52 : vector<8x128xf32>
    %c8_38 = arith.constant 8 : index
    %c0_39 = arith.constant 0 : index
    %54 = vector.load %arg13[%c8_38, %c0_39] : memref<96x256xf32, #tpu.memory_space<vmem>>, vector<8x128xf32>
    tpu.vector_store %arg13[%c8_38, %c0_39], %53 {strides = array<i32>} : memref<96x256xf32, #tpu.memory_space<vmem>>, vector<8x128xf32>,
    %c8_40 = arith.constant 8 : index
    %c128_41 = arith.constant 128 : index
    %55 = vector.load %arg13[%c8_40, %c128_41] : memref<96x256xf32, #tpu.memory_space<vmem>>, vector<8x128xf32>
    tpu.vector_store %arg13[%c8_40, %c128_41], %42 {strides = array<i32>} : memref<96x256xf32, #tpu.memory_space<vmem>>, vector<8x128xf32>,
    %56 = arith.mulf %42, %40 : vector<8x128xf32>
    %cst_42 = arith.constant 1.000000e+00 : f32
    %57 = vector.broadcast %cst_42 : f32 to vector<8x128xf32>
    %58 = arith.subf %57, %42 : vector<8x128xf32>
    %59 = arith.mulf %58, %38 : vector<8x128xf32>
    %60 = arith.addf %56, %59 : vector<8x128xf32>
    %c0_43 = arith.constant 0 : index
    %c2_44 = arith.constant 2 : index
    %c0_45 = arith.constant 0 : index
    %c0_46 = arith.constant 0 : index
    %61 = vector.load %arg0[%c0_43, %c2_44, %c0_45, %c0_46] : memref<3x12x8x128xf32, #tpu.memory_space<vmem>>, vector<1x1x8x128xf32>
    %62 = vector.shape_cast %61 : vector<1x1x8x128xf32> to vector<8x128xf32>
    %c1_47 = arith.constant 1 : index
    %c2_48 = arith.constant 2 : index
    %c0_49 = arith.constant 0 : index
    %c0_50 = arith.constant 0 : index
    %63 = vector.load %arg0[%c1_47, %c2_48, %c0_49, %c0_50] : memref<3x12x8x128xf32, #tpu.memory_space<vmem>>, vector<1x1x8x128xf32>
    %64 = vector.shape_cast %63 : vector<1x1x8x128xf32> to vector<8x128xf32>
    %c16 = arith.constant 16 : index
    %c128_51 = arith.constant 128 : index
    %65 = vector.load %arg12[%c16, %c128_51] : memref<96x256xf32, #tpu.memory_space<vmem>>, vector<8x128xf32>
    %66 = arith.mulf %64, %62 : vector<8x128xf32>
    %cst_52 = arith.constant 1.000000e+00 : f32
    %67 = vector.broadcast %cst_52 : f32 to vector<8x128xf32>
    %68 = arith.subf %67, %64 : vector<8x128xf32>
    %69 = arith.mulf %65, %60 : vector<8x128xf32>
    %cst_53 = arith.constant 1.000000e+00 : f32
    %70 = vector.broadcast %cst_53 : f32 to vector<8x128xf32>
    %71 = arith.subf %70, %65 : vector<8x128xf32>
    %72 = arith.mulf %71, %16 : vector<8x128xf32>
    %73 = arith.addf %69, %72 : vector<8x128xf32>
    %74 = arith.mulf %68, %73 : vector<8x128xf32>
    %75 = arith.addf %66, %74 : vector<8x128xf32>
    %c16_54 = arith.constant 16 : index
    %c0_55 = arith.constant 0 : index
    %76 = vector.load %arg13[%c16_54, %c0_55] : memref<96x256xf32, #tpu.memory_space<vmem>>, vector<8x128xf32>
    tpu.vector_store %arg13[%c16_54, %c0_55], %75 {strides = array<i32>} : memref<96x256xf32, #tpu.memory_space<vmem>>, vector<8x128xf32>,
    %c16_56 = arith.constant 16 : index
    %c128_57 = arith.constant 128 : index
    %77 = vector.load %arg13[%c16_56, %c128_57] : memref<96x256xf32, #tpu.memory_space<vmem>>, vector<8x128xf32>
    tpu.vector_store %arg13[%c16_56, %c128_57], %64 {strides = array<i32>} : memref<96x256xf32, #tpu.memory_space<vmem>>, vector<8x128xf32>,
    %78 = arith.mulf %64, %62 : vector<8x128xf32>
    %cst_58 = arith.constant 1.000000e+00 : f32
    %79 = vector.broadcast %cst_58 : f32 to vector<8x128xf32>
    %80 = arith.subf %79, %64 : vector<8x128xf32>
    %81 = arith.mulf %80, %60 : vector<8x128xf32>
    %82 = arith.addf %78, %81 : vector<8x128xf32>
    %c0_59 = arith.constant 0 : index
    %c3 = arith.constant 3 : index
    %c0_60 = arith.constant 0 : index
    %c0_61 = arith.constant 0 : index
    %83 = vector.load %arg0[%c0_59, %c3, %c0_60, %c0_61] : memref<3x12x8x128xf32, #tpu.memory_space<vmem>>, vector<1x1x8x128xf32>
    %84 = vector.shape_cast %83 : vector<1x1x8x128xf32> to vector<8x128xf32>
    %c1_62 = arith.constant 1 : index
    %c3_63 = arith.constant 3 : index
    %c0_64 = arith.constant 0 : index
    %c0_65 = arith.constant 0 : index
    %85 = vector.load %arg0[%c1_62, %c3_63, %c0_64, %c0_65] : memref<3x12x8x128xf32, #tpu.memory_space<vmem>>, vector<1x1x8x128xf32>
    %86 = vector.shape_cast %85 : vector<1x1x8x128xf32> to vector<8x128xf32>
    %c24 = arith.constant 24 : index
    %c128_66 = arith.constant 128 : index
    %87 = vector.load %arg12[%c24, %c128_66] : memref<96x256xf32, #tpu.memory_space<vmem>>, vector<8x128xf32>
    %88 = arith.mulf %86, %84 : vector<8x128xf32>
    %cst_67 = arith.constant 1.000000e+00 : f32
    %89 = vector.broadcast %cst_67 : f32 to vector<8x128xf32>
    %90 = arith.subf %89, %86 : vector<8x128xf32>
    %91 = arith.mulf %87, %82 : vector<8x128xf32>
    %cst_68 = arith.constant 1.000000e+00 : f32
    %92 = vector.broadcast %cst_68 : f32 to vector<8x128xf32>
    %93 = arith.subf %92, %87 : vector<8x128xf32>
    %94 = arith.mulf %93, %16 : vector<8x128xf32>
    %95 = arith.addf %91, %94 : vector<8x128xf32>
    %96 = arith.mulf %90, %95 : vector<8x128xf32>
    %97 = arith.addf %88, %96 : vector<8x128xf32>
    %c24_69 = arith.constant 24 : index
    %c0_70 = arith.constant 0 : index
    %98 = vector.load %arg13[%c24_69, %c0_70] : memref<96x256xf32, #tpu.memory_space<vmem>>, vector<8x128xf32>
    tpu.vector_store %arg13[%c24_69, %c0_70], %97 {strides = array<i32>} : memref<96x256xf32, #tpu.memory_space<vmem>>, vector<8x128xf32>,
    %c24_71 = arith.constant 24 : index
    %c128_72 = arith.constant 128 : index
    %99 = vector.load %arg13[%c24_71, %c128_72] : memref<96x256xf32, #tpu.memory_space<vmem>>, vector<8x128xf32>
    tpu.vector_store %arg13[%c24_71, %c128_72], %86 {strides = array<i32>} : memref<96x256xf32, #tpu.memory_space<vmem>>, vector<8x128xf32>,
    %100 = arith.mulf %86, %84 : vector<8x128xf32>
    %cst_73 = arith.constant 1.000000e+00 : f32
    %101 = vector.broadcast %cst_73 : f32 to vector<8x128xf32>
    %102 = arith.subf %101, %86 : vector<8x128xf32>
    %103 = arith.mulf %102, %82 : vector<8x128xf32>
    %104 = arith.addf %100, %103 : vector<8x128xf32>
    %c0_74 = arith.constant 0 : index
    %c4 = arith.constant 4 : index
    %c0_75 = arith.constant 0 : index
    %c0_76 = arith.constant 0 : index
    %105 = vector.load %arg0[%c0_74, %c4, %c0_75, %c0_76] : memref<3x12x8x128xf32, #tpu.memory_space<vmem>>, vector<1x1x8x128xf32>
    %106 = vector.shape_cast %105 : vector<1x1x8x128xf32> to vector<8x128xf32>
    %c1_77 = arith.constant 1 : index
    %c4_78 = arith.constant 4 : index
    %c0_79 = arith.constant 0 : index
    %c0_80 = arith.constant 0 : index
    %107 = vector.load %arg0[%c1_77, %c4_78, %c0_79, %c0_80] : memref<3x12x8x128xf32, #tpu.memory_space<vmem>>, vector<1x1x8x128xf32>
    %108 = vector.shape_cast %107 : vector<1x1x8x128xf32> to vector<8x128xf32>
    %c32 = arith.constant 32 : index
    %c128_81 = arith.constant 128 : index
    %109 = vector.load %arg12[%c32, %c128_81] : memref<96x256xf32, #tpu.memory_space<vmem>>, vector<8x128xf32>
    %110 = arith.mulf %108, %106 : vector<8x128xf32>
    %cst_82 = arith.constant 1.000000e+00 : f32
    %111 = vector.broadcast %cst_82 : f32 to vector<8x128xf32>
    %112 = arith.subf %111, %108 : vector<8x128xf32>
    %113 = arith.mulf %109, %104 : vector<8x128xf32>
    %cst_83 = arith.constant 1.000000e+00 : f32
    %114 = vector.broadcast %cst_83 : f32 to vector<8x128xf32>
    %115 = arith.subf %114, %109 : vector<8x128xf32>
    %116 = arith.mulf %115, %16 : vector<8x128xf32>
    %117 = arith.addf %113, %116 : vector<8x128xf32>
    %118 = arith.mulf %112, %117 : vector<8x128xf32>
    %119 = arith.addf %110, %118 : vector<8x128xf32>
    %c32_84 = arith.constant 32 : index
    %c0_85 = arith.constant 0 : index
    %120 = vector.load %arg13[%c32_84, %c0_85] : memref<96x256xf32, #tpu.memory_space<vmem>>, vector<8x128xf32>
    tpu.vector_store %arg13[%c32_84, %c0_85], %119 {strides = array<i32>} : memref<96x256xf32, #tpu.memory_space<vmem>>, vector<8x128xf32>,
    %c32_86 = arith.constant 32 : index
    %c128_87 = arith.constant 128 : index
    %121 = vector.load %arg13[%c32_86, %c128_87] : memref<96x256xf32, #tpu.memory_space<vmem>>, vector<8x128xf32>
    tpu.vector_store %arg13[%c32_86, %c128_87], %108 {strides = array<i32>} : memref<96x256xf32, #tpu.memory_space<vmem>>, vector<8x128xf32>,
    %122 = arith.mulf %108, %106 : vector<8x128xf32>
    %cst_88 = arith.constant 1.000000e+00 : f32
    %123 = vector.broadcast %cst_88 : f32 to vector<8x128xf32>
    %124 = arith.subf %123, %108 : vector<8x128xf32>
    %125 = arith.mulf %124, %104 : vector<8x128xf32>
    %126 = arith.addf %122, %125 : vector<8x128xf32>
    %c0_89 = arith.constant 0 : index
    %c5 = arith.constant 5 : index
    %c0_90 = arith.constant 0 : index
    %c0_91 = arith.constant 0 : index
    %127 = vector.load %arg0[%c0_89, %c5, %c0_90, %c0_91] : memref<3x12x8x128xf32, #tpu.memory_space<vmem>>, vector<1x1x8x128xf32>
    %128 = vector.shape_cast %127 : vector<1x1x8x128xf32> to vector<8x128xf32>
    %c1_92 = arith.constant 1 : index
    %c5_93 = arith.constant 5 : index
    %c0_94 = arith.constant 0 : index
    %c0_95 = arith.constant 0 : index
    %129 = vector.load %arg0[%c1_92, %c5_93, %c0_94, %c0_95] : memref<3x12x8x128xf32, #tpu.memory_space<vmem>>, vector<1x1x8x128xf32>
    %130 = vector.shape_cast %129 : vector<1x1x8x128xf32> to vector<8x128xf32>
    %c40 = arith.constant 40 : index
    %c128_96 = arith.constant 128 : index
    %131 = vector.load %arg12[%c40, %c128_96] : memref<96x256xf32, #tpu.memory_space<vmem>>, vector<8x128xf32>
    %132 = arith.mulf %130, %128 : vector<8x128xf32>
    %cst_97 = arith.constant 1.000000e+00 : f32
    %133 = vector.broadcast %cst_97 : f32 to vector<8x128xf32>
    %134 = arith.subf %133, %130 : vector<8x128xf32>
    %135 = arith.mulf %131, %126 : vector<8x128xf32>
    %cst_98 = arith.constant 1.000000e+00 : f32
    %136 = vector.broadcast %cst_98 : f32 to vector<8x128xf32>
    %137 = arith.subf %136, %131 : vector<8x128xf32>
    %138 = arith.mulf %137, %16 : vector<8x128xf32>
    %139 = arith.addf %135, %138 : vector<8x128xf32>
    %140 = arith.mulf %134, %139 : vector<8x128xf32>
    %141 = arith.addf %132, %140 : vector<8x128xf32>
    %c40_99 = arith.constant 40 : index
    %c0_100 = arith.constant 0 : index
    %142 = vector.load %arg13[%c40_99, %c0_100] : memref<96x256xf32, #tpu.memory_space<vmem>>, vector<8x128xf32>
    tpu.vector_store %arg13[%c40_99, %c0_100], %141 {strides = array<i32>} : memref<96x256xf32, #tpu.memory_space<vmem>>, vector<8x128xf32>,
    %c40_101 = arith.constant 40 : index
    %c128_102 = arith.constant 128 : index
    %143 = vector.load %arg13[%c40_101, %c128_102] : memref<96x256xf32, #tpu.memory_space<vmem>>, vector<8x128xf32>
    tpu.vector_store %arg13[%c40_101, %c128_102], %130 {strides = array<i32>} : memref<96x256xf32, #tpu.memory_space<vmem>>, vector<8x128xf32>,
    %144 = arith.mulf %130, %128 : vector<8x128xf32>
    %cst_103 = arith.constant 1.000000e+00 : f32
    %145 = vector.broadcast %cst_103 : f32 to vector<8x128xf32>
    %146 = arith.subf %145, %130 : vector<8x128xf32>
    %147 = arith.mulf %146, %126 : vector<8x128xf32>
    %148 = arith.addf %144, %147 : vector<8x128xf32>
    %c0_104 = arith.constant 0 : index
    %c6 = arith.constant 6 : index
    %c0_105 = arith.constant 0 : index
    %c0_106 = arith.constant 0 : index
    %149 = vector.load %arg0[%c0_104, %c6, %c0_105, %c0_106] : memref<3x12x8x128xf32, #tpu.memory_space<vmem>>, vector<1x1x8x128xf32>
    %150 = vector.shape_cast %149 : vector<1x1x8x128xf32> to vector<8x128xf32>
    %c1_107 = arith.constant 1 : index
    %c6_108 = arith.constant 6 : index
    %c0_109 = arith.constant 0 : index
    %c0_110 = arith.constant 0 : index
    %151 = vector.load %arg0[%c1_107, %c6_108, %c0_109, %c0_110] : memref<3x12x8x128xf32, #tpu.memory_space<vmem>>, vector<1x1x8x128xf32>
    %152 = vector.shape_cast %151 : vector<1x1x8x128xf32> to vector<8x128xf32>
    %c48 = arith.constant 48 : index
    %c128_111 = arith.constant 128 : index
    %153 = vector.load %arg12[%c48, %c128_111] : memref<96x256xf32, #tpu.memory_space<vmem>>, vector<8x128xf32>
    %154 = arith.mulf %152, %150 : vector<8x128xf32>
    %cst_112 = arith.constant 1.000000e+00 : f32
    %155 = vector.broadcast %cst_112 : f32 to vector<8x128xf32>
    %156 = arith.subf %155, %152 : vector<8x128xf32>
    %157 = arith.mulf %153, %148 : vector<8x128xf32>
    %cst_113 = arith.constant 1.000000e+00 : f32
    %158 = vector.broadcast %cst_113 : f32 to vector<8x128xf32>
    %159 = arith.subf %158, %153 : vector<8x128xf32>
    %160 = arith.mulf %159, %16 : vector<8x128xf32>
    %161 = arith.addf %157, %160 : vector<8x128xf32>
    %162 = arith.mulf %156, %161 : vector<8x128xf32>
    %163 = arith.addf %154, %162 : vector<8x128xf32>
    %c48_114 = arith.constant 48 : index
    %c0_115 = arith.constant 0 : index
    %164 = vector.load %arg13[%c48_114, %c0_115] : memref<96x256xf32, #tpu.memory_space<vmem>>, vector<8x128xf32>
    tpu.vector_store %arg13[%c48_114, %c0_115], %163 {strides = array<i32>} : memref<96x256xf32, #tpu.memory_space<vmem>>, vector<8x128xf32>,
    %c48_116 = arith.constant 48 : index
    %c128_117 = arith.constant 128 : index
    %165 = vector.load %arg13[%c48_116, %c128_117] : memref<96x256xf32, #tpu.memory_space<vmem>>, vector<8x128xf32>
    tpu.vector_store %arg13[%c48_116, %c128_117], %152 {strides = array<i32>} : memref<96x256xf32, #tpu.memory_space<vmem>>, vector<8x128xf32>,
    %166 = arith.mulf %152, %150 : vector<8x128xf32>
    %cst_118 = arith.constant 1.000000e+00 : f32
    %167 = vector.broadcast %cst_118 : f32 to vector<8x128xf32>
    %168 = arith.subf %167, %152 : vector<8x128xf32>
    %169 = arith.mulf %168, %148 : vector<8x128xf32>
    %170 = arith.addf %166, %169 : vector<8x128xf32>
    %c0_119 = arith.constant 0 : index
    %c7 = arith.constant 7 : index
    %c0_120 = arith.constant 0 : index
    %c0_121 = arith.constant 0 : index
    %171 = vector.load %arg0[%c0_119, %c7, %c0_120, %c0_121] : memref<3x12x8x128xf32, #tpu.memory_space<vmem>>, vector<1x1x8x128xf32>
    %172 = vector.shape_cast %171 : vector<1x1x8x128xf32> to vector<8x128xf32>
    %c1_122 = arith.constant 1 : index
    %c7_123 = arith.constant 7 : index
    %c0_124 = arith.constant 0 : index
    %c0_125 = arith.constant 0 : index
    %173 = vector.load %arg0[%c1_122, %c7_123, %c0_124, %c0_125] : memref<3x12x8x128xf32, #tpu.memory_space<vmem>>, vector<1x1x8x128xf32>
    %174 = vector.shape_cast %173 : vector<1x1x8x128xf32> to vector<8x128xf32>
    %c56 = arith.constant 56 : index
    %c128_126 = arith.constant 128 : index
    %175 = vector.load %arg12[%c56, %c128_126] : memref<96x256xf32, #tpu.memory_space<vmem>>, vector<8x128xf32>
    %176 = arith.mulf %174, %172 : vector<8x128xf32>
    %cst_127 = arith.constant 1.000000e+00 : f32
    %177 = vector.broadcast %cst_127 : f32 to vector<8x128xf32>
    %178 = arith.subf %177, %174 : vector<8x128xf32>
    %179 = arith.mulf %175, %170 : vector<8x128xf32>
    %cst_128 = arith.constant 1.000000e+00 : f32
    %180 = vector.broadcast %cst_128 : f32 to vector<8x128xf32>
    %181 = arith.subf %180, %175 : vector<8x128xf32>
    %182 = arith.mulf %181, %16 : vector<8x128xf32>
    %183 = arith.addf %179, %182 : vector<8x128xf32>
    %184 = arith.mulf %178, %183 : vector<8x128xf32>
    %185 = arith.addf %176, %184 : vector<8x128xf32>
    %c56_129 = arith.constant 56 : index
    %c0_130 = arith.constant 0 : index
    %186 = vector.load %arg13[%c56_129, %c0_130] : memref<96x256xf32, #tpu.memory_space<vmem>>, vector<8x128xf32>
    tpu.vector_store %arg13[%c56_129, %c0_130], %185 {strides = array<i32>} : memref<96x256xf32, #tpu.memory_space<vmem>>, vector<8x128xf32>,
    %c56_131 = arith.constant 56 : index
    %c128_132 = arith.constant 128 : index
    %187 = vector.load %arg13[%c56_131, %c128_132] : memref<96x256xf32, #tpu.memory_space<vmem>>, vector<8x128xf32>
    tpu.vector_store %arg13[%c56_131, %c128_132], %174 {strides = array<i32>} : memref<96x256xf32, #tpu.memory_space<vmem>>, vector<8x128xf32>,
    %188 = arith.mulf %174, %172 : vector<8x128xf32>
    %cst_133 = arith.constant 1.000000e+00 : f32
    %189 = vector.broadcast %cst_133 : f32 to vector<8x128xf32>
    %190 = arith.subf %189, %174 : vector<8x128xf32>
    %191 = arith.mulf %190, %170 : vector<8x128xf32>
    %192 = arith.addf %188, %191 : vector<8x128xf32>
    %c0_134 = arith.constant 0 : index
    %c8_135 = arith.constant 8 : index
    %c0_136 = arith.constant 0 : index
    %c0_137 = arith.constant 0 : index
    %193 = vector.load %arg0[%c0_134, %c8_135, %c0_136, %c0_137] : memref<3x12x8x128xf32, #tpu.memory_space<vmem>>, vector<1x1x8x128xf32>
    %194 = vector.shape_cast %193 : vector<1x1x8x128xf32> to vector<8x128xf32>
    %c1_138 = arith.constant 1 : index
    %c8_139 = arith.constant 8 : index
    %c0_140 = arith.constant 0 : index
    %c0_141 = arith.constant 0 : index
    %195 = vector.load %arg0[%c1_138, %c8_139, %c0_140, %c0_141] : memref<3x12x8x128xf32, #tpu.memory_space<vmem>>, vector<1x1x8x128xf32>
    %196 = vector.shape_cast %195 : vector<1x1x8x128xf32> to vector<8x128xf32>
    %c64 = arith.constant 64 : index
    %c128_142 = arith.constant 128 : index
    %197 = vector.load %arg12[%c64, %c128_142] : memref<96x256xf32, #tpu.memory_space<vmem>>, vector<8x128xf32>
    %198 = arith.mulf %196, %194 : vector<8x128xf32>
    %cst_143 = arith.constant 1.000000e+00 : f32
    %199 = vector.broadcast %cst_143 : f32 to vector<8x128xf32>
    %200 = arith.subf %199, %196 : vector<8x128xf32>
    %201 = arith.mulf %197, %192 : vector<8x128xf32>
    %cst_144 = arith.constant 1.000000e+00 : f32
    %202 = vector.broadcast %cst_144 : f32 to vector<8x128xf32>
    %203 = arith.subf %202, %197 : vector<8x128xf32>
    %204 = arith.mulf %203, %16 : vector<8x128xf32>
    %205 = arith.addf %201, %204 : vector<8x128xf32>
    %206 = arith.mulf %200, %205 : vector<8x128xf32>
    %207 = arith.addf %198, %206 : vector<8x128xf32>
    %c64_145 = arith.constant 64 : index
    %c0_146 = arith.constant 0 : index
    %208 = vector.load %arg13[%c64_145, %c0_146] : memref<96x256xf32, #tpu.memory_space<vmem>>, vector<8x128xf32>
    tpu.vector_store %arg13[%c64_145, %c0_146], %207 {strides = array<i32>} : memref<96x256xf32, #tpu.memory_space<vmem>>, vector<8x128xf32>,
    %c64_147 = arith.constant 64 : index
    %c128_148 = arith.constant 128 : index
    %209 = vector.load %arg13[%c64_147, %c128_148] : memref<96x256xf32, #tpu.memory_space<vmem>>, vector<8x128xf32>
    tpu.vector_store %arg13[%c64_147, %c128_148], %196 {strides = array<i32>} : memref<96x256xf32, #tpu.memory_space<vmem>>, vector<8x128xf32>,
    %210 = arith.mulf %196, %194 : vector<8x128xf32>
    %cst_149 = arith.constant 1.000000e+00 : f32
    %211 = vector.broadcast %cst_149 : f32 to vector<8x128xf32>
    %212 = arith.subf %211, %196 : vector<8x128xf32>
    %213 = arith.mulf %212, %192 : vector<8x128xf32>
    %214 = arith.addf %210, %213 : vector<8x128xf32>
    %c0_150 = arith.constant 0 : index
    %c9 = arith.constant 9 : index
    %c0_151 = arith.constant 0 : index
    %c0_152 = arith.constant 0 : index
    %215 = vector.load %arg0[%c0_150, %c9, %c0_151, %c0_152] : memref<3x12x8x128xf32, #tpu.memory_space<vmem>>, vector<1x1x8x128xf32>
    %216 = vector.shape_cast %215 : vector<1x1x8x128xf32> to vector<8x128xf32>
    %c1_153 = arith.constant 1 : index
    %c9_154 = arith.constant 9 : index
    %c0_155 = arith.constant 0 : index
    %c0_156 = arith.constant 0 : index
    %217 = vector.load %arg0[%c1_153, %c9_154, %c0_155, %c0_156] : memref<3x12x8x128xf32, #tpu.memory_space<vmem>>, vector<1x1x8x128xf32>
    %218 = vector.shape_cast %217 : vector<1x1x8x128xf32> to vector<8x128xf32>
    %c72 = arith.constant 72 : index
    %c128_157 = arith.constant 128 : index
    %219 = vector.load %arg12[%c72, %c128_157] : memref<96x256xf32, #tpu.memory_space<vmem>>, vector<8x128xf32>
    %220 = arith.mulf %218, %216 : vector<8x128xf32>
    %cst_158 = arith.constant 1.000000e+00 : f32
    %221 = vector.broadcast %cst_158 : f32 to vector<8x128xf32>
    %222 = arith.subf %221, %218 : vector<8x128xf32>
    %223 = arith.mulf %219, %214 : vector<8x128xf32>
    %cst_159 = arith.constant 1.000000e+00 : f32
    %224 = vector.broadcast %cst_159 : f32 to vector<8x128xf32>
    %225 = arith.subf %224, %219 : vector<8x128xf32>
    %226 = arith.mulf %225, %16 : vector<8x128xf32>
    %227 = arith.addf %223, %226 : vector<8x128xf32>
    %228 = arith.mulf %222, %227 : vector<8x128xf32>
    %229 = arith.addf %220, %228 : vector<8x128xf32>
    %c72_160 = arith.constant 72 : index
    %c0_161 = arith.constant 0 : index
    %230 = vector.load %arg13[%c72_160, %c0_161] : memref<96x256xf32, #tpu.memory_space<vmem>>, vector<8x128xf32>
    tpu.vector_store %arg13[%c72_160, %c0_161], %229 {strides = array<i32>} : memref<96x256xf32, #tpu.memory_space<vmem>>, vector<8x128xf32>,
    %c72_162 = arith.constant 72 : index
    %c128_163 = arith.constant 128 : index
    %231 = vector.load %arg13[%c72_162, %c128_163] : memref<96x256xf32, #tpu.memory_space<vmem>>, vector<8x128xf32>
    tpu.vector_store %arg13[%c72_162, %c128_163], %218 {strides = array<i32>} : memref<96x256xf32, #tpu.memory_space<vmem>>, vector<8x128xf32>,
    %232 = arith.mulf %218, %216 : vector<8x128xf32>
    %cst_164 = arith.constant 1.000000e+00 : f32
    %233 = vector.broadcast %cst_164 : f32 to vector<8x128xf32>
    %234 = arith.subf %233, %218 : vector<8x128xf32>
    %235 = arith.mulf %234, %214 : vector<8x128xf32>
    %236 = arith.addf %232, %235 : vector<8x128xf32>
    %c0_165 = arith.constant 0 : index
    %c10 = arith.constant 10 : index
    %c0_166 = arith.constant 0 : index
    %c0_167 = arith.constant 0 : index
    %237 = vector.load %arg0[%c0_165, %c10, %c0_166, %c0_167] : memref<3x12x8x128xf32, #tpu.memory_space<vmem>>, vector<1x1x8x128xf32>
    %238 = vector.shape_cast %237 : vector<1x1x8x128xf32> to vector<8x128xf32>
    %c1_168 = arith.constant 1 : index
    %c10_169 = arith.constant 10 : index
    %c0_170 = arith.constant 0 : index
    %c0_171 = arith.constant 0 : index
    %239 = vector.load %arg0[%c1_168, %c10_169, %c0_170, %c0_171] : memref<3x12x8x128xf32, #tpu.memory_space<vmem>>, vector<1x1x8x128xf32>
    %240 = vector.shape_cast %239 : vector<1x1x8x128xf32> to vector<8x128xf32>
    %c80 = arith.constant 80 : index
    %c128_172 = arith.constant 128 : index
    %241 = vector.load %arg12[%c80, %c128_172] : memref<96x256xf32, #tpu.memory_space<vmem>>, vector<8x128xf32>
    %242 = arith.mulf %240, %238 : vector<8x128xf32>
    %cst_173 = arith.constant 1.000000e+00 : f32
    %243 = vector.broadcast %cst_173 : f32 to vector<8x128xf32>
    %244 = arith.subf %243, %240 : vector<8x128xf32>
    %245 = arith.mulf %241, %236 : vector<8x128xf32>
    %cst_174 = arith.constant 1.000000e+00 : f32
    %246 = vector.broadcast %cst_174 : f32 to vector<8x128xf32>
    %247 = arith.subf %246, %241 : vector<8x128xf32>
    %248 = arith.mulf %247, %16 : vector<8x128xf32>
    %249 = arith.addf %245, %248 : vector<8x128xf32>
    %250 = arith.mulf %244, %249 : vector<8x128xf32>
    %251 = arith.addf %242, %250 : vector<8x128xf32>
    %c80_175 = arith.constant 80 : index
    %c0_176 = arith.constant 0 : index
    %252 = vector.load %arg13[%c80_175, %c0_176] : memref<96x256xf32, #tpu.memory_space<vmem>>, vector<8x128xf32>
    tpu.vector_store %arg13[%c80_175, %c0_176], %251 {strides = array<i32>} : memref<96x256xf32, #tpu.memory_space<vmem>>, vector<8x128xf32>,
    %c80_177 = arith.constant 80 : index
    %c128_178 = arith.constant 128 : index
    %253 = vector.load %arg13[%c80_177, %c128_178] : memref<96x256xf32, #tpu.memory_space<vmem>>, vector<8x128xf32>
    tpu.vector_store %arg13[%c80_177, %c128_178], %240 {strides = array<i32>} : memref<96x256xf32, #tpu.memory_space<vmem>>, vector<8x128xf32>,
    %254 = arith.mulf %240, %238 : vector<8x128xf32>
    %cst_179 = arith.constant 1.000000e+00 : f32
    %255 = vector.broadcast %cst_179 : f32 to vector<8x128xf32>
    %256 = arith.subf %255, %240 : vector<8x128xf32>
    %257 = arith.mulf %256, %236 : vector<8x128xf32>
    %258 = arith.addf %254, %257 : vector<8x128xf32>
    %c0_180 = arith.constant 0 : index
    %c11 = arith.constant 11 : index
    %c0_181 = arith.constant 0 : index
    %c0_182 = arith.constant 0 : index
    %259 = vector.load %arg0[%c0_180, %c11, %c0_181, %c0_182] : memref<3x12x8x128xf32, #tpu.memory_space<vmem>>, vector<1x1x8x128xf32>
    %260 = vector.shape_cast %259 : vector<1x1x8x128xf32> to vector<8x128xf32>
    %c1_183 = arith.constant 1 : index
    %c11_184 = arith.constant 11 : index
    %c0_185 = arith.constant 0 : index
    %c0_186 = arith.constant 0 : index
    %261 = vector.load %arg0[%c1_183, %c11_184, %c0_185, %c0_186] : memref<3x12x8x128xf32, #tpu.memory_space<vmem>>, vector<1x1x8x128xf32>
    %262 = vector.shape_cast %261 : vector<1x1x8x128xf32> to vector<8x128xf32>
    %c88 = arith.constant 88 : index
    %c128_187 = arith.constant 128 : index
    %263 = vector.load %arg12[%c88, %c128_187] : memref<96x256xf32, #tpu.memory_space<vmem>>, vector<8x128xf32>
    %264 = arith.mulf %262, %260 : vector<8x128xf32>
    %cst_188 = arith.constant 1.000000e+00 : f32
    %265 = vector.broadcast %cst_188 : f32 to vector<8x128xf32>
    %266 = arith.subf %265, %262 : vector<8x128xf32>
    %267 = arith.mulf %263, %258 : vector<8x128xf32>
    %cst_189 = arith.constant 1.000000e+00 : f32
    %268 = vector.broadcast %cst_189 : f32 to vector<8x128xf32>
    %269 = arith.subf %268, %263 : vector<8x128xf32>
    %270 = arith.mulf %269, %16 : vector<8x128xf32>
    %271 = arith.addf %267, %270 : vector<8x128xf32>
    %272 = arith.mulf %266, %271 : vector<8x128xf32>
    %273 = arith.addf %264, %272 : vector<8x128xf32>
    %c88_190 = arith.constant 88 : index
    %c0_191 = arith.constant 0 : index
    %274 = vector.load %arg13[%c88_190, %c0_191] : memref<96x256xf32, #tpu.memory_space<vmem>>, vector<8x128xf32>
    tpu.vector_store %arg13[%c88_190, %c0_191], %273 {strides = array<i32>} : memref<96x256xf32, #tpu.memory_space<vmem>>, vector<8x128xf32>,
    %c88_192 = arith.constant 88 : index
    %c128_193 = arith.constant 128 : index
    %275 = vector.load %arg13[%c88_192, %c128_193] : memref<96x256xf32, #tpu.memory_space<vmem>>, vector<8x128xf32>
    tpu.vector_store %arg13[%c88_192, %c128_193], %262 {strides = array<i32>} : memref<96x256xf32, #tpu.memory_space<vmem>>, vector<8x128xf32>,
    %c0_194 = arith.constant 0 : index
    %c0_195 = arith.constant 0 : index
    %276 = vector.load %arg13[%c0_194, %c0_195] : memref<96x256xf32, #tpu.memory_space<vmem>>, vector<96x256xf32>
    %c0_196 = arith.constant 0 : index
    %c0_197 = arith.constant 0 : index
    %277 = vector.load %arg5[%c0_196, %c0_197] : memref<256x384xf32, #tpu.memory_space<vmem>>, vector<256x384xf32>
    %cst_198 = arith.constant dense<0.000000e+00> : vector<96x384xf32>
    %278 = tpu.matmul %276, %277, %cst_198 {dimension_numbers = #tpu.dot_dimension_numbers<[1], [0], [0], [1], [0, 0, 1, 1], [], []>} : vector<96x256xf32>, vector<256x384xf32>, vector<96x384xf32> -> vector<96x384xf32>
    %c0_199 = arith.constant 0 : index
    %c0_200 = arith.constant 0 : index
    %279 = vector.load %arg6[%c0_199, %c0_200] : memref<1x384xf32, #tpu.memory_space<vmem>>, vector<1x384xf32>
    %280 = vector.broadcast %279 : vector<1x384xf32> to vector<96x384xf32>
    %281 = arith.addf %278, %280 : vector<96x384xf32>
    %c0_201 = arith.constant 0 : index
    %c0_202 = arith.constant 0 : index
    %282 = vector.load %arg14[%c0_201, %c0_202] : memref<96x384xf32, #tpu.memory_space<vmem>>, vector<96x384xf32>
    tpu.vector_store %arg14[%c0_201, %c0_202], %281 {strides = array<i32>} : memref<96x384xf32, #tpu.memory_space<vmem>>, vector<96x384xf32>,
    %c0_203 = arith.constant 0 : index
    %c0_204 = arith.constant 0 : index
    %283 = vector.load %arg1[%c0_203, %c0_204] : memref<8x1xi32, #tpu.memory_space<vmem>>, vector<8x1xi32>
    %cst_205 = arith.constant 0.000000e+00 : f32
    %284 = vector.broadcast %cst_205 : f32 to vector<8x128xf32>
    %cst_206 = arith.constant 0.000000e+00 : f32
    %285 = vector.broadcast %cst_206 : f32 to vector<8x128xf32>
    %c0_207 = arith.constant 0 : index
    %c0_208 = arith.constant 0 : index
    %286 = vector.load %arg12[%c0_207, %c0_208] : memref<96x256xf32, #tpu.memory_space<vmem>>, vector<8x128xf32>
    %287 = arith.mulf %286, %284 : vector<8x128xf32>
    %c0_209 = arith.constant 0 : index
    %c0_210 = arith.constant 0 : index
    %288 = vector.load %arg14[%c0_209, %c0_210] : memref<96x384xf32, #tpu.memory_space<vmem>>, vector<8x384xf32>
    %289 = vector.extract_strided_slice %288 {offsets = [0, 0], sizes = [8, 256], strides = [1, 1]} : vector<8x384xf32> to vector<8x256xf32>
    %c0_211 = arith.constant 0 : index
    %c0_212 = arith.constant 0 : index
    %290 = vector.load %arg7[%c0_211, %c0_212] : memref<128x256xf32, #tpu.memory_space<vmem>>, vector<128x256xf32>
    %cst_213 = arith.constant dense<0.000000e+00> : vector<8x256xf32>
    %291 = tpu.matmul %287, %290, %cst_213 {dimension_numbers = #tpu.dot_dimension_numbers<[1], [0], [0], [1], [0, 0, 1, 1], [], []>} : vector<8x128xf32>, vector<128x256xf32>, vector<8x256xf32> -> vector<8x256xf32>
    %292 = arith.addf %289, %291 : vector<8x256xf32>
    %293 = arith.negf %292 : vector<8x256xf32>
    %294 = math.exp %293 : vector<8x256xf32>
    %cst_214 = arith.constant 1.000000e+00 : f32
    %295 = vector.broadcast %cst_214 : f32 to vector<8x256xf32>
    %296 = arith.addf %295, %294 : vector<8x256xf32>
    %297 = arith.divf %295, %296 : vector<8x256xf32>
    %298 = vector.extract_strided_slice %297 {offsets = [0, 0], sizes = [8, 128], strides = [1, 1]} : vector<8x256xf32> to vector<8x128xf32>
    %299 = vector.extract_strided_slice %297 {offsets = [0, 128], sizes = [8, 128], strides = [1, 1]} : vector<8x256xf32> to vector<8x128xf32>
    %300 = vector.extract_strided_slice %288 {offsets = [0, 256], sizes = [8, 128], strides = [1, 1]} : vector<8x384xf32> to vector<8x128xf32>
    %301 = arith.mulf %299, %287 : vector<8x128xf32>
    %c0_215 = arith.constant 0 : index
    %c0_216 = arith.constant 0 : index
    %302 = vector.load %arg8[%c0_215, %c0_216] : memref<128x128xf32, #tpu.memory_space<vmem>>, vector<128x128xf32>
    %cst_217 = arith.constant dense<0.000000e+00> : vector<8x128xf32>
    %303 = tpu.matmul %301, %302, %cst_217 {dimension_numbers = #tpu.dot_dimension_numbers<[1], [0], [0], [1], [0, 0, 1, 1], [], []>} : vector<8x128xf32>, vector<128x128xf32>, vector<8x128xf32> -> vector<8x128xf32>
    %304 = arith.addf %300, %303 : vector<8x128xf32>
    %305 = math.tanh %304 : vector<8x128xf32>
    %cst_218 = arith.constant 1.000000e+00 : f32
    %306 = vector.broadcast %cst_218 : f32 to vector<8x128xf32>
    %307 = arith.subf %306, %298 : vector<8x128xf32>
    %308 = arith.mulf %307, %287 : vector<8x128xf32>
    %309 = arith.mulf %298, %305 : vector<8x128xf32>
    %310 = arith.addf %308, %309 : vector<8x128xf32>
    %c0_i32 = arith.constant 0 : i32
    %311 = vector.broadcast %c0_i32 : i32 to vector<8x1xi32>
    %312 = arith.cmpi eq, %283, %311 : vector<8x1xi32>
    %313 = vector.shape_cast %312 : vector<8x1xi1> to vector<8x1xi1>
    %314 = vector.broadcast %313 : vector<8x1xi1> to vector<8x128xi1>
    %315 = arith.select %314, %310, %285 : vector<8x128xi1>, vector<8x128xf32>
    %c8_219 = arith.constant 8 : index
    %c0_220 = arith.constant 0 : index
    %316 = vector.load %arg12[%c8_219, %c0_220] : memref<96x256xf32, #tpu.memory_space<vmem>>, vector<8x128xf32>
    %317 = arith.mulf %316, %310 : vector<8x128xf32>
    %c8_221 = arith.constant 8 : index
    %c0_222 = arith.constant 0 : index
    %318 = vector.load %arg14[%c8_221, %c0_222] : memref<96x384xf32, #tpu.memory_space<vmem>>, vector<8x384xf32>
    %319 = vector.extract_strided_slice %318 {offsets = [0, 0], sizes = [8, 256], strides = [1, 1]} : vector<8x384xf32> to vector<8x256xf32>
    %c0_223 = arith.constant 0 : index
    %c0_224 = arith.constant 0 : index
    %320 = vector.load %arg7[%c0_223, %c0_224] : memref<128x256xf32, #tpu.memory_space<vmem>>, vector<128x256xf32>
    %cst_225 = arith.constant dense<0.000000e+00> : vector<8x256xf32>
    %321 = tpu.matmul %317, %320, %cst_225 {dimension_numbers = #tpu.dot_dimension_numbers<[1], [0], [0], [1], [0, 0, 1, 1], [], []>} : vector<8x128xf32>, vector<128x256xf32>, vector<8x256xf32> -> vector<8x256xf32>
    %322 = arith.addf %319, %321 : vector<8x256xf32>
    %323 = arith.negf %322 : vector<8x256xf32>
    %324 = math.exp %323 : vector<8x256xf32>
    %cst_226 = arith.constant 1.000000e+00 : f32
    %325 = vector.broadcast %cst_226 : f32 to vector<8x256xf32>
    %326 = arith.addf %325, %324 : vector<8x256xf32>
    %327 = arith.divf %325, %326 : vector<8x256xf32>
    %328 = vector.extract_strided_slice %327 {offsets = [0, 0], sizes = [8, 128], strides = [1, 1]} : vector<8x256xf32> to vector<8x128xf32>
    %329 = vector.extract_strided_slice %327 {offsets = [0, 128], sizes = [8, 128], strides = [1, 1]} : vector<8x256xf32> to vector<8x128xf32>
    %330 = vector.extract_strided_slice %318 {offsets = [0, 256], sizes = [8, 128], strides = [1, 1]} : vector<8x384xf32> to vector<8x128xf32>
    %331 = arith.mulf %329, %317 : vector<8x128xf32>
    %c0_227 = arith.constant 0 : index
    %c0_228 = arith.constant 0 : index
    %332 = vector.load %arg8[%c0_227, %c0_228] : memref<128x128xf32, #tpu.memory_space<vmem>>, vector<128x128xf32>
    %cst_229 = arith.constant dense<0.000000e+00> : vector<8x128xf32>
    %333 = tpu.matmul %331, %332, %cst_229 {dimension_numbers = #tpu.dot_dimension_numbers<[1], [0], [0], [1], [0, 0, 1, 1], [], []>} : vector<8x128xf32>, vector<128x128xf32>, vector<8x128xf32> -> vector<8x128xf32>
    %334 = arith.addf %330, %333 : vector<8x128xf32>
    %335 = math.tanh %334 : vector<8x128xf32>
    %cst_230 = arith.constant 1.000000e+00 : f32
    %336 = vector.broadcast %cst_230 : f32 to vector<8x128xf32>
    %337 = arith.subf %336, %328 : vector<8x128xf32>
    %338 = arith.mulf %337, %317 : vector<8x128xf32>
    %339 = arith.mulf %328, %335 : vector<8x128xf32>
    %340 = arith.addf %338, %339 : vector<8x128xf32>
    %c1_i32 = arith.constant 1 : i32
    %341 = vector.broadcast %c1_i32 : i32 to vector<8x1xi32>
    %342 = arith.cmpi eq, %283, %341 : vector<8x1xi32>
    %343 = vector.shape_cast %342 : vector<8x1xi1> to vector<8x1xi1>
    %344 = vector.broadcast %343 : vector<8x1xi1> to vector<8x128xi1>
    %345 = arith.select %344, %340, %315 : vector<8x128xi1>, vector<8x128xf32>
    %c16_231 = arith.constant 16 : index
    %c0_232 = arith.constant 0 : index
    %346 = vector.load %arg12[%c16_231, %c0_232] : memref<96x256xf32, #tpu.memory_space<vmem>>, vector<8x128xf32>
    %347 = arith.mulf %346, %340 : vector<8x128xf32>
    %c16_233 = arith.constant 16 : index
    %c0_234 = arith.constant 0 : index
    %348 = vector.load %arg14[%c16_233, %c0_234] : memref<96x384xf32, #tpu.memory_space<vmem>>, vector<8x384xf32>
    %349 = vector.extract_strided_slice %348 {offsets = [0, 0], sizes = [8, 256], strides = [1, 1]} : vector<8x384xf32> to vector<8x256xf32>
    %c0_235 = arith.constant 0 : index
    %c0_236 = arith.constant 0 : index
    %350 = vector.load %arg7[%c0_235, %c0_236] : memref<128x256xf32, #tpu.memory_space<vmem>>, vector<128x256xf32>
    %cst_237 = arith.constant dense<0.000000e+00> : vector<8x256xf32>
    %351 = tpu.matmul %347, %350, %cst_237 {dimension_numbers = #tpu.dot_dimension_numbers<[1], [0], [0], [1], [0, 0, 1, 1], [], []>} : vector<8x128xf32>, vector<128x256xf32>, vector<8x256xf32> -> vector<8x256xf32>
    %352 = arith.addf %349, %351 : vector<8x256xf32>
    %353 = arith.negf %352 : vector<8x256xf32>
    %354 = math.exp %353 : vector<8x256xf32>
    %cst_238 = arith.constant 1.000000e+00 : f32
    %355 = vector.broadcast %cst_238 : f32 to vector<8x256xf32>
    %356 = arith.addf %355, %354 : vector<8x256xf32>
    %357 = arith.divf %355, %356 : vector<8x256xf32>
    %358 = vector.extract_strided_slice %357 {offsets = [0, 0], sizes = [8, 128], strides = [1, 1]} : vector<8x256xf32> to vector<8x128xf32>
    %359 = vector.extract_strided_slice %357 {offsets = [0, 128], sizes = [8, 128], strides = [1, 1]} : vector<8x256xf32> to vector<8x128xf32>
    %360 = vector.extract_strided_slice %348 {offsets = [0, 256], sizes = [8, 128], strides = [1, 1]} : vector<8x384xf32> to vector<8x128xf32>
    %361 = arith.mulf %359, %347 : vector<8x128xf32>
    %c0_239 = arith.constant 0 : index
    %c0_240 = arith.constant 0 : index
    %362 = vector.load %arg8[%c0_239, %c0_240] : memref<128x128xf32, #tpu.memory_space<vmem>>, vector<128x128xf32>
    %cst_241 = arith.constant dense<0.000000e+00> : vector<8x128xf32>
    %363 = tpu.matmul %361, %362, %cst_241 {dimension_numbers = #tpu.dot_dimension_numbers<[1], [0], [0], [1], [0, 0, 1, 1], [], []>} : vector<8x128xf32>, vector<128x128xf32>, vector<8x128xf32> -> vector<8x128xf32>
    %364 = arith.addf %360, %363 : vector<8x128xf32>
    %365 = math.tanh %364 : vector<8x128xf32>
    %cst_242 = arith.constant 1.000000e+00 : f32
    %366 = vector.broadcast %cst_242 : f32 to vector<8x128xf32>
    %367 = arith.subf %366, %358 : vector<8x128xf32>
    %368 = arith.mulf %367, %347 : vector<8x128xf32>
    %369 = arith.mulf %358, %365 : vector<8x128xf32>
    %370 = arith.addf %368, %369 : vector<8x128xf32>
    %c2_i32 = arith.constant 2 : i32
    %371 = vector.broadcast %c2_i32 : i32 to vector<8x1xi32>
    %372 = arith.cmpi eq, %283, %371 : vector<8x1xi32>
    %373 = vector.shape_cast %372 : vector<8x1xi1> to vector<8x1xi1>
    %374 = vector.broadcast %373 : vector<8x1xi1> to vector<8x128xi1>
    %375 = arith.select %374, %370, %345 : vector<8x128xi1>, vector<8x128xf32>
    %c24_243 = arith.constant 24 : index
    %c0_244 = arith.constant 0 : index
    %376 = vector.load %arg12[%c24_243, %c0_244] : memref<96x256xf32, #tpu.memory_space<vmem>>, vector<8x128xf32>
    %377 = arith.mulf %376, %370 : vector<8x128xf32>
    %c24_245 = arith.constant 24 : index
    %c0_246 = arith.constant 0 : index
    %378 = vector.load %arg14[%c24_245, %c0_246] : memref<96x384xf32, #tpu.memory_space<vmem>>, vector<8x384xf32>
    %379 = vector.extract_strided_slice %378 {offsets = [0, 0], sizes = [8, 256], strides = [1, 1]} : vector<8x384xf32> to vector<8x256xf32>
    %c0_247 = arith.constant 0 : index
    %c0_248 = arith.constant 0 : index
    %380 = vector.load %arg7[%c0_247, %c0_248] : memref<128x256xf32, #tpu.memory_space<vmem>>, vector<128x256xf32>
    %cst_249 = arith.constant dense<0.000000e+00> : vector<8x256xf32>
    %381 = tpu.matmul %377, %380, %cst_249 {dimension_numbers = #tpu.dot_dimension_numbers<[1], [0], [0], [1], [0, 0, 1, 1], [], []>} : vector<8x128xf32>, vector<128x256xf32>, vector<8x256xf32> -> vector<8x256xf32>
    %382 = arith.addf %379, %381 : vector<8x256xf32>
    %383 = arith.negf %382 : vector<8x256xf32>
    %384 = math.exp %383 : vector<8x256xf32>
    %cst_250 = arith.constant 1.000000e+00 : f32
    %385 = vector.broadcast %cst_250 : f32 to vector<8x256xf32>
    %386 = arith.addf %385, %384 : vector<8x256xf32>
    %387 = arith.divf %385, %386 : vector<8x256xf32>
    %388 = vector.extract_strided_slice %387 {offsets = [0, 0], sizes = [8, 128], strides = [1, 1]} : vector<8x256xf32> to vector<8x128xf32>
    %389 = vector.extract_strided_slice %387 {offsets = [0, 128], sizes = [8, 128], strides = [1, 1]} : vector<8x256xf32> to vector<8x128xf32>
    %390 = vector.extract_strided_slice %378 {offsets = [0, 256], sizes = [8, 128], strides = [1, 1]} : vector<8x384xf32> to vector<8x128xf32>
    %391 = arith.mulf %389, %377 : vector<8x128xf32>
    %c0_251 = arith.constant 0 : index
    %c0_252 = arith.constant 0 : index
    %392 = vector.load %arg8[%c0_251, %c0_252] : memref<128x128xf32, #tpu.memory_space<vmem>>, vector<128x128xf32>
    %cst_253 = arith.constant dense<0.000000e+00> : vector<8x128xf32>
    %393 = tpu.matmul %391, %392, %cst_253 {dimension_numbers = #tpu.dot_dimension_numbers<[1], [0], [0], [1], [0, 0, 1, 1], [], []>} : vector<8x128xf32>, vector<128x128xf32>, vector<8x128xf32> -> vector<8x128xf32>
    %394 = arith.addf %390, %393 : vector<8x128xf32>
    %395 = math.tanh %394 : vector<8x128xf32>
    %cst_254 = arith.constant 1.000000e+00 : f32
    %396 = vector.broadcast %cst_254 : f32 to vector<8x128xf32>
    %397 = arith.subf %396, %388 : vector<8x128xf32>
    %398 = arith.mulf %397, %377 : vector<8x128xf32>
    %399 = arith.mulf %388, %395 : vector<8x128xf32>
    %400 = arith.addf %398, %399 : vector<8x128xf32>
    %c3_i32 = arith.constant 3 : i32
    %401 = vector.broadcast %c3_i32 : i32 to vector<8x1xi32>
    %402 = arith.cmpi eq, %283, %401 : vector<8x1xi32>
    %403 = vector.shape_cast %402 : vector<8x1xi1> to vector<8x1xi1>
    %404 = vector.broadcast %403 : vector<8x1xi1> to vector<8x128xi1>
    %405 = arith.select %404, %400, %375 : vector<8x128xi1>, vector<8x128xf32>
    %c32_255 = arith.constant 32 : index
    %c0_256 = arith.constant 0 : index
    %406 = vector.load %arg12[%c32_255, %c0_256] : memref<96x256xf32, #tpu.memory_space<vmem>>, vector<8x128xf32>
    %407 = arith.mulf %406, %400 : vector<8x128xf32>
    %c32_257 = arith.constant 32 : index
    %c0_258 = arith.constant 0 : index
    %408 = vector.load %arg14[%c32_257, %c0_258] : memref<96x384xf32, #tpu.memory_space<vmem>>, vector<8x384xf32>
    %409 = vector.extract_strided_slice %408 {offsets = [0, 0], sizes = [8, 256], strides = [1, 1]} : vector<8x384xf32> to vector<8x256xf32>
    %c0_259 = arith.constant 0 : index
    %c0_260 = arith.constant 0 : index
    %410 = vector.load %arg7[%c0_259, %c0_260] : memref<128x256xf32, #tpu.memory_space<vmem>>, vector<128x256xf32>
    %cst_261 = arith.constant dense<0.000000e+00> : vector<8x256xf32>
    %411 = tpu.matmul %407, %410, %cst_261 {dimension_numbers = #tpu.dot_dimension_numbers<[1], [0], [0], [1], [0, 0, 1, 1], [], []>} : vector<8x128xf32>, vector<128x256xf32>, vector<8x256xf32> -> vector<8x256xf32>
    %412 = arith.addf %409, %411 : vector<8x256xf32>
    %413 = arith.negf %412 : vector<8x256xf32>
    %414 = math.exp %413 : vector<8x256xf32>
    %cst_262 = arith.constant 1.000000e+00 : f32
    %415 = vector.broadcast %cst_262 : f32 to vector<8x256xf32>
    %416 = arith.addf %415, %414 : vector<8x256xf32>
    %417 = arith.divf %415, %416 : vector<8x256xf32>
    %418 = vector.extract_strided_slice %417 {offsets = [0, 0], sizes = [8, 128], strides = [1, 1]} : vector<8x256xf32> to vector<8x128xf32>
    %419 = vector.extract_strided_slice %417 {offsets = [0, 128], sizes = [8, 128], strides = [1, 1]} : vector<8x256xf32> to vector<8x128xf32>
    %420 = vector.extract_strided_slice %408 {offsets = [0, 256], sizes = [8, 128], strides = [1, 1]} : vector<8x384xf32> to vector<8x128xf32>
    %421 = arith.mulf %419, %407 : vector<8x128xf32>
    %c0_263 = arith.constant 0 : index
    %c0_264 = arith.constant 0 : index
    %422 = vector.load %arg8[%c0_263, %c0_264] : memref<128x128xf32, #tpu.memory_space<vmem>>, vector<128x128xf32>
    %cst_265 = arith.constant dense<0.000000e+00> : vector<8x128xf32>
    %423 = tpu.matmul %421, %422, %cst_265 {dimension_numbers = #tpu.dot_dimension_numbers<[1], [0], [0], [1], [0, 0, 1, 1], [], []>} : vector<8x128xf32>, vector<128x128xf32>, vector<8x128xf32> -> vector<8x128xf32>
    %424 = arith.addf %420, %423 : vector<8x128xf32>
    %425 = math.tanh %424 : vector<8x128xf32>
    %cst_266 = arith.constant 1.000000e+00 : f32
    %426 = vector.broadcast %cst_266 : f32 to vector<8x128xf32>
    %427 = arith.subf %426, %418 : vector<8x128xf32>
    %428 = arith.mulf %427, %407 : vector<8x128xf32>
    %429 = arith.mulf %418, %425 : vector<8x128xf32>
    %430 = arith.addf %428, %429 : vector<8x128xf32>
    %c4_i32 = arith.constant 4 : i32
    %431 = vector.broadcast %c4_i32 : i32 to vector<8x1xi32>
    %432 = arith.cmpi eq, %283, %431 : vector<8x1xi32>
    %433 = vector.shape_cast %432 : vector<8x1xi1> to vector<8x1xi1>
    %434 = vector.broadcast %433 : vector<8x1xi1> to vector<8x128xi1>
    %435 = arith.select %434, %430, %405 : vector<8x128xi1>, vector<8x128xf32>
    %c40_267 = arith.constant 40 : index
    %c0_268 = arith.constant 0 : index
    %436 = vector.load %arg12[%c40_267, %c0_268] : memref<96x256xf32, #tpu.memory_space<vmem>>, vector<8x128xf32>
    %437 = arith.mulf %436, %430 : vector<8x128xf32>
    %c40_269 = arith.constant 40 : index
    %c0_270 = arith.constant 0 : index
    %438 = vector.load %arg14[%c40_269, %c0_270] : memref<96x384xf32, #tpu.memory_space<vmem>>, vector<8x384xf32>
    %439 = vector.extract_strided_slice %438 {offsets = [0, 0], sizes = [8, 256], strides = [1, 1]} : vector<8x384xf32> to vector<8x256xf32>
    %c0_271 = arith.constant 0 : index
    %c0_272 = arith.constant 0 : index
    %440 = vector.load %arg7[%c0_271, %c0_272] : memref<128x256xf32, #tpu.memory_space<vmem>>, vector<128x256xf32>
    %cst_273 = arith.constant dense<0.000000e+00> : vector<8x256xf32>
    %441 = tpu.matmul %437, %440, %cst_273 {dimension_numbers = #tpu.dot_dimension_numbers<[1], [0], [0], [1], [0, 0, 1, 1], [], []>} : vector<8x128xf32>, vector<128x256xf32>, vector<8x256xf32> -> vector<8x256xf32>
    %442 = arith.addf %439, %441 : vector<8x256xf32>
    %443 = arith.negf %442 : vector<8x256xf32>
    %444 = math.exp %443 : vector<8x256xf32>
    %cst_274 = arith.constant 1.000000e+00 : f32
    %445 = vector.broadcast %cst_274 : f32 to vector<8x256xf32>
    %446 = arith.addf %445, %444 : vector<8x256xf32>
    %447 = arith.divf %445, %446 : vector<8x256xf32>
    %448 = vector.extract_strided_slice %447 {offsets = [0, 0], sizes = [8, 128], strides = [1, 1]} : vector<8x256xf32> to vector<8x128xf32>
    %449 = vector.extract_strided_slice %447 {offsets = [0, 128], sizes = [8, 128], strides = [1, 1]} : vector<8x256xf32> to vector<8x128xf32>
    %450 = vector.extract_strided_slice %438 {offsets = [0, 256], sizes = [8, 128], strides = [1, 1]} : vector<8x384xf32> to vector<8x128xf32>
    %451 = arith.mulf %449, %437 : vector<8x128xf32>
    %c0_275 = arith.constant 0 : index
    %c0_276 = arith.constant 0 : index
    %452 = vector.load %arg8[%c0_275, %c0_276] : memref<128x128xf32, #tpu.memory_space<vmem>>, vector<128x128xf32>
    %cst_277 = arith.constant dense<0.000000e+00> : vector<8x128xf32>
    %453 = tpu.matmul %451, %452, %cst_277 {dimension_numbers = #tpu.dot_dimension_numbers<[1], [0], [0], [1], [0, 0, 1, 1], [], []>} : vector<8x128xf32>, vector<128x128xf32>, vector<8x128xf32> -> vector<8x128xf32>
    %454 = arith.addf %450, %453 : vector<8x128xf32>
    %455 = math.tanh %454 : vector<8x128xf32>
    %cst_278 = arith.constant 1.000000e+00 : f32
    %456 = vector.broadcast %cst_278 : f32 to vector<8x128xf32>
    %457 = arith.subf %456, %448 : vector<8x128xf32>
    %458 = arith.mulf %457, %437 : vector<8x128xf32>
    %459 = arith.mulf %448, %455 : vector<8x128xf32>
    %460 = arith.addf %458, %459 : vector<8x128xf32>
    %c5_i32 = arith.constant 5 : i32
    %461 = vector.broadcast %c5_i32 : i32 to vector<8x1xi32>
    %462 = arith.cmpi eq, %283, %461 : vector<8x1xi32>
    %463 = vector.shape_cast %462 : vector<8x1xi1> to vector<8x1xi1>
    %464 = vector.broadcast %463 : vector<8x1xi1> to vector<8x128xi1>
    %465 = arith.select %464, %460, %435 : vector<8x128xi1>, vector<8x128xf32>
    %c48_279 = arith.constant 48 : index
    %c0_280 = arith.constant 0 : index
    %466 = vector.load %arg12[%c48_279, %c0_280] : memref<96x256xf32, #tpu.memory_space<vmem>>, vector<8x128xf32>
    %467 = arith.mulf %466, %460 : vector<8x128xf32>
    %c48_281 = arith.constant 48 : index
    %c0_282 = arith.constant 0 : index
    %468 = vector.load %arg14[%c48_281, %c0_282] : memref<96x384xf32, #tpu.memory_space<vmem>>, vector<8x384xf32>
    %469 = vector.extract_strided_slice %468 {offsets = [0, 0], sizes = [8, 256], strides = [1, 1]} : vector<8x384xf32> to vector<8x256xf32>
    %c0_283 = arith.constant 0 : index
    %c0_284 = arith.constant 0 : index
    %470 = vector.load %arg7[%c0_283, %c0_284] : memref<128x256xf32, #tpu.memory_space<vmem>>, vector<128x256xf32>
    %cst_285 = arith.constant dense<0.000000e+00> : vector<8x256xf32>
    %471 = tpu.matmul %467, %470, %cst_285 {dimension_numbers = #tpu.dot_dimension_numbers<[1], [0], [0], [1], [0, 0, 1, 1], [], []>} : vector<8x128xf32>, vector<128x256xf32>, vector<8x256xf32> -> vector<8x256xf32>
    %472 = arith.addf %469, %471 : vector<8x256xf32>
    %473 = arith.negf %472 : vector<8x256xf32>
    %474 = math.exp %473 : vector<8x256xf32>
    %cst_286 = arith.constant 1.000000e+00 : f32
    %475 = vector.broadcast %cst_286 : f32 to vector<8x256xf32>
    %476 = arith.addf %475, %474 : vector<8x256xf32>
    %477 = arith.divf %475, %476 : vector<8x256xf32>
    %478 = vector.extract_strided_slice %477 {offsets = [0, 0], sizes = [8, 128], strides = [1, 1]} : vector<8x256xf32> to vector<8x128xf32>
    %479 = vector.extract_strided_slice %477 {offsets = [0, 128], sizes = [8, 128], strides = [1, 1]} : vector<8x256xf32> to vector<8x128xf32>
    %480 = vector.extract_strided_slice %468 {offsets = [0, 256], sizes = [8, 128], strides = [1, 1]} : vector<8x384xf32> to vector<8x128xf32>
    %481 = arith.mulf %479, %467 : vector<8x128xf32>
    %c0_287 = arith.constant 0 : index
    %c0_288 = arith.constant 0 : index
    %482 = vector.load %arg8[%c0_287, %c0_288] : memref<128x128xf32, #tpu.memory_space<vmem>>, vector<128x128xf32>
    %cst_289 = arith.constant dense<0.000000e+00> : vector<8x128xf32>
    %483 = tpu.matmul %481, %482, %cst_289 {dimension_numbers = #tpu.dot_dimension_numbers<[1], [0], [0], [1], [0, 0, 1, 1], [], []>} : vector<8x128xf32>, vector<128x128xf32>, vector<8x128xf32> -> vector<8x128xf32>
    %484 = arith.addf %480, %483 : vector<8x128xf32>
    %485 = math.tanh %484 : vector<8x128xf32>
    %cst_290 = arith.constant 1.000000e+00 : f32
    %486 = vector.broadcast %cst_290 : f32 to vector<8x128xf32>
    %487 = arith.subf %486, %478 : vector<8x128xf32>
    %488 = arith.mulf %487, %467 : vector<8x128xf32>
    %489 = arith.mulf %478, %485 : vector<8x128xf32>
    %490 = arith.addf %488, %489 : vector<8x128xf32>
    %c6_i32 = arith.constant 6 : i32
    %491 = vector.broadcast %c6_i32 : i32 to vector<8x1xi32>
    %492 = arith.cmpi eq, %283, %491 : vector<8x1xi32>
    %493 = vector.shape_cast %492 : vector<8x1xi1> to vector<8x1xi1>
    %494 = vector.broadcast %493 : vector<8x1xi1> to vector<8x128xi1>
    %495 = arith.select %494, %490, %465 : vector<8x128xi1>, vector<8x128xf32>
    %c56_291 = arith.constant 56 : index
    %c0_292 = arith.constant 0 : index
    %496 = vector.load %arg12[%c56_291, %c0_292] : memref<96x256xf32, #tpu.memory_space<vmem>>, vector<8x128xf32>
    %497 = arith.mulf %496, %490 : vector<8x128xf32>
    %c56_293 = arith.constant 56 : index
    %c0_294 = arith.constant 0 : index
    %498 = vector.load %arg14[%c56_293, %c0_294] : memref<96x384xf32, #tpu.memory_space<vmem>>, vector<8x384xf32>
    %499 = vector.extract_strided_slice %498 {offsets = [0, 0], sizes = [8, 256], strides = [1, 1]} : vector<8x384xf32> to vector<8x256xf32>
    %c0_295 = arith.constant 0 : index
    %c0_296 = arith.constant 0 : index
    %500 = vector.load %arg7[%c0_295, %c0_296] : memref<128x256xf32, #tpu.memory_space<vmem>>, vector<128x256xf32>
    %cst_297 = arith.constant dense<0.000000e+00> : vector<8x256xf32>
    %501 = tpu.matmul %497, %500, %cst_297 {dimension_numbers = #tpu.dot_dimension_numbers<[1], [0], [0], [1], [0, 0, 1, 1], [], []>} : vector<8x128xf32>, vector<128x256xf32>, vector<8x256xf32> -> vector<8x256xf32>
    %502 = arith.addf %499, %501 : vector<8x256xf32>
    %503 = arith.negf %502 : vector<8x256xf32>
    %504 = math.exp %503 : vector<8x256xf32>
    %cst_298 = arith.constant 1.000000e+00 : f32
    %505 = vector.broadcast %cst_298 : f32 to vector<8x256xf32>
    %506 = arith.addf %505, %504 : vector<8x256xf32>
    %507 = arith.divf %505, %506 : vector<8x256xf32>
    %508 = vector.extract_strided_slice %507 {offsets = [0, 0], sizes = [8, 128], strides = [1, 1]} : vector<8x256xf32> to vector<8x128xf32>
    %509 = vector.extract_strided_slice %507 {offsets = [0, 128], sizes = [8, 128], strides = [1, 1]} : vector<8x256xf32> to vector<8x128xf32>
    %510 = vector.extract_strided_slice %498 {offsets = [0, 256], sizes = [8, 128], strides = [1, 1]} : vector<8x384xf32> to vector<8x128xf32>
    %511 = arith.mulf %509, %497 : vector<8x128xf32>
    %c0_299 = arith.constant 0 : index
    %c0_300 = arith.constant 0 : index
    %512 = vector.load %arg8[%c0_299, %c0_300] : memref<128x128xf32, #tpu.memory_space<vmem>>, vector<128x128xf32>
    %cst_301 = arith.constant dense<0.000000e+00> : vector<8x128xf32>
    %513 = tpu.matmul %511, %512, %cst_301 {dimension_numbers = #tpu.dot_dimension_numbers<[1], [0], [0], [1], [0, 0, 1, 1], [], []>} : vector<8x128xf32>, vector<128x128xf32>, vector<8x128xf32> -> vector<8x128xf32>
    %514 = arith.addf %510, %513 : vector<8x128xf32>
    %515 = math.tanh %514 : vector<8x128xf32>
    %cst_302 = arith.constant 1.000000e+00 : f32
    %516 = vector.broadcast %cst_302 : f32 to vector<8x128xf32>
    %517 = arith.subf %516, %508 : vector<8x128xf32>
    %518 = arith.mulf %517, %497 : vector<8x128xf32>
    %519 = arith.mulf %508, %515 : vector<8x128xf32>
    %520 = arith.addf %518, %519 : vector<8x128xf32>
    %c7_i32 = arith.constant 7 : i32
    %521 = vector.broadcast %c7_i32 : i32 to vector<8x1xi32>
    %522 = arith.cmpi eq, %283, %521 : vector<8x1xi32>
    %523 = vector.shape_cast %522 : vector<8x1xi1> to vector<8x1xi1>
    %524 = vector.broadcast %523 : vector<8x1xi1> to vector<8x128xi1>
    %525 = arith.select %524, %520, %495 : vector<8x128xi1>, vector<8x128xf32>
    %c64_303 = arith.constant 64 : index
    %c0_304 = arith.constant 0 : index
    %526 = vector.load %arg12[%c64_303, %c0_304] : memref<96x256xf32, #tpu.memory_space<vmem>>, vector<8x128xf32>
    %527 = arith.mulf %526, %520 : vector<8x128xf32>
    %c64_305 = arith.constant 64 : index
    %c0_306 = arith.constant 0 : index
    %528 = vector.load %arg14[%c64_305, %c0_306] : memref<96x384xf32, #tpu.memory_space<vmem>>, vector<8x384xf32>
    %529 = vector.extract_strided_slice %528 {offsets = [0, 0], sizes = [8, 256], strides = [1, 1]} : vector<8x384xf32> to vector<8x256xf32>
    %c0_307 = arith.constant 0 : index
    %c0_308 = arith.constant 0 : index
    %530 = vector.load %arg7[%c0_307, %c0_308] : memref<128x256xf32, #tpu.memory_space<vmem>>, vector<128x256xf32>
    %cst_309 = arith.constant dense<0.000000e+00> : vector<8x256xf32>
    %531 = tpu.matmul %527, %530, %cst_309 {dimension_numbers = #tpu.dot_dimension_numbers<[1], [0], [0], [1], [0, 0, 1, 1], [], []>} : vector<8x128xf32>, vector<128x256xf32>, vector<8x256xf32> -> vector<8x256xf32>
    %532 = arith.addf %529, %531 : vector<8x256xf32>
    %533 = arith.negf %532 : vector<8x256xf32>
    %534 = math.exp %533 : vector<8x256xf32>
    %cst_310 = arith.constant 1.000000e+00 : f32
    %535 = vector.broadcast %cst_310 : f32 to vector<8x256xf32>
    %536 = arith.addf %535, %534 : vector<8x256xf32>
    %537 = arith.divf %535, %536 : vector<8x256xf32>
    %538 = vector.extract_strided_slice %537 {offsets = [0, 0], sizes = [8, 128], strides = [1, 1]} : vector<8x256xf32> to vector<8x128xf32>
    %539 = vector.extract_strided_slice %537 {offsets = [0, 128], sizes = [8, 128], strides = [1, 1]} : vector<8x256xf32> to vector<8x128xf32>
    %540 = vector.extract_strided_slice %528 {offsets = [0, 256], sizes = [8, 128], strides = [1, 1]} : vector<8x384xf32> to vector<8x128xf32>
    %541 = arith.mulf %539, %527 : vector<8x128xf32>
    %c0_311 = arith.constant 0 : index
    %c0_312 = arith.constant 0 : index
    %542 = vector.load %arg8[%c0_311, %c0_312] : memref<128x128xf32, #tpu.memory_space<vmem>>, vector<128x128xf32>
    %cst_313 = arith.constant dense<0.000000e+00> : vector<8x128xf32>
    %543 = tpu.matmul %541, %542, %cst_313 {dimension_numbers = #tpu.dot_dimension_numbers<[1], [0], [0], [1], [0, 0, 1, 1], [], []>} : vector<8x128xf32>, vector<128x128xf32>, vector<8x128xf32> -> vector<8x128xf32>
    %544 = arith.addf %540, %543 : vector<8x128xf32>
    %545 = math.tanh %544 : vector<8x128xf32>
    %cst_314 = arith.constant 1.000000e+00 : f32
    %546 = vector.broadcast %cst_314 : f32 to vector<8x128xf32>
    %547 = arith.subf %546, %538 : vector<8x128xf32>
    %548 = arith.mulf %547, %527 : vector<8x128xf32>
    %549 = arith.mulf %538, %545 : vector<8x128xf32>
    %550 = arith.addf %548, %549 : vector<8x128xf32>
    %c8_i32 = arith.constant 8 : i32
    %551 = vector.broadcast %c8_i32 : i32 to vector<8x1xi32>
    %552 = arith.cmpi eq, %283, %551 : vector<8x1xi32>
    %553 = vector.shape_cast %552 : vector<8x1xi1> to vector<8x1xi1>
    %554 = vector.broadcast %553 : vector<8x1xi1> to vector<8x128xi1>
    %555 = arith.select %554, %550, %525 : vector<8x128xi1>, vector<8x128xf32>
    %c72_315 = arith.constant 72 : index
    %c0_316 = arith.constant 0 : index
    %556 = vector.load %arg12[%c72_315, %c0_316] : memref<96x256xf32, #tpu.memory_space<vmem>>, vector<8x128xf32>
    %557 = arith.mulf %556, %550 : vector<8x128xf32>
    %c72_317 = arith.constant 72 : index
    %c0_318 = arith.constant 0 : index
    %558 = vector.load %arg14[%c72_317, %c0_318] : memref<96x384xf32, #tpu.memory_space<vmem>>, vector<8x384xf32>
    %559 = vector.extract_strided_slice %558 {offsets = [0, 0], sizes = [8, 256], strides = [1, 1]} : vector<8x384xf32> to vector<8x256xf32>
    %c0_319 = arith.constant 0 : index
    %c0_320 = arith.constant 0 : index
    %560 = vector.load %arg7[%c0_319, %c0_320] : memref<128x256xf32, #tpu.memory_space<vmem>>, vector<128x256xf32>
    %cst_321 = arith.constant dense<0.000000e+00> : vector<8x256xf32>
    %561 = tpu.matmul %557, %560, %cst_321 {dimension_numbers = #tpu.dot_dimension_numbers<[1], [0], [0], [1], [0, 0, 1, 1], [], []>} : vector<8x128xf32>, vector<128x256xf32>, vector<8x256xf32> -> vector<8x256xf32>
    %562 = arith.addf %559, %561 : vector<8x256xf32>
    %563 = arith.negf %562 : vector<8x256xf32>
    %564 = math.exp %563 : vector<8x256xf32>
    %cst_322 = arith.constant 1.000000e+00 : f32
    %565 = vector.broadcast %cst_322 : f32 to vector<8x256xf32>
    %566 = arith.addf %565, %564 : vector<8x256xf32>
    %567 = arith.divf %565, %566 : vector<8x256xf32>
    %568 = vector.extract_strided_slice %567 {offsets = [0, 0], sizes = [8, 128], strides = [1, 1]} : vector<8x256xf32> to vector<8x128xf32>
    %569 = vector.extract_strided_slice %567 {offsets = [0, 128], sizes = [8, 128], strides = [1, 1]} : vector<8x256xf32> to vector<8x128xf32>
    %570 = vector.extract_strided_slice %558 {offsets = [0, 256], sizes = [8, 128], strides = [1, 1]} : vector<8x384xf32> to vector<8x128xf32>
    %571 = arith.mulf %569, %557 : vector<8x128xf32>
    %c0_323 = arith.constant 0 : index
    %c0_324 = arith.constant 0 : index
    %572 = vector.load %arg8[%c0_323, %c0_324] : memref<128x128xf32, #tpu.memory_space<vmem>>, vector<128x128xf32>
    %cst_325 = arith.constant dense<0.000000e+00> : vector<8x128xf32>
    %573 = tpu.matmul %571, %572, %cst_325 {dimension_numbers = #tpu.dot_dimension_numbers<[1], [0], [0], [1], [0, 0, 1, 1], [], []>} : vector<8x128xf32>, vector<128x128xf32>, vector<8x128xf32> -> vector<8x128xf32>
    %574 = arith.addf %570, %573 : vector<8x128xf32>
    %575 = math.tanh %574 : vector<8x128xf32>
    %cst_326 = arith.constant 1.000000e+00 : f32
    %576 = vector.broadcast %cst_326 : f32 to vector<8x128xf32>
    %577 = arith.subf %576, %568 : vector<8x128xf32>
    %578 = arith.mulf %577, %557 : vector<8x128xf32>
    %579 = arith.mulf %568, %575 : vector<8x128xf32>
    %580 = arith.addf %578, %579 : vector<8x128xf32>
    %c9_i32 = arith.constant 9 : i32
    %581 = vector.broadcast %c9_i32 : i32 to vector<8x1xi32>
    %582 = arith.cmpi eq, %283, %581 : vector<8x1xi32>
    %583 = vector.shape_cast %582 : vector<8x1xi1> to vector<8x1xi1>
    %584 = vector.broadcast %583 : vector<8x1xi1> to vector<8x128xi1>
    %585 = arith.select %584, %580, %555 : vector<8x128xi1>, vector<8x128xf32>
    %c80_327 = arith.constant 80 : index
    %c0_328 = arith.constant 0 : index
    %586 = vector.load %arg12[%c80_327, %c0_328] : memref<96x256xf32, #tpu.memory_space<vmem>>, vector<8x128xf32>
    %587 = arith.mulf %586, %580 : vector<8x128xf32>
    %c80_329 = arith.constant 80 : index
    %c0_330 = arith.constant 0 : index
    %588 = vector.load %arg14[%c80_329, %c0_330] : memref<96x384xf32, #tpu.memory_space<vmem>>, vector<8x384xf32>
    %589 = vector.extract_strided_slice %588 {offsets = [0, 0], sizes = [8, 256], strides = [1, 1]} : vector<8x384xf32> to vector<8x256xf32>
    %c0_331 = arith.constant 0 : index
    %c0_332 = arith.constant 0 : index
    %590 = vector.load %arg7[%c0_331, %c0_332] : memref<128x256xf32, #tpu.memory_space<vmem>>, vector<128x256xf32>
    %cst_333 = arith.constant dense<0.000000e+00> : vector<8x256xf32>
    %591 = tpu.matmul %587, %590, %cst_333 {dimension_numbers = #tpu.dot_dimension_numbers<[1], [0], [0], [1], [0, 0, 1, 1], [], []>} : vector<8x128xf32>, vector<128x256xf32>, vector<8x256xf32> -> vector<8x256xf32>
    %592 = arith.addf %589, %591 : vector<8x256xf32>
    %593 = arith.negf %592 : vector<8x256xf32>
    %594 = math.exp %593 : vector<8x256xf32>
    %cst_334 = arith.constant 1.000000e+00 : f32
    %595 = vector.broadcast %cst_334 : f32 to vector<8x256xf32>
    %596 = arith.addf %595, %594 : vector<8x256xf32>
    %597 = arith.divf %595, %596 : vector<8x256xf32>
    %598 = vector.extract_strided_slice %597 {offsets = [0, 0], sizes = [8, 128], strides = [1, 1]} : vector<8x256xf32> to vector<8x128xf32>
    %599 = vector.extract_strided_slice %597 {offsets = [0, 128], sizes = [8, 128], strides = [1, 1]} : vector<8x256xf32> to vector<8x128xf32>
    %600 = vector.extract_strided_slice %588 {offsets = [0, 256], sizes = [8, 128], strides = [1, 1]} : vector<8x384xf32> to vector<8x128xf32>
    %601 = arith.mulf %599, %587 : vector<8x128xf32>
    %c0_335 = arith.constant 0 : index
    %c0_336 = arith.constant 0 : index
    %602 = vector.load %arg8[%c0_335, %c0_336] : memref<128x128xf32, #tpu.memory_space<vmem>>, vector<128x128xf32>
    %cst_337 = arith.constant dense<0.000000e+00> : vector<8x128xf32>
    %603 = tpu.matmul %601, %602, %cst_337 {dimension_numbers = #tpu.dot_dimension_numbers<[1], [0], [0], [1], [0, 0, 1, 1], [], []>} : vector<8x128xf32>, vector<128x128xf32>, vector<8x128xf32> -> vector<8x128xf32>
    %604 = arith.addf %600, %603 : vector<8x128xf32>
    %605 = math.tanh %604 : vector<8x128xf32>
    %cst_338 = arith.constant 1.000000e+00 : f32
    %606 = vector.broadcast %cst_338 : f32 to vector<8x128xf32>
    %607 = arith.subf %606, %598 : vector<8x128xf32>
    %608 = arith.mulf %607, %587 : vector<8x128xf32>
    %609 = arith.mulf %598, %605 : vector<8x128xf32>
    %610 = arith.addf %608, %609 : vector<8x128xf32>
    %c10_i32 = arith.constant 10 : i32
    %611 = vector.broadcast %c10_i32 : i32 to vector<8x1xi32>
    %612 = arith.cmpi eq, %283, %611 : vector<8x1xi32>
    %613 = vector.shape_cast %612 : vector<8x1xi1> to vector<8x1xi1>
    %614 = vector.broadcast %613 : vector<8x1xi1> to vector<8x128xi1>
    %615 = arith.select %614, %610, %585 : vector<8x128xi1>, vector<8x128xf32>
    %c88_339 = arith.constant 88 : index
    %c0_340 = arith.constant 0 : index
    %616 = vector.load %arg12[%c88_339, %c0_340] : memref<96x256xf32, #tpu.memory_space<vmem>>, vector<8x128xf32>
    %617 = arith.mulf %616, %610 : vector<8x128xf32>
    %c88_341 = arith.constant 88 : index
    %c0_342 = arith.constant 0 : index
    %618 = vector.load %arg14[%c88_341, %c0_342] : memref<96x384xf32, #tpu.memory_space<vmem>>, vector<8x384xf32>
    %619 = vector.extract_strided_slice %618 {offsets = [0, 0], sizes = [8, 256], strides = [1, 1]} : vector<8x384xf32> to vector<8x256xf32>
    %c0_343 = arith.constant 0 : index
    %c0_344 = arith.constant 0 : index
    %620 = vector.load %arg7[%c0_343, %c0_344] : memref<128x256xf32, #tpu.memory_space<vmem>>, vector<128x256xf32>
    %cst_345 = arith.constant dense<0.000000e+00> : vector<8x256xf32>
    %621 = tpu.matmul %617, %620, %cst_345 {dimension_numbers = #tpu.dot_dimension_numbers<[1], [0], [0], [1], [0, 0, 1, 1], [], []>} : vector<8x128xf32>, vector<128x256xf32>, vector<8x256xf32> -> vector<8x256xf32>
    %622 = arith.addf %619, %621 : vector<8x256xf32>
    %623 = arith.negf %622 : vector<8x256xf32>
    %624 = math.exp %623 : vector<8x256xf32>
    %cst_346 = arith.constant 1.000000e+00 : f32
    %625 = vector.broadcast %cst_346 : f32 to vector<8x256xf32>
    %626 = arith.addf %625, %624 : vector<8x256xf32>
    %627 = arith.divf %625, %626 : vector<8x256xf32>
    %628 = vector.extract_strided_slice %627 {offsets = [0, 0], sizes = [8, 128], strides = [1, 1]} : vector<8x256xf32> to vector<8x128xf32>
    %629 = vector.extract_strided_slice %627 {offsets = [0, 128], sizes = [8, 128], strides = [1, 1]} : vector<8x256xf32> to vector<8x128xf32>
    %630 = vector.extract_strided_slice %618 {offsets = [0, 256], sizes = [8, 128], strides = [1, 1]} : vector<8x384xf32> to vector<8x128xf32>
    %631 = arith.mulf %629, %617 : vector<8x128xf32>
    %c0_347 = arith.constant 0 : index
    %c0_348 = arith.constant 0 : index
    %632 = vector.load %arg8[%c0_347, %c0_348] : memref<128x128xf32, #tpu.memory_space<vmem>>, vector<128x128xf32>
    %cst_349 = arith.constant dense<0.000000e+00> : vector<8x128xf32>
    %633 = tpu.matmul %631, %632, %cst_349 {dimension_numbers = #tpu.dot_dimension_numbers<[1], [0], [0], [1], [0, 0, 1, 1], [], []>} : vector<8x128xf32>, vector<128x128xf32>, vector<8x128xf32> -> vector<8x128xf32>
    %634 = arith.addf %630, %633 : vector<8x128xf32>
    %635 = math.tanh %634 : vector<8x128xf32>
    %cst_350 = arith.constant 1.000000e+00 : f32
    %636 = vector.broadcast %cst_350 : f32 to vector<8x128xf32>
    %637 = arith.subf %636, %628 : vector<8x128xf32>
    %638 = arith.mulf %637, %617 : vector<8x128xf32>
    %639 = arith.mulf %628, %635 : vector<8x128xf32>
    %640 = arith.addf %638, %639 : vector<8x128xf32>
    %c11_i32 = arith.constant 11 : i32
    %641 = vector.broadcast %c11_i32 : i32 to vector<8x1xi32>
    %642 = arith.cmpi eq, %283, %641 : vector<8x1xi32>
    %643 = vector.shape_cast %642 : vector<8x1xi1> to vector<8x1xi1>
    %644 = vector.broadcast %643 : vector<8x1xi1> to vector<8x128xi1>
    %645 = arith.select %644, %640, %615 : vector<8x128xi1>, vector<8x128xf32>
    %c0_351 = arith.constant 0 : index
    %c0_352 = arith.constant 0 : index
    %646 = vector.load %arg9[%c0_351, %c0_352] : memref<128x128xf32, #tpu.memory_space<vmem>>, vector<128x128xf32>
    %cst_353 = arith.constant dense<0.000000e+00> : vector<8x128xf32>
    %647 = tpu.matmul %645, %646, %cst_353 {dimension_numbers = #tpu.dot_dimension_numbers<[1], [0], [0], [1], [0, 0, 1, 1], [], []>} : vector<8x128xf32>, vector<128x128xf32>, vector<8x128xf32> -> vector<8x128xf32>
    %c0_354 = arith.constant 0 : index
    %c0_355 = arith.constant 0 : index
    %648 = vector.load %arg10[%c0_354, %c0_355] : memref<1x128xf32, #tpu.memory_space<vmem>>, vector<1x128xf32>
    %649 = vector.broadcast %648 : vector<1x128xf32> to vector<8x128xf32>
    %650 = arith.addf %647, %649 : vector<8x128xf32>
    %c0_356 = arith.constant 0 : index
    %c0_357 = arith.constant 0 : index
    %651 = vector.load %arg11[%c0_356, %c0_357] : memref<8x128xf32, #tpu.memory_space<vmem>>, vector<8x128xf32>
    tpu.vector_store %arg11[%c0_356, %c0_357], %650 {strides = array<i32>} : memref<8x128xf32, #tpu.memory_space<vmem>>, vector<8x128xf32>,
    return
  }
}

</mosaic_0001>

<llo_original>
// kernel: grud_classifier_forward.1
$region0: #{grud_classifier_forward.1}
  #allocation0 [shape = 'u32[]', space=smem, size = 0x4, offset = 0x4, fixed_abs, tag = 'smem constant byte address 0x4 - core index']
  #allocation1 [shape = 'u32[72,128]{1,0:T(1,128)}', space=vmem, size = 0x9000, scoped, tag = 'internal scratch']
  #allocation2 [shape = 'f32[96,256]{1,0:T(8,128)}', space=vmem, size = 0x18000, scoped, tag = 'scratch operand']
  #allocation3 [shape = 'f32[96,256]{1,0:T(8,128)}', space=vmem, size = 0x18000, scoped, tag = 'scratch operand']
  #allocation4 [shape = 'f32[96,384]{1,0:T(8,128)}', space=vmem, size = 0x24000, scoped, tag = 'scratch operand']
  %s0 = inlined_call_operand.vmem [shape: f32[3,12,8,128], index: 0, kind: input, shape index: {}]
  %s1 = inlined_call_operand.vmem [shape: s32[8,1], index: 1, kind: input, shape index: {}]
  %s2 = inlined_call_operand.vmem [shape: f32[1,128], index: 2, kind: input, shape index: {}]
  %s3 = inlined_call_operand.vmem [shape: f32[128,256], index: 3, kind: input, shape index: {}]
  %s4 = inlined_call_operand.vmem [shape: f32[1,256], index: 4, kind: input, shape index: {}]
  %s5 = inlined_call_operand.vmem [shape: f32[256,384], index: 5, kind: input, shape index: {}]
  %s6 = inlined_call_operand.vmem [shape: f32[1,384], index: 6, kind: input, shape index: {}]
  %s7 = inlined_call_operand.vmem [shape: f32[128,256], index: 7, kind: input, shape index: {}]
  %s8 = inlined_call_operand.vmem [shape: f32[128,128], index: 8, kind: input, shape index: {}]
  %s9 = inlined_call_operand.vmem [shape: f32[128,128], index: 9, kind: input, shape index: {}]
  %s10 = inlined_call_operand.vmem [shape: f32[1,128], index: 10, kind: input, shape index: {}]
  %s11 = inlined_call_operand.vmem [shape: f32[8,128], index: 11, kind: output, shape index: {}]
  %s12 = sld [smem:[#allocation0]]
  $region54: #{grud_classifier_forward.1} parent=0
    _
  %s14 = ssub.s32 1, %s12
  %s15 = scalar_select 0, %s14, %s12
  // Predicated region
  $region2: #{grud_classifier_forward.1} parent=0 // pred_check
    _
  $region3: #{grud_classifier_forward.1} parent=0 // pred_check_branch
    %17 = sbr.rel (0) target = $region5
  $region4: #{grud_classifier_forward.1} parent=0 // pred_region
    _
  $region5: #{grud_classifier_forward.1} parent=0 // pred_fallthru
    _
  // Predicated region
  $region6: #{grud_classifier_forward.1} parent=0 // pred_check
    _
  $region7: #{grud_classifier_forward.1} parent=0 // pred_check_branch
    %19 = sbr.rel (0) target = $region9
  $region8: #{grud_classifier_forward.1} parent=0 // pred_region
    _
  $region9: #{grud_classifier_forward.1} parent=0 // pred_fallthru
    _
  // Predicated region
  $region10: #{grud_classifier_forward.1} parent=0 // pred_check
    _
  $region11: #{grud_classifier_forward.1} parent=0 // pred_check_branch
    %21 = sbr.rel (0) target = $region13
  $region12: #{grud_classifier_forward.1} parent=0 // pred_region
    _
  $region13: #{grud_classifier_forward.1} parent=0 // pred_fallthru
    _
  // Predicated region
  $region14: #{grud_classifier_forward.1} parent=0 // pred_check
    _
  $region15: #{grud_classifier_forward.1} parent=0 // pred_check_branch
    %23 = sbr.rel (0) target = $region17
  $region16: #{grud_classifier_forward.1} parent=0 // pred_region
    _
  $region17: #{grud_classifier_forward.1} parent=0 // pred_fallthru
    _
  // Predicated region
  $region18: #{grud_classifier_forward.1} parent=0 // pred_check
    _
  $region19: #{grud_classifier_forward.1} parent=0 // pred_check_branch
    %25 = sbr.rel (0) target = $region21
  $region20: #{grud_classifier_forward.1} parent=0 // pred_region
    _
  $region21: #{grud_classifier_forward.1} parent=0 // pred_fallthru
    _
  // Predicated region
  $region22: #{grud_classifier_forward.1} parent=0 // pred_check
    _
  $region23: #{grud_classifier_forward.1} parent=0 // pred_check_branch
    %27 = sbr.rel (0) target = $region25
  $region24: #{grud_classifier_forward.1} parent=0 // pred_region
    _
  $region25: #{grud_classifier_forward.1} parent=0 // pred_fallthru
    _
  // Predicated region
  $region26: #{grud_classifier_forward.1} parent=0 // pred_check
    _
  $region27: #{grud_classifier_forward.1} parent=0 // pred_check_branch
    %29 = sbr.rel (0) target = $region29
  $region28: #{grud_classifier_forward.1} parent=0 // pred_region
    _
  $region29: #{grud_classifier_forward.1} parent=0 // pred_fallthru
    _
  // Predicated region
  $region30: #{grud_classifier_forward.1} parent=0 // pred_check
    _
  $region31: #{grud_classifier_forward.1} parent=0 // pred_check_branch
    %31 = sbr.rel (0) target = $region33
  $region32: #{grud_classifier_forward.1} parent=0 // pred_region
    _
  $region33: #{grud_classifier_forward.1} parent=0 // pred_fallthru
    _
  // Predicated region
  $region34: #{grud_classifier_forward.1} parent=0 // pred_check
    _
  $region35: #{grud_classifier_forward.1} parent=0 // pred_check_branch
    %33 = sbr.rel (0) target = $region37
  $region36: #{grud_classifier_forward.1} parent=0 // pred_region
    _
  $region37: #{grud_classifier_forward.1} parent=0 // pred_fallthru
    _
  // Predicated region
  $region38: #{grud_classifier_forward.1} parent=0 // pred_check
    _
  $region39: #{grud_classifier_forward.1} parent=0 // pred_check_branch
    %35 = sbr.rel (0) target = $region41
  $region40: #{grud_classifier_forward.1} parent=0 // pred_region
    _
  $region41: #{grud_classifier_forward.1} parent=0 // pred_fallthru
    _
  // Predicated region
  $region42: #{grud_classifier_forward.1} parent=0 // pred_check
    _
  $region43: #{grud_classifier_forward.1} parent=0 // pred_check_branch
    %37 = sbr.rel (0) target = $region45
  $region44: #{grud_classifier_forward.1} parent=0 // pred_region
    _
  $region45: #{grud_classifier_forward.1} parent=0 // pred_fallthru
    _
  %s38 = scalar_lea.vmem %s0, 192
  %v39 = vld [vmem:[%s38] sm:$0xff]
  %v40 = vld [vmem:[%s38 + $0x8] sm:$0xff]
  %v41 = vld [vmem:[%s38 + $0x10] sm:$0xff]
  %v42 = vld [vmem:[%s38 + $0x18] sm:$0xff]
  %v43 = vld [vmem:[%s38 + $0x20] sm:$0xff]
  %v44 = vld [vmem:[%s38 + $0x28] sm:$0xff]
  %v45 = vld [vmem:[%s38 + $0x30] sm:$0xff]
  %v46 = vld [vmem:[%s38 + $0x38] sm:$0xff]
  %v47 = vld [vmem:[%s38 + $0x40] sm:$0xff]
  %v48 = vld [vmem:[%s38 + $0x48] sm:$0xff]
  %v49 = vld [vmem:[%s38 + $0x50] sm:$0xff]
  %v50 = vld [vmem:[%s38 + $0x58] sm:$0xff]
  %v51 = vld [vmem:[%s3] sm:$0xff]
  %v52 = vld [vmem:[%s3 + $0x8] sm:$0xff]
  %v53 = vld [vmem:[%s3 + $0x10] sm:$0xff]
  %v54 = vld [vmem:[%s3 + $0x18] sm:$0xff]
  %v55 = vld [vmem:[%s3 + $0x20] sm:$0xff]
  %v56 = vld [vmem:[%s3 + $0x28] sm:$0xff]
  %v57 = vld [vmem:[%s3 + $0x30] sm:$0xff]
  %v58 = vld [vmem:[%s3 + $0x38] sm:$0xff]
  %v59 = vld [vmem:[%s3 + $0x40] sm:$0xff]
  %v60 = vld [vmem:[%s3 + $0x48] sm:$0xff]
  %v61 = vld [vmem:[%s3 + $0x50] sm:$0xff]
  %v62 = vld [vmem:[%s3 + $0x58] sm:$0xff]
  %v63 = vld [vmem:[%s3 + $0x60] sm:$0xff]
  %v64 = vld [vmem:[%s3 + $0x68] sm:$0xff]
  %v65 = vld [vmem:[%s3 + $0x70] sm:$0xff]
  %v66 = vld [vmem:[%s3 + $0x78] sm:$0xff]
  %v67 = vld [vmem:[%s3 + $0x80] sm:$0xff]
  %v68 = vld [vmem:[%s3 + $0x88] sm:$0xff]
  %v69 = vld [vmem:[%s3 + $0x90] sm:$0xff]
  %v70 = vld [vmem:[%s3 + $0x98] sm:$0xff]
  %v71 = vld [vmem:[%s3 + $0xa0] sm:$0xff]
  %v72 = vld [vmem:[%s3 + $0xa8] sm:$0xff]
  %v73 = vld [vmem:[%s3 + $0xb0] sm:$0xff]
  %v74 = vld [vmem:[%s3 + $0xb8] sm:$0xff]
  %v75 = vld [vmem:[%s3 + $0xc0] sm:$0xff]
  %v76 = vld [vmem:[%s3 + $0xc8] sm:$0xff]
  %v77 = vld [vmem:[%s3 + $0xd0] sm:$0xff]
  %v78 = vld [vmem:[%s3 + $0xd8] sm:$0xff]
  %v79 = vld [vmem:[%s3 + $0xe0] sm:$0xff]
  %v80 = vld [vmem:[%s3 + $0xe8] sm:$0xff]
  %v81 = vld [vmem:[%s3 + $0xf0] sm:$0xff]
  %v82 = vld [vmem:[%s3 + $0xf8] sm:$0xff]
  %v83 = vld [vmem:[%s4] sm:$0x3]
  %v85 = vperm.slane %v83, 0
  %v86 = vperm.slane %v83, 1
  %89 = vmatpush.msra.mxu0 %v81
  %90 = vmatpush.msra.mxu0 %v79
  %91 = vmatpush.msra.mxu0 %v77
  %92 = vmatpush.msra.mxu0 %v75
  %93 = vmatpush.msra.mxu0 %v73
  %94 = vmatpush.msra.mxu0 %v71
  %95 = vmatpush.msra.mxu0 %v69
  %96 = vmatpush.msra.mxu0 %v67
  %97 = vmatpush.msra.mxu0 %v65
  %98 = vmatpush.msra.mxu0 %v63
  %99 = vmatpush.msra.mxu0 %v61
  %100 = vmatpush.msra.mxu0 %v59
  %101 = vmatpush.msra.mxu0 %v57
  %102 = vmatpush.msra.mxu0 %v55
  %103 = vmatpush.msra.mxu0 %v53
  %104 = vmatpush.msra.mxu0 %v51
  %105 = vmatmul.f32.gmra.mxu0 %v39
  %v106 = vpop.f32.mrf.mxu0
  %v107 = vadd.f32 %v85, %v106
  %108 = vmatmul.f32.gmra.mxu0 %v40
  %v109 = vpop.f32.mrf.mxu0
  %v110 = vadd.f32 %v85, %v109
  %111 = vmatmul.f32.gmra.mxu0 %v41
  %v112 = vpop.f32.mrf.mxu0
  %v113 = vadd.f32 %v85, %v112
  %114 = vmatmul.f32.gmra.mxu0 %v42
  %v115 = vpop.f32.mrf.mxu0
  %v116 = vadd.f32 %v85, %v115
  %117 = vmatmul.f32.gmra.mxu0 %v43
  %v118 = vpop.f32.mrf.mxu0
  %v119 = vadd.f32 %v85, %v118
  %120 = vmatmul.f32.gmra.mxu0 %v44
  %v121 = vpop.f32.mrf.mxu0
  %v122 = vadd.f32 %v85, %v121
  %123 = vmatmul.f32.gmra.mxu0 %v45
  %v124 = vpop.f32.mrf.mxu0
  %v125 = vadd.f32 %v85, %v124
  %126 = vmatmul.f32.gmra.mxu0 %v46
  %v127 = vpop.f32.mrf.mxu0
  %v128 = vadd.f32 %v85, %v127
  %129 = vmatmul.f32.gmra.mxu0 %v47
  %v130 = vpop.f32.mrf.mxu0
  %v131 = vadd.f32 %v85, %v130
  %132 = vmatmul.f32.gmra.mxu0 %v48
  %v133 = vpop.f32.mrf.mxu0
  %v134 = vadd.f32 %v85, %v133
  %135 = vmatmul.f32.gmra.mxu0 %v49
  %v136 = vpop.f32.mrf.mxu0
  %v137 = vadd.f32 %v85, %v136
  %138 = vmatmul.f32.gmra.mxu0 %v50
  %v139 = vpop.f32.mrf.mxu0
  %v140 = vadd.f32 %v85, %v139
  %141 = vdwg.mxu0
  %142 = vmatpush.msra.mxu0 %v82
  %143 = vmatpush.msra.mxu0 %v80
  %144 = vmatpush.msra.mxu0 %v78
  %145 = vmatpush.msra.mxu0 %v76
  %146 = vmatpush.msra.mxu0 %v74
  %147 = vmatpush.msra.mxu0 %v72
  %148 = vmatpush.msra.mxu0 %v70
  %149 = vmatpush.msra.mxu0 %v68
  %150 = vmatpush.msra.mxu0 %v66
  %151 = vmatpush.msra.mxu0 %v64
  %152 = vmatpush.msra.mxu0 %v62
  %153 = vmatpush.msra.mxu0 %v60
  %154 = vmatpush.msra.mxu0 %v58
  %155 = vmatpush.msra.mxu0 %v56
  %156 = vmatpush.msra.mxu0 %v54
  %157 = vmatpush.msra.mxu0 %v52
  %158 = vmatmul.f32.gmra.mxu0 %v39
  %v159 = vpop.f32.mrf.mxu0
  %v160 = vadd.f32 %v86, %v159
  %161 = vmatmul.f32.gmra.mxu0 %v40
  %v162 = vpop.f32.mrf.mxu0
  %v163 = vadd.f32 %v86, %v162
  %164 = vmatmul.f32.gmra.mxu0 %v41
  %v165 = vpop.f32.mrf.mxu0
  %v166 = vadd.f32 %v86, %v165
  %167 = vmatmul.f32.gmra.mxu0 %v42
  %v168 = vpop.f32.mrf.mxu0
  %v169 = vadd.f32 %v86, %v168
  %170 = vmatmul.f32.gmra.mxu0 %v43
  %v171 = vpop.f32.mrf.mxu0
  %v172 = vadd.f32 %v86, %v171
  %173 = vmatmul.f32.gmra.mxu0 %v44
  %v174 = vpop.f32.mrf.mxu0
  %v175 = vadd.f32 %v86, %v174
  %176 = vmatmul.f32.gmra.mxu0 %v45
  %v177 = vpop.f32.mrf.mxu0
  %v178 = vadd.f32 %v86, %v177
  %179 = vmatmul.f32.gmra.mxu0 %v46
  %v180 = vpop.f32.mrf.mxu0
  %v181 = vadd.f32 %v86, %v180
  %182 = vmatmul.f32.gmra.mxu0 %v47
  %v183 = vpop.f32.mrf.mxu0
  %v184 = vadd.f32 %v86, %v183
  %185 = vmatmul.f32.gmra.mxu0 %v48
  %v186 = vpop.f32.mrf.mxu0
  %v187 = vadd.f32 %v86, %v186
  %188 = vmatmul.f32.gmra.mxu0 %v49
  %v189 = vpop.f32.mrf.mxu0
  %v190 = vadd.f32 %v86, %v189
  %191 = vmatmul.f32.gmra.mxu0 %v50
  %v192 = vpop.f32.mrf.mxu0
  %v193 = vadd.f32 %v86, %v192
  %194 = vdwg.mxu0
  %v195 = vmax.f32 %v107, 0.0
  %v196 = vmax.f32 %v160, 0.0
  %v197 = vmax.f32 %v110, 0.0
  %v198 = vmax.f32 %v163, 0.0
  %v199 = vmax.f32 %v113, 0.0
  %v200 = vmax.f32 %v166, 0.0
  %v201 = vmax.f32 %v116, 0.0
  %v202 = vmax.f32 %v169, 0.0
  %v203 = vmax.f32 %v119, 0.0
  %v204 = vmax.f32 %v172, 0.0
  %v205 = vmax.f32 %v122, 0.0
  %v206 = vmax.f32 %v175, 0.0
  %v207 = vmax.f32 %v125, 0.0
  %v208 = vmax.f32 %v178, 0.0
  %v209 = vmax.f32 %v128, 0.0
  %v210 = vmax.f32 %v181, 0.0
  %v211 = vmax.f32 %v131, 0.0
  %v212 = vmax.f32 %v184, 0.0
  %v213 = vmax.f32 %v134, 0.0
  %v214 = vmax.f32 %v187, 0.0
  %v215 = vmax.f32 %v137, 0.0
  %v216 = vmax.f32 %v190, 0.0
  %v217 = vmax.f32 %v140, 0.0
  %v218 = vmax.f32 %v193, 0.0
  %v219 = vsub.f32 0.0, %v195
  %v220 = vsub.f32 0.0, %v196
  %v221 = vsub.f32 0.0, %v197
  %v222 = vsub.f32 0.0, %v198
  %v223 = vsub.f32 0.0, %v199
  %v224 = vsub.f32 0.0, %v200
  %v225 = vsub.f32 0.0, %v201
  %v226 = vsub.f32 0.0, %v202
  %v227 = vsub.f32 0.0, %v203
  %v228 = vsub.f32 0.0, %v204
  %v229 = vsub.f32 0.0, %v205
  %v230 = vsub.f32 0.0, %v206
  %v231 = vsub.f32 0.0, %v207
  %v232 = vsub.f32 0.0, %v208
  %v233 = vsub.f32 0.0, %v209
  %v234 = vsub.f32 0.0, %v210
  %v235 = vsub.f32 0.0, %v211
  %v236 = vsub.f32 0.0, %v212
  %v237 = vsub.f32 0.0, %v213
  %v238 = vsub.f32 0.0, %v214
  %v239 = vsub.f32 0.0, %v215
  %v240 = vsub.f32 0.0, %v216
  %v241 = vsub.f32 0.0, %v217
  %v242 = vsub.f32 0.0, %v218
  %v243 = vmul.f32 %v219, 1.442695
  %v244 = vpow.pop %v243
  %v245 = vmul.f32 %v220, 1.442695
  %v246 = vpow.pop %v245
  %v247 = vmul.f32 %v221, 1.442695
  %v248 = vpow.pop %v247
  %v249 = vmul.f32 %v222, 1.442695
  %v250 = vpow.pop %v249
  %v251 = vmul.f32 %v223, 1.442695
  %v252 = vpow.pop %v251
  %v253 = vmul.f32 %v224, 1.442695
  %v254 = vpow.pop %v253
  %v255 = vmul.f32 %v225, 1.442695
  %v256 = vpow.pop %v255
  %v257 = vmul.f32 %v226, 1.442695
  %v258 = vpow.pop %v257
  %v259 = vmul.f32 %v227, 1.442695
  %v260 = vpow.pop %v259
  %v261 = vmul.f32 %v228, 1.442695
  %v262 = vpow.pop %v261
  %v263 = vmul.f32 %v229, 1.442695
  %v264 = vpow.pop %v263
  %v265 = vmul.f32 %v230, 1.442695
  %v266 = vpow.pop %v265
  %v267 = vmul.f32 %v231, 1.442695
  %v268 = vpow.pop %v267
  %v269 = vmul.f32 %v232, 1.442695
  %v270 = vpow.pop %v269
  %v271 = vmul.f32 %v233, 1.442695
  %v272 = vpow.pop %v271
  %v273 = vmul.f32 %v234, 1.442695
  %v274 = vpow.pop %v273
  %v275 = vmul.f32 %v235, 1.442695
  %v276 = vpow.pop %v275
  %v277 = vmul.f32 %v236, 1.442695
  %v278 = vpow.pop %v277
  %v279 = vmul.f32 %v237, 1.442695
  %v280 = vpow.pop %v279
  %v281 = vmul.f32 %v238, 1.442695
  %v282 = vpow.pop %v281
  %v283 = vmul.f32 %v239, 1.442695
  %v284 = vpow.pop %v283
  %v285 = vmul.f32 %v240, 1.442695
  %v286 = vpow.pop %v285
  %v287 = vmul.f32 %v241, 1.442695
  %v288 = vpow.pop %v287
  %v289 = vmul.f32 %v242, 1.442695
  %v290 = vpow.pop %v289
  %291 = vst [vmem:[#allocation2] sm:$0xff] %v244
  %292 = vst [vmem:[#allocation2 + $0x8] sm:$0xff] %v246
  %293 = vst [vmem:[#allocation2 + $0x10] sm:$0xff] %v248
  %294 = vst [vmem:[#allocation2 + $0x18] sm:$0xff] %v250
  %295 = vst [vmem:[#allocation2 + $0x20] sm:$0xff] %v252
  %296 = vst [vmem:[#allocation2 + $0x28] sm:$0xff] %v254
  %297 = vst [vmem:[#allocation2 + $0x30] sm:$0xff] %v256
  %298 = vst [vmem:[#allocation2 + $0x38] sm:$0xff] %v258
  %299 = vst [vmem:[#allocation2 + $0x40] sm:$0xff] %v260
  %300 = vst [vmem:[#allocation2 + $0x48] sm:$0xff] %v262
  %301 = vst [vmem:[#allocation2 + $0x50] sm:$0xff] %v264
  %302 = vst [vmem:[#allocation2 + $0x58] sm:$0xff] %v266
  %303 = vst [vmem:[#allocation2 + $0x60] sm:$0xff] %v268
  %304 = vst [vmem:[#allocation2 + $0x68] sm:$0xff] %v270
  %305 = vst [vmem:[#allocation2 + $0x70] sm:$0xff] %v272
  %306 = vst [vmem:[#allocation2 + $0x78] sm:$0xff] %v274
  %307 = vst [vmem:[#allocation2 + $0x80] sm:$0xff] %v276
  %308 = vst [vmem:[#allocation2 + $0x88] sm:$0xff] %v278
  %309 = vst [vmem:[#allocation2 + $0x90] sm:$0xff] %v280
  %310 = vst [vmem:[#allocation2 + $0x98] sm:$0xff] %v282
  %311 = vst [vmem:[#allocation2 + $0xa0] sm:$0xff] %v284
  %312 = vst [vmem:[#allocation2 + $0xa8] sm:$0xff] %v286
  %313 = vst [vmem:[#allocation2 + $0xb0] sm:$0xff] %v288
  %314 = vst [vmem:[#allocation2 + $0xb8] sm:$0xff] %v290
  %v315 = vld [vmem:[%s2] sm:$0x1]
  %v317 = vperm.slane %v315, 0
  %v319 = vld [vmem:[%s0] sm:$0xff]
  %s320 = scalar_lea.vmem %s0, 96
  %v321 = vld [vmem:[%s320] sm:$0xff]
  %v322 = vld [vmem:[#allocation2 + $0x8] sm:$0xff]
  %v323 = vmul.f32 %v321, %v319
  %v324 = vsub.f32 1.0, %v321
  %v325 = vmul.f32 %v322, %v317
  %v326 = vsub.f32 1.0, %v322
  %v327 = vmul.f32 %v326, %v317
  %v328 = vadd.f32 %v325, %v327
  %v329 = vmul.f32 %v324, %v328
  %v330 = vadd.f32 %v323, %v329
  %331 = vst [vmem:[#allocation3] sm:$0xff] %v330
  %332 = vst [vmem:[#allocation3 + $0x8] sm:$0xff] %v321
  %v333 = vmul.f32 %v324, %v317
  %v334 = vadd.f32 %v323, %v333
  %s335 = scalar_lea.vmem %s0, 8
  %v336 = vld [vmem:[%s335] sm:$0xff]
  %s337 = scalar_lea.vmem %s0, 104
  %v338 = vld [vmem:[%s337] sm:$0xff]
  %v339 = vld [vmem:[#allocation2 + $0x18] sm:$0xff]
  %v340 = vmul.f32 %v338, %v336
  %v341 = vsub.f32 1.0, %v338
  %v342 = vmul.f32 %v339, %v334
  %v343 = vsub.f32 1.0, %v339
  %v344 = vmul.f32 %v343, %v317
  %v345 = vadd.f32 %v342, %v344
  %v346 = vmul.f32 %v341, %v345
  %v347 = vadd.f32 %v340, %v346
  %348 = vst [vmem:[#allocation3 + $0x10] sm:$0xff] %v347
  %349 = vst [vmem:[#allocation3 + $0x18] sm:$0xff] %v338
  %v350 = vmul.f32 %v341, %v334
  %v351 = vadd.f32 %v340, %v350
  %s352 = scalar_lea.vmem %s0, 16
  %v353 = vld [vmem:[%s352] sm:$0xff]
  %s354 = scalar_lea.vmem %s0, 112
  %v355 = vld [vmem:[%s354] sm:$0xff]
  %v356 = vld [vmem:[#allocation2 + $0x28] sm:$0xff]
  %v357 = vmul.f32 %v355, %v353
  %v358 = vsub.f32 1.0, %v355
  %v359 = vmul.f32 %v356, %v351
  %v360 = vsub.f32 1.0, %v356
  %v361 = vmul.f32 %v360, %v317
  %v362 = vadd.f32 %v359, %v361
  %v363 = vmul.f32 %v358, %v362
  %v364 = vadd.f32 %v357, %v363
  %365 = vst [vmem:[#allocation3 + $0x20] sm:$0xff] %v364
  %366 = vst [vmem:[#allocation3 + $0x28] sm:$0xff] %v355
  %v367 = vmul.f32 %v358, %v351
  %v368 = vadd.f32 %v357, %v367
  %s369 = scalar_lea.vmem %s0, 24
  %v370 = vld [vmem:[%s369] sm:$0xff]
  %s371 = scalar_lea.vmem %s0, 120
  %v372 = vld [vmem:[%s371] sm:$0xff]
  %v373 = vld [vmem:[#allocation2 + $0x38] sm:$0xff]
  %v374 = vmul.f32 %v372, %v370
  %v375 = vsub.f32 1.0, %v372
  %v376 = vmul.f32 %v373, %v368
  %v377 = vsub.f32 1.0, %v373
  %v378 = vmul.f32 %v377, %v317
  %v379 = vadd.f32 %v376, %v378
  %v380 = vmul.f32 %v375, %v379
  %v381 = vadd.f32 %v374, %v380
  %382 = vst [vmem:[#allocation3 + $0x30] sm:$0xff] %v381
  %383 = vst [vmem:[#allocation3 + $0x38] sm:$0xff] %v372
  %v384 = vmul.f32 %v375, %v368
  %v385 = vadd.f32 %v374, %v384
  %s386 = scalar_lea.vmem %s0, 32
  %v387 = vld [vmem:[%s386] sm:$0xff]
  %s388 = scalar_lea.vmem %s0, 128
  %v389 = vld [vmem:[%s388] sm:$0xff]
  %v390 = vld [vmem:[#allocation2 + $0x48] sm:$0xff]
  %v391 = vmul.f32 %v389, %v387
  %v392 = vsub.f32 1.0, %v389
  %v393 = vmul.f32 %v390, %v385
  %v394 = vsub.f32 1.0, %v390
  %v395 = vmul.f32 %v394, %v317
  %v396 = vadd.f32 %v393, %v395
  %v397 = vmul.f32 %v392, %v396
  %v398 = vadd.f32 %v391, %v397
  %399 = vst [vmem:[#allocation3 + $0x40] sm:$0xff] %v398
  %400 = vst [vmem:[#allocation3 + $0x48] sm:$0xff] %v389
  %v401 = vmul.f32 %v392, %v385
  %v402 = vadd.f32 %v391, %v401
  %s403 = scalar_lea.vmem %s0, 40
  %v404 = vld [vmem:[%s403] sm:$0xff]
  %s405 = scalar_lea.vmem %s0, 136
  %v406 = vld [vmem:[%s405] sm:$0xff]
  %v407 = vld [vmem:[#allocation2 + $0x58] sm:$0xff]
  %v408 = vmul.f32 %v406, %v404
  %v409 = vsub.f32 1.0, %v406
  %v410 = vmul.f32 %v407, %v402
  %v411 = vsub.f32 1.0, %v407
  %v412 = vmul.f32 %v411, %v317
  %v413 = vadd.f32 %v410, %v412
  %v414 = vmul.f32 %v409, %v413
  %v415 = vadd.f32 %v408, %v414
  %416 = vst [vmem:[#allocation3 + $0x50] sm:$0xff] %v415
  %417 = vst [vmem:[#allocation3 + $0x58] sm:$0xff] %v406
  %v418 = vmul.f32 %v409, %v402
  %v419 = vadd.f32 %v408, %v418
  %s420 = scalar_lea.vmem %s0, 48
  %v421 = vld [vmem:[%s420] sm:$0xff]
  %s422 = scalar_lea.vmem %s0, 144
  %v423 = vld [vmem:[%s422] sm:$0xff]
  %v424 = vld [vmem:[#allocation2 + $0x68] sm:$0xff]
  %v425 = vmul.f32 %v423, %v421
  %v426 = vsub.f32 1.0, %v423
  %v427 = vmul.f32 %v424, %v419
  %v428 = vsub.f32 1.0, %v424
  %v429 = vmul.f32 %v428, %v317
  %v430 = vadd.f32 %v427, %v429
  %v431 = vmul.f32 %v426, %v430
  %v432 = vadd.f32 %v425, %v431
  %433 = vst [vmem:[#allocation3 + $0x60] sm:$0xff] %v432
  %434 = vst [vmem:[#allocation3 + $0x68] sm:$0xff] %v423
  %v435 = vmul.f32 %v426, %v419
  %v436 = vadd.f32 %v425, %v435
  %s437 = scalar_lea.vmem %s0, 56
  %v438 = vld [vmem:[%s437] sm:$0xff]
  %s439 = scalar_lea.vmem %s0, 152
  %v440 = vld [vmem:[%s439] sm:$0xff]
  %v441 = vld [vmem:[#allocation2 + $0x78] sm:$0xff]
  %v442 = vmul.f32 %v440, %v438
  %v443 = vsub.f32 1.0, %v440
  %v444 = vmul.f32 %v441, %v436
  %v445 = vsub.f32 1.0, %v441
  %v446 = vmul.f32 %v445, %v317
  %v447 = vadd.f32 %v444, %v446
  %v448 = vmul.f32 %v443, %v447
  %v449 = vadd.f32 %v442, %v448
  %450 = vst [vmem:[#allocation3 + $0x70] sm:$0xff] %v449
  %451 = vst [vmem:[#allocation3 + $0x78] sm:$0xff] %v440
  %v452 = vmul.f32 %v443, %v436
  %v453 = vadd.f32 %v442, %v452
  %s454 = scalar_lea.vmem %s0, 64
  %v455 = vld [vmem:[%s454] sm:$0xff]
  %s456 = scalar_lea.vmem %s0, 160
  %v457 = vld [vmem:[%s456] sm:$0xff]
  %v458 = vld [vmem:[#allocation2 + $0x88] sm:$0xff]
  %v459 = vmul.f32 %v457, %v455
  %v460 = vsub.f32 1.0, %v457
  %v461 = vmul.f32 %v458, %v453
  %v462 = vsub.f32 1.0, %v458
  %v463 = vmul.f32 %v462, %v317
  %v464 = vadd.f32 %v461, %v463
  %v465 = vmul.f32 %v460, %v464
  %v466 = vadd.f32 %v459, %v465
  %467 = vst [vmem:[#allocation3 + $0x80] sm:$0xff] %v466
  %468 = vst [vmem:[#allocation3 + $0x88] sm:$0xff] %v457
  %v469 = vmul.f32 %v460, %v453
  %v470 = vadd.f32 %v459, %v469
  %s471 = scalar_lea.vmem %s0, 72
  %v472 = vld [vmem:[%s471] sm:$0xff]
  %s473 = scalar_lea.vmem %s0, 168
  %v474 = vld [vmem:[%s473] sm:$0xff]
  %v475 = vld [vmem:[#allocation2 + $0x98] sm:$0xff]
  %v476 = vmul.f32 %v474, %v472
  %v477 = vsub.f32 1.0, %v474
  %v478 = vmul.f32 %v475, %v470
  %v479 = vsub.f32 1.0, %v475
  %v480 = vmul.f32 %v479, %v317
  %v481 = vadd.f32 %v478, %v480
  %v482 = vmul.f32 %v477, %v481
  %v483 = vadd.f32 %v476, %v482
  %484 = vst [vmem:[#allocation3 + $0x90] sm:$0xff] %v483
  %485 = vst [vmem:[#allocation3 + $0x98] sm:$0xff] %v474
  %v486 = vmul.f32 %v477, %v470
  %v487 = vadd.f32 %v476, %v486
  %s488 = scalar_lea.vmem %s0, 80
  %v489 = vld [vmem:[%s488] sm:$0xff]
  %s490 = scalar_lea.vmem %s0, 176
  %v491 = vld [vmem:[%s490] sm:$0xff]
  %v492 = vld [vmem:[#allocation2 + $0xa8] sm:$0xff]
  %v493 = vmul.f32 %v491, %v489
  %v494 = vsub.f32 1.0, %v491
  %v495 = vmul.f32 %v492, %v487
  %v496 = vsub.f32 1.0, %v492
  %v497 = vmul.f32 %v496, %v317
  %v498 = vadd.f32 %v495, %v497
  %v499 = vmul.f32 %v494, %v498
  %v500 = vadd.f32 %v493, %v499
  %501 = vst [vmem:[#allocation3 + $0xa0] sm:$0xff] %v500
  %502 = vst [vmem:[#allocation3 + $0xa8] sm:$0xff] %v491
  %v503 = vmul.f32 %v494, %v487
  %v504 = vadd.f32 %v493, %v503
  %s505 = scalar_lea.vmem %s0, 88
  %v506 = vld [vmem:[%s505] sm:$0xff]
  %s507 = scalar_lea.vmem %s0, 184
  %v508 = vld [vmem:[%s507] sm:$0xff]
  %v509 = vld [vmem:[#allocation2 + $0xb8] sm:$0xff]
  %v510 = vmul.f32 %v508, %v506
  %v511 = vsub.f32 1.0, %v508
  %v512 = vmul.f32 %v509, %v504
  %v513 = vsub.f32 1.0, %v509
  %v514 = vmul.f32 %v513, %v317
  %v515 = vadd.f32 %v512, %v514
  %v516 = vmul.f32 %v511, %v515
  %v517 = vadd.f32 %v510, %v516
  %518 = vst [vmem:[#allocation3 + $0xb0] sm:$0xff] %v517
  %519 = vst [vmem:[#allocation3 + $0xb8] sm:$0xff] %v508
  %v520 = vld [vmem:[#allocation3] sm:$0xff]
  %v521 = vld [vmem:[#allocation3 + $0x8] sm:$0xff]
  %v522 = vld [vmem:[#allocation3 + $0x10] sm:$0xff]
  %v523 = vld [vmem:[#allocation3 + $0x18] sm:$0xff]
  %v524 = vld [vmem:[#allocation3 + $0x20] sm:$0xff]
  %v525 = vld [vmem:[#allocation3 + $0x28] sm:$0xff]
  %v526 = vld [vmem:[#allocation3 + $0x30] sm:$0xff]
  %v527 = vld [vmem:[#allocation3 + $0x38] sm:$0xff]
  %v528 = vld [vmem:[#allocation3 + $0x40] sm:$0xff]
  %v529 = vld [vmem:[#allocation3 + $0x48] sm:$0xff]
  %v530 = vld [vmem:[#allocation3 + $0x50] sm:$0xff]
  %v531 = vld [vmem:[#allocation3 + $0x58] sm:$0xff]
  %v532 = vld [vmem:[#allocation3 + $0x60] sm:$0xff]
  %v533 = vld [vmem:[#allocation3 + $0x68] sm:$0xff]
  %v534 = vld [vmem:[#allocation3 + $0x70] sm:$0xff]
  %v535 = vld [vmem:[#allocation3 + $0x78] sm:$0xff]
  %v536 = vld [vmem:[#allocation3 + $0x80] sm:$0xff]
  %v537 = vld [vmem:[#allocation3 + $0x88] sm:$0xff]
  %v538 = vld [vmem:[#allocation3 + $0x90] sm:$0xff]
  %v539 = vld [vmem:[#allocation3 + $0x98] sm:$0xff]
  %v540 = vld [vmem:[#allocation3 + $0xa0] sm:$0xff]
  %v541 = vld [vmem:[#allocation3 + $0xa8] sm:$0xff]
  %v542 = vld [vmem:[#allocation3 + $0xb0] sm:$0xff]
  %v543 = vld [vmem:[#allocation3 + $0xb8] sm:$0xff]
  %v544 = vld [vmem:[%s5] sm:$0xff]
  %v545 = vld [vmem:[%s5 + $0x8] sm:$0xff]
  %v546 = vld [vmem:[%s5 + $0x10] sm:$0xff]
  %v547 = vld [vmem:[%s5 + $0x18] sm:$0xff]
  %v548 = vld [vmem:[%s5 + $0x20] sm:$0xff]
  %v549 = vld [vmem:[%s5 + $0x28] sm:$0xff]
  %v550 = vld [vmem:[%s5 + $0x30] sm:$0xff]
  %v551 = vld [vmem:[%s5 + $0x38] sm:$0xff]
  %v552 = vld [vmem:[%s5 + $0x40] sm:$0xff]
  %v553 = vld [vmem:[%s5 + $0x48] sm:$0xff]
  %v554 = vld [vmem:[%s5 + $0x50] sm:$0xff]
  %v555 = vld [vmem:[%s5 + $0x58] sm:$0xff]
  %v556 = vld [vmem:[%s5 + $0x60] sm:$0xff]
  %v557 = vld [vmem:[%s5 + $0x68] sm:$0xff]
  %v558 = vld [vmem:[%s5 + $0x70] sm:$0xff]
  %v559 = vld [vmem:[%s5 + $0x78] sm:$0xff]
  %v560 = vld [vmem:[%s5 + $0x80] sm:$0xff]
  %v561 = vld [vmem:[%s5 + $0x88] sm:$0xff]
  %v562 = vld [vmem:[%s5 + $0x90] sm:$0xff]
  %v563 = vld [vmem:[%s5 + $0x98] sm:$0xff]
  %v564 = vld [vmem:[%s5 + $0xa0] sm:$0xff]
  %v565 = vld [vmem:[%s5 + $0xa8] sm:$0xff]
  %v566 = vld [vmem:[%s5 + $0xb0] sm:$0xff]
  %v567 = vld [vmem:[%s5 + $0xb8] sm:$0xff]
  %v568 = vld [vmem:[%s5 + $0xc0] sm:$0xff]
  %v569 = vld [vmem:[%s5 + $0xc8] sm:$0xff]
  %v570 = vld [vmem:[%s5 + $0xd0] sm:$0xff]
  %v571 = vld [vmem:[%s5 + $0xd8] sm:$0xff]
  %v572 = vld [vmem:[%s5 + $0xe0] sm:$0xff]
  %v573 = vld [vmem:[%s5 + $0xe8] sm:$0xff]
  %v574 = vld [vmem:[%s5 + $0xf0] sm:$0xff]
  %v575 = vld [vmem:[%s5 + $0xf8] sm:$0xff]
  %v576 = vld [vmem:[%s5 + $0x100] sm:$0xff]
  %v577 = vld [vmem:[%s5 + $0x108] sm:$0xff]
  %v578 = vld [vmem:[%s5 + $0x110] sm:$0xff]
  %v579 = vld [vmem:[%s5 + $0x118] sm:$0xff]
  %v580 = vld [vmem:[%s5 + $0x120] sm:$0xff]
  %v581 = vld [vmem:[%s5 + $0x128] sm:$0xff]
  %v582 = vld [vmem:[%s5 + $0x130] sm:$0xff]
  %v583 = vld [vmem:[%s5 + $0x138] sm:$0xff]
  %v584 = vld [vmem:[%s5 + $0x140] sm:$0xff]
  %v585 = vld [vmem:[%s5 + $0x148] sm:$0xff]
  %v586 = vld [vmem:[%s5 + $0x150] sm:$0xff]
  %v587 = vld [vmem:[%s5 + $0x158] sm:$0xff]
  %v588 = vld [vmem:[%s5 + $0x160] sm:$0xff]
  %v589 = vld [vmem:[%s5 + $0x168] sm:$0xff]
  %v590 = vld [vmem:[%s5 + $0x170] sm:$0xff]
  %v591 = vld [vmem:[%s5 + $0x178] sm:$0xff]
  %v592 = vld [vmem:[%s5 + $0x180] sm:$0xff]
  %v593 = vld [vmem:[%s5 + $0x188] sm:$0xff]
  %v594 = vld [vmem:[%s5 + $0x190] sm:$0xff]
  %v595 = vld [vmem:[%s5 + $0x198] sm:$0xff]
  %v596 = vld [vmem:[%s5 + $0x1a0] sm:$0xff]
  %v597 = vld [vmem:[%s5 + $0x1a8] sm:$0xff]
  %v598 = vld [vmem:[%s5 + $0x1b0] sm:$0xff]
  %v599 = vld [vmem:[%s5 + $0x1b8] sm:$0xff]
  %v600 = vld [vmem:[%s5 + $0x1c0] sm:$0xff]
  %v601 = vld [vmem:[%s5 + $0x1c8] sm:$0xff]
  %v602 = vld [vmem:[%s5 + $0x1d0] sm:$0xff]
  %v603 = vld [vmem:[%s5 + $0x1d8] sm:$0xff]
  %v604 = vld [vmem:[%s5 + $0x1e0] sm:$0xff]
  %v605 = vld [vmem:[%s5 + $0x1e8] sm:$0xff]
  %v606 = vld [vmem:[%s5 + $0x1f0] sm:$0xff]
  %v607 = vld [vmem:[%s5 + $0x1f8] sm:$0xff]
  %v608 = vld [vmem:[%s5 + $0x200] sm:$0xff]
  %v609 = vld [vmem:[%s5 + $0x208] sm:$0xff]
  %v610 = vld [vmem:[%s5 + $0x210] sm:$0xff]
  %v611 = vld [vmem:[%s5 + $0x218] sm:$0xff]
  %v612 = vld [vmem:[%s5 + $0x220] sm:$0xff]
  %v613 = vld [vmem:[%s5 + $0x228] sm:$0xff]
  %v614 = vld [vmem:[%s5 + $0x230] sm:$0xff]
  %v615 = vld [vmem:[%s5 + $0x238] sm:$0xff]
  %v616 = vld [vmem:[%s5 + $0x240] sm:$0xff]
  %v617 = vld [vmem:[%s5 + $0x248] sm:$0xff]
  %v618 = vld [vmem:[%s5 + $0x250] sm:$0xff]
  %v619 = vld [vmem:[%s5 + $0x258] sm:$0xff]
  %v620 = vld [vmem:[%s5 + $0x260] sm:$0xff]
  %v621 = vld [vmem:[%s5 + $0x268] sm:$0xff]
  %v622 = vld [vmem:[%s5 + $0x270] sm:$0xff]
  %v623 = vld [vmem:[%s5 + $0x278] sm:$0xff]
  %v624 = vld [vmem:[%s5 + $0x280] sm:$0xff]
  %v625 = vld [vmem:[%s5 + $0x288] sm:$0xff]
  %v626 = vld [vmem:[%s5 + $0x290] sm:$0xff]
  %v627 = vld [vmem:[%s5 + $0x298] sm:$0xff]
  %v628 = vld [vmem:[%s5 + $0x2a0] sm:$0xff]
  %v629 = vld [vmem:[%s5 + $0x2a8] sm:$0xff]
  %v630 = vld [vmem:[%s5 + $0x2b0] sm:$0xff]
  %v631 = vld [vmem:[%s5 + $0x2b8] sm:$0xff]
  %v632 = vld [vmem:[%s5 + $0x2c0] sm:$0xff]
  %v633 = vld [vmem:[%s5 + $0x2c8] sm:$0xff]
  %v634 = vld [vmem:[%s5 + $0x2d0] sm:$0xff]
  %v635 = vld [vmem:[%s5 + $0x2d8] sm:$0xff]
  %v636 = vld [vmem:[%s5 + $0x2e0] sm:$0xff]
  %v637 = vld [vmem:[%s5 + $0x2e8] sm:$0xff]
  %v638 = vld [vmem:[%s5 + $0x2f0] sm:$0xff]
  %v639 = vld [vmem:[%s5 + $0x2f8] sm:$0xff]
  %v640 = vld [vmem:[%s6] sm:$0x7]
  %v642 = vperm.slane %v640, 0
  %v643 = vperm.slane %v640, 1
  %v644 = vperm.slane %v640, 2
  %648 = vmatpush.msra.mxu0 %v589
  %649 = vmatpush.msra.mxu0 %v586
  %650 = vmatpush.msra.mxu0 %v583
  %651 = vmatpush.msra.mxu0 %v580
  %652 = vmatpush.msra.mxu0 %v577
  %653 = vmatpush.msra.mxu0 %v574
  %654 = vmatpush.msra.mxu0 %v571
  %655 = vmatpush.msra.mxu0 %v568
  %656 = vmatpush.msra.mxu0 %v565
  %657 = vmatpush.msra.mxu0 %v562
  %658 = vmatpush.msra.mxu0 %v559
  %659 = vmatpush.msra.mxu0 %v556
  %660 = vmatpush.msra.mxu0 %v553
  %661 = vmatpush.msra.mxu0 %v550
  %662 = vmatpush.msra.mxu0 %v547
  %663 = vmatpush.msra.mxu0 %v544
  %664 = vmatmul.f32.gmra.mxu0 %v520
  %v665 = vpop.f32.mrf.mxu0
  %v666 = vadd.f32 %v642, %v665
  %667 = vmatmul.f32.gmra.mxu0 %v522
  %v668 = vpop.f32.mrf.mxu0
  %v669 = vadd.f32 %v642, %v668
  %670 = vmatmul.f32.gmra.mxu0 %v524
  %v671 = vpop.f32.mrf.mxu0
  %v672 = vadd.f32 %v642, %v671
  %673 = vmatmul.f32.gmra.mxu0 %v526
  %v674 = vpop.f32.mrf.mxu0
  %v675 = vadd.f32 %v642, %v674
  %676 = vmatmul.f32.gmra.mxu0 %v528
  %v677 = vpop.f32.mrf.mxu0
  %v678 = vadd.f32 %v642, %v677
  %679 = vmatmul.f32.gmra.mxu0 %v530
  %v680 = vpop.f32.mrf.mxu0
  %v681 = vadd.f32 %v642, %v680
  %682 = vmatmul.f32.gmra.mxu0 %v532
  %v683 = vpop.f32.mrf.mxu0
  %v684 = vadd.f32 %v642, %v683
  %685 = vmatmul.f32.gmra.mxu0 %v534
  %v686 = vpop.f32.mrf.mxu0
  %v687 = vadd.f32 %v642, %v686
  %688 = vmatmul.f32.gmra.mxu0 %v536
  %v689 = vpop.f32.mrf.mxu0
  %v690 = vadd.f32 %v642, %v689
  %691 = vmatmul.f32.gmra.mxu0 %v538
  %v692 = vpop.f32.mrf.mxu0
  %v693 = vadd.f32 %v642, %v692
  %694 = vmatmul.f32.gmra.mxu0 %v540
  %v695 = vpop.f32.mrf.mxu0
  %v696 = vadd.f32 %v642, %v695
  %697 = vmatmul.f32.gmra.mxu0 %v542
  %v698 = vpop.f32.mrf.mxu0
  %v699 = vadd.f32 %v642, %v698
  %700 = vdwg.mxu0
  %701 = vmatpush.msra.mxu0 %v637
  %702 = vmatpush.msra.mxu0 %v634
  %703 = vmatpush.msra.mxu0 %v631
  %704 = vmatpush.msra.mxu0 %v628
  %705 = vmatpush.msra.mxu0 %v625
  %706 = vmatpush.msra.mxu0 %v622
  %707 = vmatpush.msra.mxu0 %v619
  %708 = vmatpush.msra.mxu0 %v616
  %709 = vmatpush.msra.mxu0 %v613
  %710 = vmatpush.msra.mxu0 %v610
  %711 = vmatpush.msra.mxu0 %v607
  %712 = vmatpush.msra.mxu0 %v604
  %713 = vmatpush.msra.mxu0 %v601
  %714 = vmatpush.msra.mxu0 %v598
  %715 = vmatpush.msra.mxu0 %v595
  %716 = vmatpush.msra.mxu0 %v592
  %717 = vmatmul.f32.gmra.mxu0 %v521
  %v718 = vpop.f32.mrf.mxu0
  %v719 = vadd.f32 %v666, %v718
  %720 = vmatmul.f32.gmra.mxu0 %v523
  %v721 = vpop.f32.mrf.mxu0
  %v722 = vadd.f32 %v669, %v721
  %723 = vmatmul.f32.gmra.mxu0 %v525
  %v724 = vpop.f32.mrf.mxu0
  %v725 = vadd.f32 %v672, %v724
  %726 = vmatmul.f32.gmra.mxu0 %v527
  %v727 = vpop.f32.mrf.mxu0
  %v728 = vadd.f32 %v675, %v727
  %729 = vmatmul.f32.gmra.mxu0 %v529
  %v730 = vpop.f32.mrf.mxu0
  %v731 = vadd.f32 %v678, %v730
  %732 = vmatmul.f32.gmra.mxu0 %v531
  %v733 = vpop.f32.mrf.mxu0
  %v734 = vadd.f32 %v681, %v733
  %735 = vmatmul.f32.gmra.mxu0 %v533
  %v736 = vpop.f32.mrf.mxu0
  %v737 = vadd.f32 %v684, %v736
  %738 = vmatmul.f32.gmra.mxu0 %v535
  %v739 = vpop.f32.mrf.mxu0
  %v740 = vadd.f32 %v687, %v739
  %741 = vmatmul.f32.gmra.mxu0 %v537
  %v742 = vpop.f32.mrf.mxu0
  %v743 = vadd.f32 %v690, %v742
  %744 = vmatmul.f32.gmra.mxu0 %v539
  %v745 = vpop.f32.mrf.mxu0
  %v746 = vadd.f32 %v693, %v745
  %747 = vmatmul.f32.gmra.mxu0 %v541
  %v748 = vpop.f32.mrf.mxu0
  %v749 = vadd.f32 %v696, %v748
  %750 = vmatmul.f32.gmra.mxu0 %v543
  %v751 = vpop.f32.mrf.mxu0
  %v752 = vadd.f32 %v699, %v751
  %753 = vdwg.mxu0
  %754 = vmatpush.msra.mxu0 %v590
  %755 = vmatpush.msra.mxu0 %v587
  %756 = vmatpush.msra.mxu0 %v584
  %757 = vmatpush.msra.mxu0 %v581
  %758 = vmatpush.msra.mxu0 %v578
  %759 = vmatpush.msra.mxu0 %v575
  %760 = vmatpush.msra.mxu0 %v572
  %761 = vmatpush.msra.mxu0 %v569
  %762 = vmatpush.msra.mxu0 %v566
  %763 = vmatpush.msra.mxu0 %v563
  %764 = vmatpush.msra.mxu0 %v560
  %765 = vmatpush.msra.mxu0 %v557
  %766 = vmatpush.msra.mxu0 %v554
  %767 = vmatpush.msra.mxu0 %v551
  %768 = vmatpush.msra.mxu0 %v548
  %769 = vmatpush.msra.mxu0 %v545
  %770 = vmatmul.f32.gmra.mxu0 %v520
  %v771 = vpop.f32.mrf.mxu0
  %v772 = vadd.f32 %v643, %v771
  %773 = vmatmul.f32.gmra.mxu0 %v522
  %v774 = vpop.f32.mrf.mxu0
  %v775 = vadd.f32 %v643, %v774
  %776 = vmatmul.f32.gmra.mxu0 %v524
  %v777 = vpop.f32.mrf.mxu0
  %v778 = vadd.f32 %v643, %v777
  %779 = vmatmul.f32.gmra.mxu0 %v526
  %v780 = vpop.f32.mrf.mxu0
  %v781 = vadd.f32 %v643, %v780
  %782 = vmatmul.f32.gmra.mxu0 %v528
  %v783 = vpop.f32.mrf.mxu0
  %v784 = vadd.f32 %v643, %v783
  %785 = vmatmul.f32.gmra.mxu0 %v530
  %v786 = vpop.f32.mrf.mxu0
  %v787 = vadd.f32 %v643, %v786
  %788 = vmatmul.f32.gmra.mxu0 %v532
  %v789 = vpop.f32.mrf.mxu0
  %v790 = vadd.f32 %v643, %v789
  %791 = vmatmul.f32.gmra.mxu0 %v534
  %v792 = vpop.f32.mrf.mxu0
  %v793 = vadd.f32 %v643, %v792
  %794 = vmatmul.f32.gmra.mxu0 %v536
  %v795 = vpop.f32.mrf.mxu0
  %v796 = vadd.f32 %v643, %v795
  %797 = vmatmul.f32.gmra.mxu0 %v538
  %v798 = vpop.f32.mrf.mxu0
  %v799 = vadd.f32 %v643, %v798
  %800 = vmatmul.f32.gmra.mxu0 %v540
  %v801 = vpop.f32.mrf.mxu0
  %v802 = vadd.f32 %v643, %v801
  %803 = vmatmul.f32.gmra.mxu0 %v542
  %v804 = vpop.f32.mrf.mxu0
  %v805 = vadd.f32 %v643, %v804
  %806 = vdwg.mxu0
  %807 = vmatpush.msra.mxu0 %v638
  %808 = vmatpush.msra.mxu0 %v635
  %809 = vmatpush.msra.mxu0 %v632
  %810 = vmatpush.msra.mxu0 %v629
  %811 = vmatpush.msra.mxu0 %v626
  %812 = vmatpush.msra.mxu0 %v623
  %813 = vmatpush.msra.mxu0 %v620
  %814 = vmatpush.msra.mxu0 %v617
  %815 = vmatpush.msra.mxu0 %v614
  %816 = vmatpush.msra.mxu0 %v611
  %817 = vmatpush.msra.mxu0 %v608
  %818 = vmatpush.msra.mxu0 %v605
  %819 = vmatpush.msra.mxu0 %v602
  %820 = vmatpush.msra.mxu0 %v599
  %821 = vmatpush.msra.mxu0 %v596
  %822 = vmatpush.msra.mxu0 %v593
  %823 = vmatmul.f32.gmra.mxu0 %v521
  %v824 = vpop.f32.mrf.mxu0
  %v825 = vadd.f32 %v772, %v824
  %826 = vmatmul.f32.gmra.mxu0 %v523
  %v827 = vpop.f32.mrf.mxu0
  %v828 = vadd.f32 %v775, %v827
  %829 = vmatmul.f32.gmra.mxu0 %v525
  %v830 = vpop.f32.mrf.mxu0
  %v831 = vadd.f32 %v778, %v830
  %832 = vmatmul.f32.gmra.mxu0 %v527
  %v833 = vpop.f32.mrf.mxu0
  %v834 = vadd.f32 %v781, %v833
  %835 = vmatmul.f32.gmra.mxu0 %v529
  %v836 = vpop.f32.mrf.mxu0
  %v837 = vadd.f32 %v784, %v836
  %838 = vmatmul.f32.gmra.mxu0 %v531
  %v839 = vpop.f32.mrf.mxu0
  %v840 = vadd.f32 %v787, %v839
  %841 = vmatmul.f32.gmra.mxu0 %v533
  %v842 = vpop.f32.mrf.mxu0
  %v843 = vadd.f32 %v790, %v842
  %844 = vmatmul.f32.gmra.mxu0 %v535
  %v845 = vpop.f32.mrf.mxu0
  %v846 = vadd.f32 %v793, %v845
  %847 = vmatmul.f32.gmra.mxu0 %v537
  %v848 = vpop.f32.mrf.mxu0
  %v849 = vadd.f32 %v796, %v848
  %850 = vmatmul.f32.gmra.mxu0 %v539
  %v851 = vpop.f32.mrf.mxu0
  %v852 = vadd.f32 %v799, %v851
  %853 = vmatmul.f32.gmra.mxu0 %v541
  %v854 = vpop.f32.mrf.mxu0
  %v855 = vadd.f32 %v802, %v854
  %856 = vmatmul.f32.gmra.mxu0 %v543
  %v857 = vpop.f32.mrf.mxu0
  %v858 = vadd.f32 %v805, %v857
  %859 = vdwg.mxu0
  %860 = vmatpush.msra.mxu0 %v591
  %861 = vmatpush.msra.mxu0 %v588
  %862 = vmatpush.msra.mxu0 %v585
  %863 = vmatpush.msra.mxu0 %v582
  %864 = vmatpush.msra.mxu0 %v579
  %865 = vmatpush.msra.mxu0 %v576
  %866 = vmatpush.msra.mxu0 %v573
  %867 = vmatpush.msra.mxu0 %v570
  %868 = vmatpush.msra.mxu0 %v567
  %869 = vmatpush.msra.mxu0 %v564
  %870 = vmatpush.msra.mxu0 %v561
  %871 = vmatpush.msra.mxu0 %v558
  %872 = vmatpush.msra.mxu0 %v555
  %873 = vmatpush.msra.mxu0 %v552
  %874 = vmatpush.msra.mxu0 %v549
  %875 = vmatpush.msra.mxu0 %v546
  %876 = vmatmul.f32.gmra.mxu0 %v520
  %v877 = vpop.f32.mrf.mxu0
  %v878 = vadd.f32 %v644, %v877
  %879 = vmatmul.f32.gmra.mxu0 %v522
  %v880 = vpop.f32.mrf.mxu0
  %v881 = vadd.f32 %v644, %v880
  %882 = vmatmul.f32.gmra.mxu0 %v524
  %v883 = vpop.f32.mrf.mxu0
  %v884 = vadd.f32 %v644, %v883
  %885 = vmatmul.f32.gmra.mxu0 %v526
  %v886 = vpop.f32.mrf.mxu0
  %v887 = vadd.f32 %v644, %v886
  %888 = vmatmul.f32.gmra.mxu0 %v528
  %v889 = vpop.f32.mrf.mxu0
  %v890 = vadd.f32 %v644, %v889
  %891 = vmatmul.f32.gmra.mxu0 %v530
  %v892 = vpop.f32.mrf.mxu0
  %v893 = vadd.f32 %v644, %v892
  %894 = vmatmul.f32.gmra.mxu0 %v532
  %v895 = vpop.f32.mrf.mxu0
  %v896 = vadd.f32 %v644, %v895
  %897 = vmatmul.f32.gmra.mxu0 %v534
  %v898 = vpop.f32.mrf.mxu0
  %v899 = vadd.f32 %v644, %v898
  %900 = vmatmul.f32.gmra.mxu0 %v536
  %v901 = vpop.f32.mrf.mxu0
  %v902 = vadd.f32 %v644, %v901
  %903 = vmatmul.f32.gmra.mxu0 %v538
  %v904 = vpop.f32.mrf.mxu0
  %v905 = vadd.f32 %v644, %v904
  %906 = vmatmul.f32.gmra.mxu0 %v540
  %v907 = vpop.f32.mrf.mxu0
  %v908 = vadd.f32 %v644, %v907
  %909 = vmatmul.f32.gmra.mxu0 %v542
  %v910 = vpop.f32.mrf.mxu0
  %v911 = vadd.f32 %v644, %v910
  %912 = vdwg.mxu0
  %913 = vmatpush.msra.mxu0 %v639
  %914 = vmatpush.msra.mxu0 %v636
  %915 = vmatpush.msra.mxu0 %v633
  %916 = vmatpush.msra.mxu0 %v630
  %917 = vmatpush.msra.mxu0 %v627
  %918 = vmatpush.msra.mxu0 %v624
  %919 = vmatpush.msra.mxu0 %v621
  %920 = vmatpush.msra.mxu0 %v618
  %921 = vmatpush.msra.mxu0 %v615
  %922 = vmatpush.msra.mxu0 %v612
  %923 = vmatpush.msra.mxu0 %v609
  %924 = vmatpush.msra.mxu0 %v606
  %925 = vmatpush.msra.mxu0 %v603
  %926 = vmatpush.msra.mxu0 %v600
  %927 = vmatpush.msra.mxu0 %v597
  %928 = vmatpush.msra.mxu0 %v594
  %929 = vmatmul.f32.gmra.mxu0 %v521
  %v930 = vpop.f32.mrf.mxu0
  %v931 = vadd.f32 %v878, %v930
  %932 = vmatmul.f32.gmra.mxu0 %v523
  %v933 = vpop.f32.mrf.mxu0
  %v934 = vadd.f32 %v881, %v933
  %935 = vmatmul.f32.gmra.mxu0 %v525
  %v936 = vpop.f32.mrf.mxu0
  %v937 = vadd.f32 %v884, %v936
  %938 = vmatmul.f32.gmra.mxu0 %v527
  %v939 = vpop.f32.mrf.mxu0
  %v940 = vadd.f32 %v887, %v939
  %941 = vmatmul.f32.gmra.mxu0 %v529
  %v942 = vpop.f32.mrf.mxu0
  %v943 = vadd.f32 %v890, %v942
  %944 = vmatmul.f32.gmra.mxu0 %v531
  %v945 = vpop.f32.mrf.mxu0
  %v946 = vadd.f32 %v893, %v945
  %947 = vmatmul.f32.gmra.mxu0 %v533
  %v948 = vpop.f32.mrf.mxu0
  %v949 = vadd.f32 %v896, %v948
  %950 = vmatmul.f32.gmra.mxu0 %v535
  %v951 = vpop.f32.mrf.mxu0
  %v952 = vadd.f32 %v899, %v951
  %953 = vmatmul.f32.gmra.mxu0 %v537
  %v954 = vpop.f32.mrf.mxu0
  %v955 = vadd.f32 %v902, %v954
  %956 = vmatmul.f32.gmra.mxu0 %v539
  %v957 = vpop.f32.mrf.mxu0
  %v958 = vadd.f32 %v905, %v957
  %959 = vmatmul.f32.gmra.mxu0 %v541
  %v960 = vpop.f32.mrf.mxu0
  %v961 = vadd.f32 %v908, %v960
  %962 = vmatmul.f32.gmra.mxu0 %v543
  %v963 = vpop.f32.mrf.mxu0
  %v964 = vadd.f32 %v911, %v963
  %965 = vdwg.mxu0
  %966 = vst [vmem:[#allocation4] sm:$0xff] %v719
  %967 = vst [vmem:[#allocation4 + $0x8] sm:$0xff] %v825
  %968 = vst [vmem:[#allocation4 + $0x10] sm:$0xff] %v931
  %969 = vst [vmem:[#allocation4 + $0x18] sm:$0xff] %v722
  %970 = vst [vmem:[#allocation4 + $0x20] sm:$0xff] %v828
  %971 = vst [vmem:[#allocation4 + $0x28] sm:$0xff] %v934
  %972 = vst [vmem:[#allocation4 + $0x30] sm:$0xff] %v725
  %973 = vst [vmem:[#allocation4 + $0x38] sm:$0xff] %v831
  %974 = vst [vmem:[#allocation4 + $0x40] sm:$0xff] %v937
  %975 = vst [vmem:[#allocation4 + $0x48] sm:$0xff] %v728
  %976 = vst [vmem:[#allocation4 + $0x50] sm:$0xff] %v834
  %977 = vst [vmem:[#allocation4 + $0x58] sm:$0xff] %v940
  %978 = vst [vmem:[#allocation4 + $0x60] sm:$0xff] %v731
  %979 = vst [vmem:[#allocation4 + $0x68] sm:$0xff] %v837
  %980 = vst [vmem:[#allocation4 + $0x70] sm:$0xff] %v943
  %981 = vst [vmem:[#allocation4 + $0x78] sm:$0xff] %v734
  %982 = vst [vmem:[#allocation4 + $0x80] sm:$0xff] %v840
  %983 = vst [vmem:[#allocation4 + $0x88] sm:$0xff] %v946
  %984 = vst [vmem:[#allocation4 + $0x90] sm:$0xff] %v737
  %985 = vst [vmem:[#allocation4 + $0x98] sm:$0xff] %v843
  %986 = vst [vmem:[#allocation4 + $0xa0] sm:$0xff] %v949
  %987 = vst [vmem:[#allocation4 + $0xa8] sm:$0xff] %v740
  %988 = vst [vmem:[#allocation4 + $0xb0] sm:$0xff] %v846
  %989 = vst [vmem:[#allocation4 + $0xb8] sm:$0xff] %v952
  %990 = vst [vmem:[#allocation4 + $0xc0] sm:$0xff] %v743
  %991 = vst [vmem:[#allocation4 + $0xc8] sm:$0xff] %v849
  %992 = vst [vmem:[#allocation4 + $0xd0] sm:$0xff] %v955
  %993 = vst [vmem:[#allocation4 + $0xd8] sm:$0xff] %v746
  %994 = vst [vmem:[#allocation4 + $0xe0] sm:$0xff] %v852
  %995 = vst [vmem:[#allocation4 + $0xe8] sm:$0xff] %v958
  %996 = vst [vmem:[#allocation4 + $0xf0] sm:$0xff] %v749
  %997 = vst [vmem:[#allocation4 + $0xf8] sm:$0xff] %v855
  %998 = vst [vmem:[#allocation4 + $0x100] sm:$0xff] %v961
  %999 = vst [vmem:[#allocation4 + $0x108] sm:$0xff] %v752
  %1000 = vst [vmem:[#allocation4 + $0x110] sm:$0xff] %v858
  %1001 = vst [vmem:[#allocation4 + $0x118] sm:$0xff] %v964
  %v1002 = vld [vmem:[%s1] sm:$0xff]
  %v1003 = vld [vmem:[#allocation2] sm:$0xff]
  %v1004 = vmul.f32 %v1003, 0.0
  %v1005 = vld [vmem:[#allocation4] sm:$0xff]
  %v1006 = vld [vmem:[#allocation4 + $0x8] sm:$0xff]
  %v1007 = vld [vmem:[#allocation4 + $0x10] sm:$0xff]
  %v1008 = vld [vmem:[%s7] sm:$0xff]
  %v1009 = vld [vmem:[%s7 + $0x8] sm:$0xff]
  %v1010 = vld [vmem:[%s7 + $0x10] sm:$0xff]
  %v1011 = vld [vmem:[%s7 + $0x18] sm:$0xff]
  %v1012 = vld [vmem:[%s7 + $0x20] sm:$0xff]
  %v1013 = vld [vmem:[%s7 + $0x28] sm:$0xff]
  %v1014 = vld [vmem:[%s7 + $0x30] sm:$0xff]
  %v1015 = vld [vmem:[%s7 + $0x38] sm:$0xff]
  %v1016 = vld [vmem:[%s7 + $0x40] sm:$0xff]
  %v1017 = vld [vmem:[%s7 + $0x48] sm:$0xff]
  %v1018 = vld [vmem:[%s7 + $0x50] sm:$0xff]
  %v1019 = vld [vmem:[%s7 + $0x58] sm:$0xff]
  %v1020 = vld [vmem:[%s7 + $0x60] sm:$0xff]
  %v1021 = vld [vmem:[%s7 + $0x68] sm:$0xff]
  %v1022 = vld [vmem:[%s7 + $0x70] sm:$0xff]
  %v1023 = vld [vmem:[%s7 + $0x78] sm:$0xff]
  %v1024 = vld [vmem:[%s7 + $0x80] sm:$0xff]
  %v1025 = vld [vmem:[%s7 + $0x88] sm:$0xff]
  %v1026 = vld [vmem:[%s7 + $0x90] sm:$0xff]
  %v1027 = vld [vmem:[%s7 + $0x98] sm:$0xff]
  %v1028 = vld [vmem:[%s7 + $0xa0] sm:$0xff]
  %v1029 = vld [vmem:[%s7 + $0xa8] sm:$0xff]
  %v1030 = vld [vmem:[%s7 + $0xb0] sm:$0xff]
  %v1031 = vld [vmem:[%s7 + $0xb8] sm:$0xff]
  %v1032 = vld [vmem:[%s7 + $0xc0] sm:$0xff]
  %v1033 = vld [vmem:[%s7 + $0xc8] sm:$0xff]
  %v1034 = vld [vmem:[%s7 + $0xd0] sm:$0xff]
  %v1035 = vld [vmem:[%s7 + $0xd8] sm:$0xff]
  %v1036 = vld [vmem:[%s7 + $0xe0] sm:$0xff]
  %v1037 = vld [vmem:[%s7 + $0xe8] sm:$0xff]
  %v1038 = vld [vmem:[%s7 + $0xf0] sm:$0xff]
  %v1039 = vld [vmem:[%s7 + $0xf8] sm:$0xff]
  %1040 = vmatpush.msra.mxu0 %v1038
  %1041 = vmatpush.msra.mxu0 %v1036
  %1042 = vmatpush.msra.mxu0 %v1034
  %1043 = vmatpush.msra.mxu0 %v1032
  %1044 = vmatpush.msra.mxu0 %v1030
  %1045 = vmatpush.msra.mxu0 %v1028
  %1046 = vmatpush.msra.mxu0 %v1026
  %1047 = vmatpush.msra.mxu0 %v1024
  %1048 = vmatpush.msra.mxu0 %v1022
  %1049 = vmatpush.msra.mxu0 %v1020
  %1050 = vmatpush.msra.mxu0 %v1018
  %1051 = vmatpush.msra.mxu0 %v1016
  %1052 = vmatpush.msra.mxu0 %v1014
  %1053 = vmatpush.msra.mxu0 %v1012
  %1054 = vmatpush.msra.mxu0 %v1010
  %1055 = vmatpush.msra.mxu0 %v1008
  %1056 = vmatmul.f32.gmra.mxu0 %v1004
  %v1057 = vpop.f32.mrf.mxu0
  %v1058 = vadd.f32 0.0, %v1057
  %1059 = vdwg.mxu0
  %1060 = vmatpush.msra.mxu0 %v1039
  %1061 = vmatpush.msra.mxu0 %v1037
  %1062 = vmatpush.msra.mxu0 %v1035
  %1063 = vmatpush.msra.mxu0 %v1033
  %1064 = vmatpush.msra.mxu0 %v1031
  %1065 = vmatpush.msra.mxu0 %v1029
  %1066 = vmatpush.msra.mxu0 %v1027
  %1067 = vmatpush.msra.mxu0 %v1025
  %1068 = vmatpush.msra.mxu0 %v1023
  %1069 = vmatpush.msra.mxu0 %v1021
  %1070 = vmatpush.msra.mxu0 %v1019
  %1071 = vmatpush.msra.mxu0 %v1017
  %1072 = vmatpush.msra.mxu0 %v1015
  %1073 = vmatpush.msra.mxu0 %v1013
  %1074 = vmatpush.msra.mxu0 %v1011
  %1075 = vmatpush.msra.mxu0 %v1009
  %1076 = vmatmul.f32.gmra.mxu0 %v1004
  %v1077 = vpop.f32.mrf.mxu0
  %v1078 = vadd.f32 0.0, %v1077
  %1079 = vdwg.mxu0
  %v1080 = vadd.f32 %v1005, %v1058
  %v1081 = vadd.f32 %v1006, %v1078
  %v1082 = vxor.u32 %v1080, 2147483648
  %v1083 = vxor.u32 %v1081, 2147483648
  %v1084 = vmul.f32 %v1082, 1.442695
  %v1085 = vpow.pop %v1084
  %v1086 = vmul.f32 %v1083, 1.442695
  %v1087 = vpow.pop %v1086
  %v1088 = vadd.f32 %v1085, 1.0
  %v1089 = vadd.f32 %v1087, 1.0
  %v1090 = vrcp.pop %v1088
  %v1091 = vmul.f32 %v1088, %v1090
  %v1092 = vsub.f32 1.0, %v1091
  %v1093 = vmul.f32 %v1090, %v1092
  %v1094 = vadd.f32 %v1090, %v1093
  %vm1095 = vweird.f32 %v1088
  %vm1096 = vweird.f32 %v1090
  %vm1097 = vmor %vm1095, %vm1096
  %v1098 = vsel %vm1097, %v1090, %v1094
  %v1099 = vand.u32 2147483647, %v1088
  %vm1100 = vcmp.eq.f32.partialorder %v1099, 8.507059e+37
  %v1101 = vand.u32 %v1088, 2147483648
  %v1102 = vor.u32 1.1754944e-38, %v1101
  %v1103 = vsel %vm1100, %v1102, %v1098
  %v1104 = vmul.f32 1.0, %v1103
  %v1105 = vrcp.pop %v1089
  %v1106 = vmul.f32 %v1089, %v1105
  %v1107 = vsub.f32 1.0, %v1106
  %v1108 = vmul.f32 %v1105, %v1107
  %v1109 = vadd.f32 %v1105, %v1108
  %vm1110 = vweird.f32 %v1089
  %vm1111 = vweird.f32 %v1105
  %vm1112 = vmor %vm1110, %vm1111
  %v1113 = vsel %vm1112, %v1105, %v1109
  %v1114 = vand.u32 2147483647, %v1089
  %vm1115 = vcmp.eq.f32.partialorder %v1114, 8.507059e+37
  %v1116 = vand.u32 %v1089, 2147483648
  %v1117 = vor.u32 1.1754944e-38, %v1116
  %v1118 = vsel %vm1115, %v1117, %v1113
  %v1119 = vmul.f32 1.0, %v1118
  %v1120 = vmul.f32 %v1119, %v1004
  %v1121 = vld [vmem:[%s8] sm:$0xff]
  %v1122 = vld [vmem:[%s8 + $0x8] sm:$0xff]
  %v1123 = vld [vmem:[%s8 + $0x10] sm:$0xff]
  %v1124 = vld [vmem:[%s8 + $0x18] sm:$0xff]
  %v1125 = vld [vmem:[%s8 + $0x20] sm:$0xff]
  %v1126 = vld [vmem:[%s8 + $0x28] sm:$0xff]
  %v1127 = vld [vmem:[%s8 + $0x30] sm:$0xff]
  %v1128 = vld [vmem:[%s8 + $0x38] sm:$0xff]
  %v1129 = vld [vmem:[%s8 + $0x40] sm:$0xff]
  %v1130 = vld [vmem:[%s8 + $0x48] sm:$0xff]
  %v1131 = vld [vmem:[%s8 + $0x50] sm:$0xff]
  %v1132 = vld [vmem:[%s8 + $0x58] sm:$0xff]
  %v1133 = vld [vmem:[%s8 + $0x60] sm:$0xff]
  %v1134 = vld [vmem:[%s8 + $0x68] sm:$0xff]
  %v1135 = vld [vmem:[%s8 + $0x70] sm:$0xff]
  %v1136 = vld [vmem:[%s8 + $0x78] sm:$0xff]
  %1137 = vmatpush.msra.mxu0 %v1136
  %1138 = vmatpush.msra.mxu0 %v1135
  %1139 = vmatpush.msra.mxu0 %v1134
  %1140 = vmatpush.msra.mxu0 %v1133
  %1141 = vmatpush.msra.mxu0 %v1132
  %1142 = vmatpush.msra.mxu0 %v1131
  %1143 = vmatpush.msra.mxu0 %v1130
  %1144 = vmatpush.msra.mxu0 %v1129
  %1145 = vmatpush.msra.mxu0 %v1128
  %1146 = vmatpush.msra.mxu0 %v1127
  %1147 = vmatpush.msra.mxu0 %v1126
  %1148 = vmatpush.msra.mxu0 %v1125
  %1149 = vmatpush.msra.mxu0 %v1124
  %1150 = vmatpush.msra.mxu0 %v1123
  %1151 = vmatpush.msra.mxu0 %v1122
  %1152 = vmatpush.msra.mxu0 %v1121
  %1153 = vmatmul.f32.gmra.mxu0 %v1120
  %v1154 = vpop.f32.mrf.mxu0
  %v1155 = vadd.f32 0.0, %v1154
  %1156 = vdwg.mxu0
  %v1157 = vadd.f32 %v1007, %v1155
  %v1158 = vtanh.pop %v1157
  %v1159 = vsub.f32 1.0, %v1104
  %v1160 = vmul.f32 %v1159, %v1004
  %v1161 = vmul.f32 %v1104, %v1158
  %v1162 = vadd.f32 %v1160, %v1161
  %vm1163 = vcmp.eq.s32.totalorder %v1002, 0
  %v1164 = vsel %vm1163, 1, 0
  %1165 = vset.pattern.permute.xlu0 0
  %1166 = vperm.xlu0 %1165, %v1164
  %v1167 = vpop.permute.xlu0 %1166
  %vm1168 = vcmp.eq.s32.totalorder %v1167, 1
  %v1169 = vsel %vm1168, %v1162, 0.0
  %v1170 = vld [vmem:[#allocation2 + $0x10] sm:$0xff]
  %v1171 = vmul.f32 %v1170, %v1162
  %v1172 = vld [vmem:[#allocation4 + $0x18] sm:$0xff]
  %v1173 = vld [vmem:[#allocation4 + $0x20] sm:$0xff]
  %v1174 = vld [vmem:[#allocation4 + $0x28] sm:$0xff]
  %1175 = vmatpush.msra.mxu0 %v1038
  %1176 = vmatpush.msra.mxu0 %v1036
  %1177 = vmatpush.msra.mxu0 %v1034
  %1178 = vmatpush.msra.mxu0 %v1032
  %1179 = vmatpush.msra.mxu0 %v1030
  %1180 = vmatpush.msra.mxu0 %v1028
  %1181 = vmatpush.msra.mxu0 %v1026
  %1182 = vmatpush.msra.mxu0 %v1024
  %1183 = vmatpush.msra.mxu0 %v1022
  %1184 = vmatpush.msra.mxu0 %v1020
  %1185 = vmatpush.msra.mxu0 %v1018
  %1186 = vmatpush.msra.mxu0 %v1016
  %1187 = vmatpush.msra.mxu0 %v1014
  %1188 = vmatpush.msra.mxu0 %v1012
  %1189 = vmatpush.msra.mxu0 %v1010
  %1190 = vmatpush.msra.mxu0 %v1008
  %1191 = vmatmul.f32.gmra.mxu0 %v1171
  %v1192 = vpop.f32.mrf.mxu0
  %v1193 = vadd.f32 0.0, %v1192
  %1194 = vdwg.mxu0
  %1195 = vmatpush.msra.mxu0 %v1039
  %1196 = vmatpush.msra.mxu0 %v1037
  %1197 = vmatpush.msra.mxu0 %v1035
  %1198 = vmatpush.msra.mxu0 %v1033
  %1199 = vmatpush.msra.mxu0 %v1031
  %1200 = vmatpush.msra.mxu0 %v1029
  %1201 = vmatpush.msra.mxu0 %v1027
  %1202 = vmatpush.msra.mxu0 %v1025
  %1203 = vmatpush.msra.mxu0 %v1023
  %1204 = vmatpush.msra.mxu0 %v1021
  %1205 = vmatpush.msra.mxu0 %v1019
  %1206 = vmatpush.msra.mxu0 %v1017
  %1207 = vmatpush.msra.mxu0 %v1015
  %1208 = vmatpush.msra.mxu0 %v1013
  %1209 = vmatpush.msra.mxu0 %v1011
  %1210 = vmatpush.msra.mxu0 %v1009
  %1211 = vmatmul.f32.gmra.mxu0 %v1171
  %v1212 = vpop.f32.mrf.mxu0
  %v1213 = vadd.f32 0.0, %v1212
  %1214 = vdwg.mxu0
  %v1215 = vadd.f32 %v1172, %v1193
  %v1216 = vadd.f32 %v1173, %v1213
  %v1217 = vxor.u32 %v1215, 2147483648
  %v1218 = vxor.u32 %v1216, 2147483648
  %v1219 = vmul.f32 %v1217, 1.442695
  %v1220 = vpow.pop %v1219
  %v1221 = vmul.f32 %v1218, 1.442695
  %v1222 = vpow.pop %v1221
  %v1223 = vadd.f32 %v1220, 1.0
  %v1224 = vadd.f32 %v1222, 1.0
  %v1225 = vrcp.pop %v1223
  %v1226 = vmul.f32 %v1223, %v1225
  %v1227 = vsub.f32 1.0, %v1226
  %v1228 = vmul.f32 %v1225, %v1227
  %v1229 = vadd.f32 %v1225, %v1228
  %vm1230 = vweird.f32 %v1223
  %vm1231 = vweird.f32 %v1225
  %vm1232 = vmor %vm1230, %vm1231
  %v1233 = vsel %vm1232, %v1225, %v1229
  %v1234 = vand.u32 2147483647, %v1223
  %vm1235 = vcmp.eq.f32.partialorder %v1234, 8.507059e+37
  %v1236 = vand.u32 %v1223, 2147483648
  %v1237 = vor.u32 1.1754944e-38, %v1236
  %v1238 = vsel %vm1235, %v1237, %v1233
  %v1239 = vmul.f32 1.0, %v1238
  %v1240 = vrcp.pop %v1224
  %v1241 = vmul.f32 %v1224, %v1240
  %v1242 = vsub.f32 1.0, %v1241
  %v1243 = vmul.f32 %v1240, %v1242
  %v1244 = vadd.f32 %v1240, %v1243
  %vm1245 = vweird.f32 %v1224
  %vm1246 = vweird.f32 %v1240
  %vm1247 = vmor %vm1245, %vm1246
  %v1248 = vsel %vm1247, %v1240, %v1244
  %v1249 = vand.u32 2147483647, %v1224
  %vm1250 = vcmp.eq.f32.partialorder %v1249, 8.507059e+37
  %v1251 = vand.u32 %v1224, 2147483648
  %v1252 = vor.u32 1.1754944e-38, %v1251
  %v1253 = vsel %vm1250, %v1252, %v1248
  %v1254 = vmul.f32 1.0, %v1253
  %v1255 = vmul.f32 %v1254, %v1171
  %1256 = vmatpush.msra.mxu0 %v1136
  %1257 = vmatpush.msra.mxu0 %v1135
  %1258 = vmatpush.msra.mxu0 %v1134
  %1259 = vmatpush.msra.mxu0 %v1133
  %1260 = vmatpush.msra.mxu0 %v1132
  %1261 = vmatpush.msra.mxu0 %v1131
  %1262 = vmatpush.msra.mxu0 %v1130
  %1263 = vmatpush.msra.mxu0 %v1129
  %1264 = vmatpush.msra.mxu0 %v1128
  %1265 = vmatpush.msra.mxu0 %v1127
  %1266 = vmatpush.msra.mxu0 %v1126
  %1267 = vmatpush.msra.mxu0 %v1125
  %1268 = vmatpush.msra.mxu0 %v1124
  %1269 = vmatpush.msra.mxu0 %v1123
  %1270 = vmatpush.msra.mxu0 %v1122
  %1271 = vmatpush.msra.mxu0 %v1121
  %1272 = vmatmul.f32.gmra.mxu0 %v1255
  %v1273 = vpop.f32.mrf.mxu0
  %v1274 = vadd.f32 0.0, %v1273
  %1275 = vdwg.mxu0
  %v1276 = vadd.f32 %v1174, %v1274
  %v1277 = vtanh.pop %v1276
  %v1278 = vsub.f32 1.0, %v1239
  %v1279 = vmul.f32 %v1278, %v1171
  %v1280 = vmul.f32 %v1239, %v1277
  %v1281 = vadd.f32 %v1279, %v1280
  %vm1282 = vcmp.eq.s32.totalorder %v1002, 1
  %v1283 = vsel %vm1282, 1, 0
  %1284 = vset.pattern.permute.xlu0 0
  %1285 = vperm.xlu0 %1284, %v1283
  %v1286 = vpop.permute.xlu0 %1285
  %vm1287 = vcmp.eq.s32.totalorder %v1286, 1
  %v1288 = vsel %vm1287, %v1281, %v1169
  %v1289 = vld [vmem:[#allocation2 + $0x20] sm:$0xff]
  %v1290 = vmul.f32 %v1289, %v1281
  %v1291 = vld [vmem:[#allocation4 + $0x30] sm:$0xff]
  %v1292 = vld [vmem:[#allocation4 + $0x38] sm:$0xff]
  %v1293 = vld [vmem:[#allocation4 + $0x40] sm:$0xff]
  %1294 = vmatpush.msra.mxu0 %v1038
  %1295 = vmatpush.msra.mxu0 %v1036
  %1296 = vmatpush.msra.mxu0 %v1034
  %1297 = vmatpush.msra.mxu0 %v1032
  %1298 = vmatpush.msra.mxu0 %v1030
  %1299 = vmatpush.msra.mxu0 %v1028
  %1300 = vmatpush.msra.mxu0 %v1026
  %1301 = vmatpush.msra.mxu0 %v1024
  %1302 = vmatpush.msra.mxu0 %v1022
  %1303 = vmatpush.msra.mxu0 %v1020
  %1304 = vmatpush.msra.mxu0 %v1018
  %1305 = vmatpush.msra.mxu0 %v1016
  %1306 = vmatpush.msra.mxu0 %v1014
  %1307 = vmatpush.msra.mxu0 %v1012
  %1308 = vmatpush.msra.mxu0 %v1010
  %1309 = vmatpush.msra.mxu0 %v1008
  %1310 = vmatmul.f32.gmra.mxu0 %v1290
  %v1311 = vpop.f32.mrf.mxu0
  %v1312 = vadd.f32 0.0, %v1311
  %1313 = vdwg.mxu0
  %1314 = vmatpush.msra.mxu0 %v1039
  %1315 = vmatpush.msra.mxu0 %v1037
  %1316 = vmatpush.msra.mxu0 %v1035
  %1317 = vmatpush.msra.mxu0 %v1033
  %1318 = vmatpush.msra.mxu0 %v1031
  %1319 = vmatpush.msra.mxu0 %v1029
  %1320 = vmatpush.msra.mxu0 %v1027
  %1321 = vmatpush.msra.mxu0 %v1025
  %1322 = vmatpush.msra.mxu0 %v1023
  %1323 = vmatpush.msra.mxu0 %v1021
  %1324 = vmatpush.msra.mxu0 %v1019
  %1325 = vmatpush.msra.mxu0 %v1017
  %1326 = vmatpush.msra.mxu0 %v1015
  %1327 = vmatpush.msra.mxu0 %v1013
  %1328 = vmatpush.msra.mxu0 %v1011
  %1329 = vmatpush.msra.mxu0 %v1009
  %1330 = vmatmul.f32.gmra.mxu0 %v1290
  %v1331 = vpop.f32.mrf.mxu0
  %v1332 = vadd.f32 0.0, %v1331
  %1333 = vdwg.mxu0
  %v1334 = vadd.f32 %v1291, %v1312
  %v1335 = vadd.f32 %v1292, %v1332
  %v1336 = vxor.u32 %v1334, 2147483648
  %v1337 = vxor.u32 %v1335, 2147483648
  %v1338 = vmul.f32 %v1336, 1.442695
  %v1339 = vpow.pop %v1338
  %v1340 = vmul.f32 %v1337, 1.442695
  %v1341 = vpow.pop %v1340
  %v1342 = vadd.f32 %v1339, 1.0
  %v1343 = vadd.f32 %v1341, 1.0
  %v1344 = vrcp.pop %v1342
  %v1345 = vmul.f32 %v1342, %v1344
  %v1346 = vsub.f32 1.0, %v1345
  %v1347 = vmul.f32 %v1344, %v1346
  %v1348 = vadd.f32 %v1344, %v1347
  %vm1349 = vweird.f32 %v1342
  %vm1350 = vweird.f32 %v1344
  %vm1351 = vmor %vm1349, %vm1350
  %v1352 = vsel %vm1351, %v1344, %v1348
  %v1353 = vand.u32 2147483647, %v1342
  %vm1354 = vcmp.eq.f32.partialorder %v1353, 8.507059e+37
  %v1355 = vand.u32 %v1342, 2147483648
  %v1356 = vor.u32 1.1754944e-38, %v1355
  %v1357 = vsel %vm1354, %v1356, %v1352
  %v1358 = vmul.f32 1.0, %v1357
  %v1359 = vrcp.pop %v1343
  %v1360 = vmul.f32 %v1343, %v1359
  %v1361 = vsub.f32 1.0, %v1360
  %v1362 = vmul.f32 %v1359, %v1361
  %v1363 = vadd.f32 %v1359, %v1362
  %vm1364 = vweird.f32 %v1343
  %vm1365 = vweird.f32 %v1359
  %vm1366 = vmor %vm1364, %vm1365
  %v1367 = vsel %vm1366, %v1359, %v1363
  %v1368 = vand.u32 2147483647, %v1343
  %vm1369 = vcmp.eq.f32.partialorder %v1368, 8.507059e+37
  %v1370 = vand.u32 %v1343, 2147483648
  %v1371 = vor.u32 1.1754944e-38, %v1370
  %v1372 = vsel %vm1369, %v1371, %v1367
  %v1373 = vmul.f32 1.0, %v1372
  %v1374 = vmul.f32 %v1373, %v1290
  %1375 = vmatpush.msra.mxu0 %v1136
  %1376 = vmatpush.msra.mxu0 %v1135
  %1377 = vmatpush.msra.mxu0 %v1134
  %1378 = vmatpush.msra.mxu0 %v1133
  %1379 = vmatpush.msra.mxu0 %v1132
  %1380 = vmatpush.msra.mxu0 %v1131
  %1381 = vmatpush.msra.mxu0 %v1130
  %1382 = vmatpush.msra.mxu0 %v1129
  %1383 = vmatpush.msra.mxu0 %v1128
  %1384 = vmatpush.msra.mxu0 %v1127
  %1385 = vmatpush.msra.mxu0 %v1126
  %1386 = vmatpush.msra.mxu0 %v1125
  %1387 = vmatpush.msra.mxu0 %v1124
  %1388 = vmatpush.msra.mxu0 %v1123
  %1389 = vmatpush.msra.mxu0 %v1122
  %1390 = vmatpush.msra.mxu0 %v1121
  %1391 = vmatmul.f32.gmra.mxu0 %v1374
  %v1392 = vpop.f32.mrf.mxu0
  %v1393 = vadd.f32 0.0, %v1392
  %1394 = vdwg.mxu0
  %v1395 = vadd.f32 %v1293, %v1393
  %v1396 = vtanh.pop %v1395
  %v1397 = vsub.f32 1.0, %v1358
  %v1398 = vmul.f32 %v1397, %v1290
  %v1399 = vmul.f32 %v1358, %v1396
  %v1400 = vadd.f32 %v1398, %v1399
  %vm1401 = vcmp.eq.s32.totalorder %v1002, 2
  %v1402 = vsel %vm1401, 1, 0
  %1403 = vset.pattern.permute.xlu0 0
  %1404 = vperm.xlu0 %1403, %v1402
  %v1405 = vpop.permute.xlu0 %1404
  %vm1406 = vcmp.eq.s32.totalorder %v1405, 1
  %v1407 = vsel %vm1406, %v1400, %v1288
  %v1408 = vld [vmem:[#allocation2 + $0x30] sm:$0xff]
  %v1409 = vmul.f32 %v1408, %v1400
  %v1410 = vld [vmem:[#allocation4 + $0x48] sm:$0xff]
  %v1411 = vld [vmem:[#allocation4 + $0x50] sm:$0xff]
  %v1412 = vld [vmem:[#allocation4 + $0x58] sm:$0xff]
  %1413 = vmatpush.msra.mxu0 %v1038
  %1414 = vmatpush.msra.mxu0 %v1036
  %1415 = vmatpush.msra.mxu0 %v1034
  %1416 = vmatpush.msra.mxu0 %v1032
  %1417 = vmatpush.msra.mxu0 %v1030
  %1418 = vmatpush.msra.mxu0 %v1028
  %1419 = vmatpush.msra.mxu0 %v1026
  %1420 = vmatpush.msra.mxu0 %v1024
  %1421 = vmatpush.msra.mxu0 %v1022
  %1422 = vmatpush.msra.mxu0 %v1020
  %1423 = vmatpush.msra.mxu0 %v1018
  %1424 = vmatpush.msra.mxu0 %v1016
  %1425 = vmatpush.msra.mxu0 %v1014
  %1426 = vmatpush.msra.mxu0 %v1012
  %1427 = vmatpush.msra.mxu0 %v1010
  %1428 = vmatpush.msra.mxu0 %v1008
  %1429 = vmatmul.f32.gmra.mxu0 %v1409
  %v1430 = vpop.f32.mrf.mxu0
  %v1431 = vadd.f32 0.0, %v1430
  %1432 = vdwg.mxu0
  %1433 = vmatpush.msra.mxu0 %v1039
  %1434 = vmatpush.msra.mxu0 %v1037
  %1435 = vmatpush.msra.mxu0 %v1035
  %1436 = vmatpush.msra.mxu0 %v1033
  %1437 = vmatpush.msra.mxu0 %v1031
  %1438 = vmatpush.msra.mxu0 %v1029
  %1439 = vmatpush.msra.mxu0 %v1027
  %1440 = vmatpush.msra.mxu0 %v1025
  %1441 = vmatpush.msra.mxu0 %v1023
  %1442 = vmatpush.msra.mxu0 %v1021
  %1443 = vmatpush.msra.mxu0 %v1019
  %1444 = vmatpush.msra.mxu0 %v1017
  %1445 = vmatpush.msra.mxu0 %v1015
  %1446 = vmatpush.msra.mxu0 %v1013
  %1447 = vmatpush.msra.mxu0 %v1011
  %1448 = vmatpush.msra.mxu0 %v1009
  %1449 = vmatmul.f32.gmra.mxu0 %v1409
  %v1450 = vpop.f32.mrf.mxu0
  %v1451 = vadd.f32 0.0, %v1450
  %1452 = vdwg.mxu0
  %v1453 = vadd.f32 %v1410, %v1431
  %v1454 = vadd.f32 %v1411, %v1451
  %v1455 = vxor.u32 %v1453, 2147483648
  %v1456 = vxor.u32 %v1454, 2147483648
  %v1457 = vmul.f32 %v1455, 1.442695
  %v1458 = vpow.pop %v1457
  %v1459 = vmul.f32 %v1456, 1.442695
  %v1460 = vpow.pop %v1459
  %v1461 = vadd.f32 %v1458, 1.0
  %v1462 = vadd.f32 %v1460, 1.0
  %v1463 = vrcp.pop %v1461
  %v1464 = vmul.f32 %v1461, %v1463
  %v1465 = vsub.f32 1.0, %v1464
  %v1466 = vmul.f32 %v1463, %v1465
  %v1467 = vadd.f32 %v1463, %v1466
  %vm1468 = vweird.f32 %v1461
  %vm1469 = vweird.f32 %v1463
  %vm1470 = vmor %vm1468, %vm1469
  %v1471 = vsel %vm1470, %v1463, %v1467
  %v1472 = vand.u32 2147483647, %v1461
  %vm1473 = vcmp.eq.f32.partialorder %v1472, 8.507059e+37
  %v1474 = vand.u32 %v1461, 2147483648
  %v1475 = vor.u32 1.1754944e-38, %v1474
  %v1476 = vsel %vm1473, %v1475, %v1471
  %v1477 = vmul.f32 1.0, %v1476
  %v1478 = vrcp.pop %v1462
  %v1479 = vmul.f32 %v1462, %v1478
  %v1480 = vsub.f32 1.0, %v1479
  %v1481 = vmul.f32 %v1478, %v1480
  %v1482 = vadd.f32 %v1478, %v1481
  %vm1483 = vweird.f32 %v1462
  %vm1484 = vweird.f32 %v1478
  %vm1485 = vmor %vm1483, %vm1484
  %v1486 = vsel %vm1485, %v1478, %v1482
  %v1487 = vand.u32 2147483647, %v1462
  %vm1488 = vcmp.eq.f32.partialorder %v1487, 8.507059e+37
  %v1489 = vand.u32 %v1462, 2147483648
  %v1490 = vor.u32 1.1754944e-38, %v1489
  %v1491 = vsel %vm1488, %v1490, %v1486
  %v1492 = vmul.f32 1.0, %v1491
  %v1493 = vmul.f32 %v1492, %v1409
  %1494 = vmatpush.msra.mxu0 %v1136
  %1495 = vmatpush.msra.mxu0 %v1135
  %1496 = vmatpush.msra.mxu0 %v1134
  %1497 = vmatpush.msra.mxu0 %v1133
  %1498 = vmatpush.msra.mxu0 %v1132
  %1499 = vmatpush.msra.mxu0 %v1131
  %1500 = vmatpush.msra.mxu0 %v1130
  %1501 = vmatpush.msra.mxu0 %v1129
  %1502 = vmatpush.msra.mxu0 %v1128
  %1503 = vmatpush.msra.mxu0 %v1127
  %1504 = vmatpush.msra.mxu0 %v1126
  %1505 = vmatpush.msra.mxu0 %v1125
  %1506 = vmatpush.msra.mxu0 %v1124
  %1507 = vmatpush.msra.mxu0 %v1123
  %1508 = vmatpush.msra.mxu0 %v1122
  %1509 = vmatpush.msra.mxu0 %v1121
  %1510 = vmatmul.f32.gmra.mxu0 %v1493
  %v1511 = vpop.f32.mrf.mxu0
  %v1512 = vadd.f32 0.0, %v1511
  %1513 = vdwg.mxu0
  %v1514 = vadd.f32 %v1412, %v1512
  %v1515 = vtanh.pop %v1514
  %v1516 = vsub.f32 1.0, %v1477
  %v1517 = vmul.f32 %v1516, %v1409
  %v1518 = vmul.f32 %v1477, %v1515
  %v1519 = vadd.f32 %v1517, %v1518
  %vm1520 = vcmp.eq.s32.totalorder %v1002, 3
  %v1521 = vsel %vm1520, 1, 0
  %1522 = vset.pattern.permute.xlu0 0
  %1523 = vperm.xlu0 %1522, %v1521
  %v1524 = vpop.permute.xlu0 %1523
  %vm1525 = vcmp.eq.s32.totalorder %v1524, 1
  %v1526 = vsel %vm1525, %v1519, %v1407
  %v1527 = vld [vmem:[#allocation2 + $0x40] sm:$0xff]
  %v1528 = vmul.f32 %v1527, %v1519
  %v1529 = vld [vmem:[#allocation4 + $0x60] sm:$0xff]
  %v1530 = vld [vmem:[#allocation4 + $0x68] sm:$0xff]
  %v1531 = vld [vmem:[#allocation4 + $0x70] sm:$0xff]
  %1532 = vmatpush.msra.mxu0 %v1038
  %1533 = vmatpush.msra.mxu0 %v1036
  %1534 = vmatpush.msra.mxu0 %v1034
  %1535 = vmatpush.msra.mxu0 %v1032
  %1536 = vmatpush.msra.mxu0 %v1030
  %1537 = vmatpush.msra.mxu0 %v1028
  %1538 = vmatpush.msra.mxu0 %v1026
  %1539 = vmatpush.msra.mxu0 %v1024
  %1540 = vmatpush.msra.mxu0 %v1022
  %1541 = vmatpush.msra.mxu0 %v1020
  %1542 = vmatpush.msra.mxu0 %v1018
  %1543 = vmatpush.msra.mxu0 %v1016
  %1544 = vmatpush.msra.mxu0 %v1014
  %1545 = vmatpush.msra.mxu0 %v1012
  %1546 = vmatpush.msra.mxu0 %v1010
  %1547 = vmatpush.msra.mxu0 %v1008
  %1548 = vmatmul.f32.gmra.mxu0 %v1528
  %v1549 = vpop.f32.mrf.mxu0
  %v1550 = vadd.f32 0.0, %v1549
  %1551 = vdwg.mxu0
  %1552 = vmatpush.msra.mxu0 %v1039
  %1553 = vmatpush.msra.mxu0 %v1037
  %1554 = vmatpush.msra.mxu0 %v1035
  %1555 = vmatpush.msra.mxu0 %v1033
  %1556 = vmatpush.msra.mxu0 %v1031
  %1557 = vmatpush.msra.mxu0 %v1029
  %1558 = vmatpush.msra.mxu0 %v1027
  %1559 = vmatpush.msra.mxu0 %v1025
  %1560 = vmatpush.msra.mxu0 %v1023
  %1561 = vmatpush.msra.mxu0 %v1021
  %1562 = vmatpush.msra.mxu0 %v1019
  %1563 = vmatpush.msra.mxu0 %v1017
  %1564 = vmatpush.msra.mxu0 %v1015
  %1565 = vmatpush.msra.mxu0 %v1013
  %1566 = vmatpush.msra.mxu0 %v1011
  %1567 = vmatpush.msra.mxu0 %v1009
  %1568 = vmatmul.f32.gmra.mxu0 %v1528
  %v1569 = vpop.f32.mrf.mxu0
  %v1570 = vadd.f32 0.0, %v1569
  %1571 = vdwg.mxu0
  %v1572 = vadd.f32 %v1529, %v1550
  %v1573 = vadd.f32 %v1530, %v1570
  %v1574 = vxor.u32 %v1572, 2147483648
  %v1575 = vxor.u32 %v1573, 2147483648
  %v1576 = vmul.f32 %v1574, 1.442695
  %v1577 = vpow.pop %v1576
  %v1578 = vmul.f32 %v1575, 1.442695
  %v1579 = vpow.pop %v1578
  %v1580 = vadd.f32 %v1577, 1.0
  %v1581 = vadd.f32 %v1579, 1.0
  %v1582 = vrcp.pop %v1580
  %v1583 = vmul.f32 %v1580, %v1582
  %v1584 = vsub.f32 1.0, %v1583
  %v1585 = vmul.f32 %v1582, %v1584
  %v1586 = vadd.f32 %v1582, %v1585
  %vm1587 = vweird.f32 %v1580
  %vm1588 = vweird.f32 %v1582
  %vm1589 = vmor %vm1587, %vm1588
  %v1590 = vsel %vm1589, %v1582, %v1586
  %v1591 = vand.u32 2147483647, %v1580
  %vm1592 = vcmp.eq.f32.partialorder %v1591, 8.507059e+37
  %v1593 = vand.u32 %v1580, 2147483648
  %v1594 = vor.u32 1.1754944e-38, %v1593
  %v1595 = vsel %vm1592, %v1594, %v1590
  %v1596 = vmul.f32 1.0, %v1595
  %v1597 = vrcp.pop %v1581
  %v1598 = vmul.f32 %v1581, %v1597
  %v1599 = vsub.f32 1.0, %v1598
  %v1600 = vmul.f32 %v1597, %v1599
  %v1601 = vadd.f32 %v1597, %v1600
  %vm1602 = vweird.f32 %v1581
  %vm1603 = vweird.f32 %v1597
  %vm1604 = vmor %vm1602, %vm1603
  %v1605 = vsel %vm1604, %v1597, %v1601
  %v1606 = vand.u32 2147483647, %v1581
  %vm1607 = vcmp.eq.f32.partialorder %v1606, 8.507059e+37
  %v1608 = vand.u32 %v1581, 2147483648
  %v1609 = vor.u32 1.1754944e-38, %v1608
  %v1610 = vsel %vm1607, %v1609, %v1605
  %v1611 = vmul.f32 1.0, %v1610
  %v1612 = vmul.f32 %v1611, %v1528
  %1613 = vmatpush.msra.mxu0 %v1136
  %1614 = vmatpush.msra.mxu0 %v1135
  %1615 = vmatpush.msra.mxu0 %v1134
  %1616 = vmatpush.msra.mxu0 %v1133
  %1617 = vmatpush.msra.mxu0 %v1132
  %1618 = vmatpush.msra.mxu0 %v1131
  %1619 = vmatpush.msra.mxu0 %v1130
  %1620 = vmatpush.msra.mxu0 %v1129
  %1621 = vmatpush.msra.mxu0 %v1128
  %1622 = vmatpush.msra.mxu0 %v1127
  %1623 = vmatpush.msra.mxu0 %v1126
  %1624 = vmatpush.msra.mxu0 %v1125
  %1625 = vmatpush.msra.mxu0 %v1124
  %1626 = vmatpush.msra.mxu0 %v1123
  %1627 = vmatpush.msra.mxu0 %v1122
  %1628 = vmatpush.msra.mxu0 %v1121
  %1629 = vmatmul.f32.gmra.mxu0 %v1612
  %v1630 = vpop.f32.mrf.mxu0
  %v1631 = vadd.f32 0.0, %v1630
  %1632 = vdwg.mxu0
  %v1633 = vadd.f32 %v1531, %v1631
  %v1634 = vtanh.pop %v1633
  %v1635 = vsub.f32 1.0, %v1596
  %v1636 = vmul.f32 %v1635, %v1528
  %v1637 = vmul.f32 %v1596, %v1634
  %v1638 = vadd.f32 %v1636, %v1637
  %vm1639 = vcmp.eq.s32.totalorder %v1002, 4
  %v1640 = vsel %vm1639, 1, 0
  %1641 = vset.pattern.permute.xlu0 0
  %1642 = vperm.xlu0 %1641, %v1640
  %v1643 = vpop.permute.xlu0 %1642
  %vm1644 = vcmp.eq.s32.totalorder %v1643, 1
  %v1645 = vsel %vm1644, %v1638, %v1526
  %v1646 = vld [vmem:[#allocation2 + $0x50] sm:$0xff]
  %v1647 = vmul.f32 %v1646, %v1638
  %v1648 = vld [vmem:[#allocation4 + $0x78] sm:$0xff]
  %v1649 = vld [vmem:[#allocation4 + $0x80] sm:$0xff]
  %v1650 = vld [vmem:[#allocation4 + $0x88] sm:$0xff]
  %1651 = vmatpush.msra.mxu0 %v1038
  %1652 = vmatpush.msra.mxu0 %v1036
  %1653 = vmatpush.msra.mxu0 %v1034
  %1654 = vmatpush.msra.mxu0 %v1032
  %1655 = vmatpush.msra.mxu0 %v1030
  %1656 = vmatpush.msra.mxu0 %v1028
  %1657 = vmatpush.msra.mxu0 %v1026
  %1658 = vmatpush.msra.mxu0 %v1024
  %1659 = vmatpush.msra.mxu0 %v1022
  %1660 = vmatpush.msra.mxu0 %v1020
  %1661 = vmatpush.msra.mxu0 %v1018
  %1662 = vmatpush.msra.mxu0 %v1016
  %1663 = vmatpush.msra.mxu0 %v1014
  %1664 = vmatpush.msra.mxu0 %v1012
  %1665 = vmatpush.msra.mxu0 %v1010
  %1666 = vmatpush.msra.mxu0 %v1008
  %1667 = vmatmul.f32.gmra.mxu0 %v1647
  %v1668 = vpop.f32.mrf.mxu0
  %v1669 = vadd.f32 0.0, %v1668
  %1670 = vdwg.mxu0
  %1671 = vmatpush.msra.mxu0 %v1039
  %1672 = vmatpush.msra.mxu0 %v1037
  %1673 = vmatpush.msra.mxu0 %v1035
  %1674 = vmatpush.msra.mxu0 %v1033
  %1675 = vmatpush.msra.mxu0 %v1031
  %1676 = vmatpush.msra.mxu0 %v1029
  %1677 = vmatpush.msra.mxu0 %v1027
  %1678 = vmatpush.msra.mxu0 %v1025
  %1679 = vmatpush.msra.mxu0 %v1023
  %1680 = vmatpush.msra.mxu0 %v1021
  %1681 = vmatpush.msra.mxu0 %v1019
  %1682 = vmatpush.msra.mxu0 %v1017
  %1683 = vmatpush.msra.mxu0 %v1015
  %1684 = vmatpush.msra.mxu0 %v1013
  %1685 = vmatpush.msra.mxu0 %v1011
  %1686 = vmatpush.msra.mxu0 %v1009
  %1687 = vmatmul.f32.gmra.mxu0 %v1647
  %v1688 = vpop.f32.mrf.mxu0
  %v1689 = vadd.f32 0.0, %v1688
  %1690 = vdwg.mxu0
  %v1691 = vadd.f32 %v1648, %v1669
  %v1692 = vadd.f32 %v1649, %v1689
  %v1693 = vxor.u32 %v1691, 2147483648
  %v1694 = vxor.u32 %v1692, 2147483648
  %v1695 = vmul.f32 %v1693, 1.442695
  %v1696 = vpow.pop %v1695
  %v1697 = vmul.f32 %v1694, 1.442695
  %v1698 = vpow.pop %v1697
  %v1699 = vadd.f32 %v1696, 1.0
  %v1700 = vadd.f32 %v1698, 1.0
  %v1701 = vrcp.pop %v1699
  %v1702 = vmul.f32 %v1699, %v1701
  %v1703 = vsub.f32 1.0, %v1702
  %v1704 = vmul.f32 %v1701, %v1703
  %v1705 = vadd.f32 %v1701, %v1704
  %vm1706 = vweird.f32 %v1699
  %vm1707 = vweird.f32 %v1701
  %vm1708 = vmor %vm1706, %vm1707
  %v1709 = vsel %vm1708, %v1701, %v1705
  %v1710 = vand.u32 2147483647, %v1699
  %vm1711 = vcmp.eq.f32.partialorder %v1710, 8.507059e+37
  %v1712 = vand.u32 %v1699, 2147483648
  %v1713 = vor.u32 1.1754944e-38, %v1712
  %v1714 = vsel %vm1711, %v1713, %v1709
  %v1715 = vmul.f32 1.0, %v1714
  %v1716 = vrcp.pop %v1700
  %v1717 = vmul.f32 %v1700, %v1716
  %v1718 = vsub.f32 1.0, %v1717
  %v1719 = vmul.f32 %v1716, %v1718
  %v1720 = vadd.f32 %v1716, %v1719
  %vm1721 = vweird.f32 %v1700
  %vm1722 = vweird.f32 %v1716
  %vm1723 = vmor %vm1721, %vm1722
  %v1724 = vsel %vm1723, %v1716, %v1720
  %v1725 = vand.u32 2147483647, %v1700
  %vm1726 = vcmp.eq.f32.partialorder %v1725, 8.507059e+37
  %v1727 = vand.u32 %v1700, 2147483648
  %v1728 = vor.u32 1.1754944e-38, %v1727
  %v1729 = vsel %vm1726, %v1728, %v1724
  %v1730 = vmul.f32 1.0, %v1729
  %v1731 = vmul.f32 %v1730, %v1647
  %1732 = vmatpush.msra.mxu0 %v1136
  %1733 = vmatpush.msra.mxu0 %v1135
  %1734 = vmatpush.msra.mxu0 %v1134
  %1735 = vmatpush.msra.mxu0 %v1133
  %1736 = vmatpush.msra.mxu0 %v1132
  %1737 = vmatpush.msra.mxu0 %v1131
  %1738 = vmatpush.msra.mxu0 %v1130
  %1739 = vmatpush.msra.mxu0 %v1129
  %1740 = vmatpush.msra.mxu0 %v1128
  %1741 = vmatpush.msra.mxu0 %v1127
  %1742 = vmatpush.msra.mxu0 %v1126
  %1743 = vmatpush.msra.mxu0 %v1125
  %1744 = vmatpush.msra.mxu0 %v1124
  %1745 = vmatpush.msra.mxu0 %v1123
  %1746 = vmatpush.msra.mxu0 %v1122
  %1747 = vmatpush.msra.mxu0 %v1121
  %1748 = vmatmul.f32.gmra.mxu0 %v1731
  %v1749 = vpop.f32.mrf.mxu0
  %v1750 = vadd.f32 0.0, %v1749
  %1751 = vdwg.mxu0
  %v1752 = vadd.f32 %v1650, %v1750
  %v1753 = vtanh.pop %v1752
  %v1754 = vsub.f32 1.0, %v1715
  %v1755 = vmul.f32 %v1754, %v1647
  %v1756 = vmul.f32 %v1715, %v1753
  %v1757 = vadd.f32 %v1755, %v1756
  %vm1758 = vcmp.eq.s32.totalorder %v1002, 5
  %v1759 = vsel %vm1758, 1, 0
  %1760 = vset.pattern.permute.xlu0 0
  %1761 = vperm.xlu0 %1760, %v1759
  %v1762 = vpop.permute.xlu0 %1761
  %vm1763 = vcmp.eq.s32.totalorder %v1762, 1
  %v1764 = vsel %vm1763, %v1757, %v1645
  %v1765 = vld [vmem:[#allocation2 + $0x60] sm:$0xff]
  %v1766 = vmul.f32 %v1765, %v1757
  %v1767 = vld [vmem:[#allocation4 + $0x90] sm:$0xff]
  %v1768 = vld [vmem:[#allocation4 + $0x98] sm:$0xff]
  %v1769 = vld [vmem:[#allocation4 + $0xa0] sm:$0xff]
  %1770 = vmatpush.msra.mxu0 %v1038
  %1771 = vmatpush.msra.mxu0 %v1036
  %1772 = vmatpush.msra.mxu0 %v1034
  %1773 = vmatpush.msra.mxu0 %v1032
  %1774 = vmatpush.msra.mxu0 %v1030
  %1775 = vmatpush.msra.mxu0 %v1028
  %1776 = vmatpush.msra.mxu0 %v1026
  %1777 = vmatpush.msra.mxu0 %v1024
  %1778 = vmatpush.msra.mxu0 %v1022
  %1779 = vmatpush.msra.mxu0 %v1020
  %1780 = vmatpush.msra.mxu0 %v1018
  %1781 = vmatpush.msra.mxu0 %v1016
  %1782 = vmatpush.msra.mxu0 %v1014
  %1783 = vmatpush.msra.mxu0 %v1012
  %1784 = vmatpush.msra.mxu0 %v1010
  %1785 = vmatpush.msra.mxu0 %v1008
  %1786 = vmatmul.f32.gmra.mxu0 %v1766
  %v1787 = vpop.f32.mrf.mxu0
  %v1788 = vadd.f32 0.0, %v1787
  %1789 = vdwg.mxu0
  %1790 = vmatpush.msra.mxu0 %v1039
  %1791 = vmatpush.msra.mxu0 %v1037
  %1792 = vmatpush.msra.mxu0 %v1035
  %1793 = vmatpush.msra.mxu0 %v1033
  %1794 = vmatpush.msra.mxu0 %v1031
  %1795 = vmatpush.msra.mxu0 %v1029
  %1796 = vmatpush.msra.mxu0 %v1027
  %1797 = vmatpush.msra.mxu0 %v1025
  %1798 = vmatpush.msra.mxu0 %v1023
  %1799 = vmatpush.msra.mxu0 %v1021
  %1800 = vmatpush.msra.mxu0 %v1019
  %1801 = vmatpush.msra.mxu0 %v1017
  %1802 = vmatpush.msra.mxu0 %v1015
  %1803 = vmatpush.msra.mxu0 %v1013
  %1804 = vmatpush.msra.mxu0 %v1011
  %1805 = vmatpush.msra.mxu0 %v1009
  %1806 = vmatmul.f32.gmra.mxu0 %v1766
  %v1807 = vpop.f32.mrf.mxu0
  %v1808 = vadd.f32 0.0, %v1807
  %1809 = vdwg.mxu0
  %v1810 = vadd.f32 %v1767, %v1788
  %v1811 = vadd.f32 %v1768, %v1808
  %v1812 = vxor.u32 %v1810, 2147483648
  %v1813 = vxor.u32 %v1811, 2147483648
  %v1814 = vmul.f32 %v1812, 1.442695
  %v1815 = vpow.pop %v1814
  %v1816 = vmul.f32 %v1813, 1.442695
  %v1817 = vpow.pop %v1816
  %v1818 = vadd.f32 %v1815, 1.0
  %v1819 = vadd.f32 %v1817, 1.0
  %v1820 = vrcp.pop %v1818
  %v1821 = vmul.f32 %v1818, %v1820
  %v1822 = vsub.f32 1.0, %v1821
  %v1823 = vmul.f32 %v1820, %v1822
  %v1824 = vadd.f32 %v1820, %v1823
  %vm1825 = vweird.f32 %v1818
  %vm1826 = vweird.f32 %v1820
  %vm1827 = vmor %vm1825, %vm1826
  %v1828 = vsel %vm1827, %v1820, %v1824
  %v1829 = vand.u32 2147483647, %v1818
  %vm1830 = vcmp.eq.f32.partialorder %v1829, 8.507059e+37
  %v1831 = vand.u32 %v1818, 2147483648
  %v1832 = vor.u32 1.1754944e-38, %v1831
  %v1833 = vsel %vm1830, %v1832, %v1828
  %v1834 = vmul.f32 1.0, %v1833
  %v1835 = vrcp.pop %v1819
  %v1836 = vmul.f32 %v1819, %v1835
  %v1837 = vsub.f32 1.0, %v1836
  %v1838 = vmul.f32 %v1835, %v1837
  %v1839 = vadd.f32 %v1835, %v1838
  %vm1840 = vweird.f32 %v1819
  %vm1841 = vweird.f32 %v1835
  %vm1842 = vmor %vm1840, %vm1841
  %v1843 = vsel %vm1842, %v1835, %v1839
  %v1844 = vand.u32 2147483647, %v1819
  %vm1845 = vcmp.eq.f32.partialorder %v1844, 8.507059e+37
  %v1846 = vand.u32 %v1819, 2147483648
  %v1847 = vor.u32 1.1754944e-38, %v1846
  %v1848 = vsel %vm1845, %v1847, %v1843
  %v1849 = vmul.f32 1.0, %v1848
  %v1850 = vmul.f32 %v1849, %v1766
  %1851 = vmatpush.msra.mxu0 %v1136
  %1852 = vmatpush.msra.mxu0 %v1135
  %1853 = vmatpush.msra.mxu0 %v1134
  %1854 = vmatpush.msra.mxu0 %v1133
  %1855 = vmatpush.msra.mxu0 %v1132
  %1856 = vmatpush.msra.mxu0 %v1131
  %1857 = vmatpush.msra.mxu0 %v1130
  %1858 = vmatpush.msra.mxu0 %v1129
  %1859 = vmatpush.msra.mxu0 %v1128
  %1860 = vmatpush.msra.mxu0 %v1127
  %1861 = vmatpush.msra.mxu0 %v1126
  %1862 = vmatpush.msra.mxu0 %v1125
  %1863 = vmatpush.msra.mxu0 %v1124
  %1864 = vmatpush.msra.mxu0 %v1123
  %1865 = vmatpush.msra.mxu0 %v1122
  %1866 = vmatpush.msra.mxu0 %v1121
  %1867 = vmatmul.f32.gmra.mxu0 %v1850
  %v1868 = vpop.f32.mrf.mxu0
  %v1869 = vadd.f32 0.0, %v1868
  %1870 = vdwg.mxu0
  %v1871 = vadd.f32 %v1769, %v1869
  %v1872 = vtanh.pop %v1871
  %v1873 = vsub.f32 1.0, %v1834
  %v1874 = vmul.f32 %v1873, %v1766
  %v1875 = vmul.f32 %v1834, %v1872
  %v1876 = vadd.f32 %v1874, %v1875
  %vm1877 = vcmp.eq.s32.totalorder %v1002, 6
  %v1878 = vsel %vm1877, 1, 0
  %1879 = vset.pattern.permute.xlu0 0
  %1880 = vperm.xlu0 %1879, %v1878
  %v1881 = vpop.permute.xlu0 %1880
  %vm1882 = vcmp.eq.s32.totalorder %v1881, 1
  %v1883 = vsel %vm1882, %v1876, %v1764
  %v1884 = vld [vmem:[#allocation2 + $0x70] sm:$0xff]
  %v1885 = vmul.f32 %v1884, %v1876
  %v1886 = vld [vmem:[#allocation4 + $0xa8] sm:$0xff]
  %v1887 = vld [vmem:[#allocation4 + $0xb0] sm:$0xff]
  %v1888 = vld [vmem:[#allocation4 + $0xb8] sm:$0xff]
  %1889 = vmatpush.msra.mxu0 %v1038
  %1890 = vmatpush.msra.mxu0 %v1036
  %1891 = vmatpush.msra.mxu0 %v1034
  %1892 = vmatpush.msra.mxu0 %v1032
  %1893 = vmatpush.msra.mxu0 %v1030
  %1894 = vmatpush.msra.mxu0 %v1028
  %1895 = vmatpush.msra.mxu0 %v1026
  %1896 = vmatpush.msra.mxu0 %v1024
  %1897 = vmatpush.msra.mxu0 %v1022
  %1898 = vmatpush.msra.mxu0 %v1020
  %1899 = vmatpush.msra.mxu0 %v1018
  %1900 = vmatpush.msra.mxu0 %v1016
  %1901 = vmatpush.msra.mxu0 %v1014
  %1902 = vmatpush.msra.mxu0 %v1012
  %1903 = vmatpush.msra.mxu0 %v1010
  %1904 = vmatpush.msra.mxu0 %v1008
  %1905 = vmatmul.f32.gmra.mxu0 %v1885
  %v1906 = vpop.f32.mrf.mxu0
  %v1907 = vadd.f32 0.0, %v1906
  %1908 = vdwg.mxu0
  %1909 = vmatpush.msra.mxu0 %v1039
  %1910 = vmatpush.msra.mxu0 %v1037
  %1911 = vmatpush.msra.mxu0 %v1035
  %1912 = vmatpush.msra.mxu0 %v1033
  %1913 = vmatpush.msra.mxu0 %v1031
  %1914 = vmatpush.msra.mxu0 %v1029
  %1915 = vmatpush.msra.mxu0 %v1027
  %1916 = vmatpush.msra.mxu0 %v1025
  %1917 = vmatpush.msra.mxu0 %v1023
  %1918 = vmatpush.msra.mxu0 %v1021
  %1919 = vmatpush.msra.mxu0 %v1019
  %1920 = vmatpush.msra.mxu0 %v1017
  %1921 = vmatpush.msra.mxu0 %v1015
  %1922 = vmatpush.msra.mxu0 %v1013
  %1923 = vmatpush.msra.mxu0 %v1011
  %1924 = vmatpush.msra.mxu0 %v1009
  %1925 = vmatmul.f32.gmra.mxu0 %v1885
  %v1926 = vpop.f32.mrf.mxu0
  %v1927 = vadd.f32 0.0, %v1926
  %1928 = vdwg.mxu0
  %v1929 = vadd.f32 %v1886, %v1907
  %v1930 = vadd.f32 %v1887, %v1927
  %v1931 = vxor.u32 %v1929, 2147483648
  %v1932 = vxor.u32 %v1930, 2147483648
  %v1933 = vmul.f32 %v1931, 1.442695
  %v1934 = vpow.pop %v1933
  %v1935 = vmul.f32 %v1932, 1.442695
  %v1936 = vpow.pop %v1935
  %v1937 = vadd.f32 %v1934, 1.0
  %v1938 = vadd.f32 %v1936, 1.0
  %v1939 = vrcp.pop %v1937
  %v1940 = vmul.f32 %v1937, %v1939
  %v1941 = vsub.f32 1.0, %v1940
  %v1942 = vmul.f32 %v1939, %v1941
  %v1943 = vadd.f32 %v1939, %v1942
  %vm1944 = vweird.f32 %v1937
  %vm1945 = vweird.f32 %v1939
  %vm1946 = vmor %vm1944, %vm1945
  %v1947 = vsel %vm1946, %v1939, %v1943
  %v1948 = vand.u32 2147483647, %v1937
  %vm1949 = vcmp.eq.f32.partialorder %v1948, 8.507059e+37
  %v1950 = vand.u32 %v1937, 2147483648
  %v1951 = vor.u32 1.1754944e-38, %v1950
  %v1952 = vsel %vm1949, %v1951, %v1947
  %v1953 = vmul.f32 1.0, %v1952
  %v1954 = vrcp.pop %v1938
  %v1955 = vmul.f32 %v1938, %v1954
  %v1956 = vsub.f32 1.0, %v1955
  %v1957 = vmul.f32 %v1954, %v1956
  %v1958 = vadd.f32 %v1954, %v1957
  %vm1959 = vweird.f32 %v1938
  %vm1960 = vweird.f32 %v1954
  %vm1961 = vmor %vm1959, %vm1960
  %v1962 = vsel %vm1961, %v1954, %v1958
  %v1963 = vand.u32 2147483647, %v1938
  %vm1964 = vcmp.eq.f32.partialorder %v1963, 8.507059e+37
  %v1965 = vand.u32 %v1938, 2147483648
  %v1966 = vor.u32 1.1754944e-38, %v1965
  %v1967 = vsel %vm1964, %v1966, %v1962
  %v1968 = vmul.f32 1.0, %v1967
  %v1969 = vmul.f32 %v1968, %v1885
  %1970 = vmatpush.msra.mxu0 %v1136
  %1971 = vmatpush.msra.mxu0 %v1135
  %1972 = vmatpush.msra.mxu0 %v1134
  %1973 = vmatpush.msra.mxu0 %v1133
  %1974 = vmatpush.msra.mxu0 %v1132
  %1975 = vmatpush.msra.mxu0 %v1131
  %1976 = vmatpush.msra.mxu0 %v1130
  %1977 = vmatpush.msra.mxu0 %v1129
  %1978 = vmatpush.msra.mxu0 %v1128
  %1979 = vmatpush.msra.mxu0 %v1127
  %1980 = vmatpush.msra.mxu0 %v1126
  %1981 = vmatpush.msra.mxu0 %v1125
  %1982 = vmatpush.msra.mxu0 %v1124
  %1983 = vmatpush.msra.mxu0 %v1123
  %1984 = vmatpush.msra.mxu0 %v1122
  %1985 = vmatpush.msra.mxu0 %v1121
  %1986 = vmatmul.f32.gmra.mxu0 %v1969
  %v1987 = vpop.f32.mrf.mxu0
  %v1988 = vadd.f32 0.0, %v1987
  %1989 = vdwg.mxu0
  %v1990 = vadd.f32 %v1888, %v1988
  %v1991 = vtanh.pop %v1990
  %v1992 = vsub.f32 1.0, %v1953
  %v1993 = vmul.f32 %v1992, %v1885
  %v1994 = vmul.f32 %v1953, %v1991
  %v1995 = vadd.f32 %v1993, %v1994
  %vm1996 = vcmp.eq.s32.totalorder %v1002, 7
  %v1997 = vsel %vm1996, 1, 0
  %1998 = vset.pattern.permute.xlu0 0
  %1999 = vperm.xlu0 %1998, %v1997
  %v2000 = vpop.permute.xlu0 %1999
  %vm2001 = vcmp.eq.s32.totalorder %v2000, 1
  %v2002 = vsel %vm2001, %v1995, %v1883
  %v2003 = vld [vmem:[#allocation2 + $0x80] sm:$0xff]
  %v2004 = vmul.f32 %v2003, %v1995
  %v2005 = vld [vmem:[#allocation4 + $0xc0] sm:$0xff]
  %v2006 = vld [vmem:[#allocation4 + $0xc8] sm:$0xff]
  %v2007 = vld [vmem:[#allocation4 + $0xd0] sm:$0xff]
  %2008 = vmatpush.msra.mxu0 %v1038
  %2009 = vmatpush.msra.mxu0 %v1036
  %2010 = vmatpush.msra.mxu0 %v1034
  %2011 = vmatpush.msra.mxu0 %v1032
  %2012 = vmatpush.msra.mxu0 %v1030
  %2013 = vmatpush.msra.mxu0 %v1028
  %2014 = vmatpush.msra.mxu0 %v1026
  %2015 = vmatpush.msra.mxu0 %v1024
  %2016 = vmatpush.msra.mxu0 %v1022
  %2017 = vmatpush.msra.mxu0 %v1020
  %2018 = vmatpush.msra.mxu0 %v1018
  %2019 = vmatpush.msra.mxu0 %v1016
  %2020 = vmatpush.msra.mxu0 %v1014
  %2021 = vmatpush.msra.mxu0 %v1012
  %2022 = vmatpush.msra.mxu0 %v1010
  %2023 = vmatpush.msra.mxu0 %v1008
  %2024 = vmatmul.f32.gmra.mxu0 %v2004
  %v2025 = vpop.f32.mrf.mxu0
  %v2026 = vadd.f32 0.0, %v2025
  %2027 = vdwg.mxu0
  %2028 = vmatpush.msra.mxu0 %v1039
  %2029 = vmatpush.msra.mxu0 %v1037
  %2030 = vmatpush.msra.mxu0 %v1035
  %2031 = vmatpush.msra.mxu0 %v1033
  %2032 = vmatpush.msra.mxu0 %v1031
  %2033 = vmatpush.msra.mxu0 %v1029
  %2034 = vmatpush.msra.mxu0 %v1027
  %2035 = vmatpush.msra.mxu0 %v1025
  %2036 = vmatpush.msra.mxu0 %v1023
  %2037 = vmatpush.msra.mxu0 %v1021
  %2038 = vmatpush.msra.mxu0 %v1019
  %2039 = vmatpush.msra.mxu0 %v1017
  %2040 = vmatpush.msra.mxu0 %v1015
  %2041 = vmatpush.msra.mxu0 %v1013
  %2042 = vmatpush.msra.mxu0 %v1011
  %2043 = vmatpush.msra.mxu0 %v1009
  %2044 = vmatmul.f32.gmra.mxu0 %v2004
  %v2045 = vpop.f32.mrf.mxu0
  %v2046 = vadd.f32 0.0, %v2045
  %2047 = vdwg.mxu0
  %v2048 = vadd.f32 %v2005, %v2026
  %v2049 = vadd.f32 %v2006, %v2046
  %v2050 = vxor.u32 %v2048, 2147483648
  %v2051 = vxor.u32 %v2049, 2147483648
  %v2052 = vmul.f32 %v2050, 1.442695
  %v2053 = vpow.pop %v2052
  %v2054 = vmul.f32 %v2051, 1.442695
  %v2055 = vpow.pop %v2054
  %v2056 = vadd.f32 %v2053, 1.0
  %v2057 = vadd.f32 %v2055, 1.0
  %v2058 = vrcp.pop %v2056
  %v2059 = vmul.f32 %v2056, %v2058
  %v2060 = vsub.f32 1.0, %v2059
  %v2061 = vmul.f32 %v2058, %v2060
  %v2062 = vadd.f32 %v2058, %v2061
  %vm2063 = vweird.f32 %v2056
  %vm2064 = vweird.f32 %v2058
  %vm2065 = vmor %vm2063, %vm2064
  %v2066 = vsel %vm2065, %v2058, %v2062
  %v2067 = vand.u32 2147483647, %v2056
  %vm2068 = vcmp.eq.f32.partialorder %v2067, 8.507059e+37
  %v2069 = vand.u32 %v2056, 2147483648
  %v2070 = vor.u32 1.1754944e-38, %v2069
  %v2071 = vsel %vm2068, %v2070, %v2066
  %v2072 = vmul.f32 1.0, %v2071
  %v2073 = vrcp.pop %v2057
  %v2074 = vmul.f32 %v2057, %v2073
  %v2075 = vsub.f32 1.0, %v2074
  %v2076 = vmul.f32 %v2073, %v2075
  %v2077 = vadd.f32 %v2073, %v2076
  %vm2078 = vweird.f32 %v2057
  %vm2079 = vweird.f32 %v2073
  %vm2080 = vmor %vm2078, %vm2079
  %v2081 = vsel %vm2080, %v2073, %v2077
  %v2082 = vand.u32 2147483647, %v2057
  %vm2083 = vcmp.eq.f32.partialorder %v2082, 8.507059e+37
  %v2084 = vand.u32 %v2057, 2147483648
  %v2085 = vor.u32 1.1754944e-38, %v2084
  %v2086 = vsel %vm2083, %v2085, %v2081
  %v2087 = vmul.f32 1.0, %v2086
  %v2088 = vmul.f32 %v2087, %v2004
  %2089 = vmatpush.msra.mxu0 %v1136
  %2090 = vmatpush.msra.mxu0 %v1135
  %2091 = vmatpush.msra.mxu0 %v1134
  %2092 = vmatpush.msra.mxu0 %v1133
  %2093 = vmatpush.msra.mxu0 %v1132
  %2094 = vmatpush.msra.mxu0 %v1131
  %2095 = vmatpush.msra.mxu0 %v1130
  %2096 = vmatpush.msra.mxu0 %v1129
  %2097 = vmatpush.msra.mxu0 %v1128
  %2098 = vmatpush.msra.mxu0 %v1127
  %2099 = vmatpush.msra.mxu0 %v1126
  %2100 = vmatpush.msra.mxu0 %v1125
  %2101 = vmatpush.msra.mxu0 %v1124
  %2102 = vmatpush.msra.mxu0 %v1123
  %2103 = vmatpush.msra.mxu0 %v1122
  %2104 = vmatpush.msra.mxu0 %v1121
  %2105 = vmatmul.f32.gmra.mxu0 %v2088
  %v2106 = vpop.f32.mrf.mxu0
  %v2107 = vadd.f32 0.0, %v2106
  %2108 = vdwg.mxu0
  %v2109 = vadd.f32 %v2007, %v2107
  %v2110 = vtanh.pop %v2109
  %v2111 = vsub.f32 1.0, %v2072
  %v2112 = vmul.f32 %v2111, %v2004
  %v2113 = vmul.f32 %v2072, %v2110
  %v2114 = vadd.f32 %v2112, %v2113
  %vm2115 = vcmp.eq.s32.totalorder %v1002, 8
  %v2116 = vsel %vm2115, 1, 0
  %2117 = vset.pattern.permute.xlu0 0
  %2118 = vperm.xlu0 %2117, %v2116
  %v2119 = vpop.permute.xlu0 %2118
  %vm2120 = vcmp.eq.s32.totalorder %v2119, 1
  %v2121 = vsel %vm2120, %v2114, %v2002
  %v2122 = vld [vmem:[#allocation2 + $0x90] sm:$0xff]
  %v2123 = vmul.f32 %v2122, %v2114
  %v2124 = vld [vmem:[#allocation4 + $0xd8] sm:$0xff]
  %v2125 = vld [vmem:[#allocation4 + $0xe0] sm:$0xff]
  %v2126 = vld [vmem:[#allocation4 + $0xe8] sm:$0xff]
  %2127 = vmatpush.msra.mxu0 %v1038
  %2128 = vmatpush.msra.mxu0 %v1036
  %2129 = vmatpush.msra.mxu0 %v1034
  %2130 = vmatpush.msra.mxu0 %v1032
  %2131 = vmatpush.msra.mxu0 %v1030
  %2132 = vmatpush.msra.mxu0 %v1028
  %2133 = vmatpush.msra.mxu0 %v1026
  %2134 = vmatpush.msra.mxu0 %v1024
  %2135 = vmatpush.msra.mxu0 %v1022
  %2136 = vmatpush.msra.mxu0 %v1020
  %2137 = vmatpush.msra.mxu0 %v1018
  %2138 = vmatpush.msra.mxu0 %v1016
  %2139 = vmatpush.msra.mxu0 %v1014
  %2140 = vmatpush.msra.mxu0 %v1012
  %2141 = vmatpush.msra.mxu0 %v1010
  %2142 = vmatpush.msra.mxu0 %v1008
  %2143 = vmatmul.f32.gmra.mxu0 %v2123
  %v2144 = vpop.f32.mrf.mxu0
  %v2145 = vadd.f32 0.0, %v2144
  %2146 = vdwg.mxu0
  %2147 = vmatpush.msra.mxu0 %v1039
  %2148 = vmatpush.msra.mxu0 %v1037
  %2149 = vmatpush.msra.mxu0 %v1035
  %2150 = vmatpush.msra.mxu0 %v1033
  %2151 = vmatpush.msra.mxu0 %v1031
  %2152 = vmatpush.msra.mxu0 %v1029
  %2153 = vmatpush.msra.mxu0 %v1027
  %2154 = vmatpush.msra.mxu0 %v1025
  %2155 = vmatpush.msra.mxu0 %v1023
  %2156 = vmatpush.msra.mxu0 %v1021
  %2157 = vmatpush.msra.mxu0 %v1019
  %2158 = vmatpush.msra.mxu0 %v1017
  %2159 = vmatpush.msra.mxu0 %v1015
  %2160 = vmatpush.msra.mxu0 %v1013
  %2161 = vmatpush.msra.mxu0 %v1011
  %2162 = vmatpush.msra.mxu0 %v1009
  %2163 = vmatmul.f32.gmra.mxu0 %v2123
  %v2164 = vpop.f32.mrf.mxu0
  %v2165 = vadd.f32 0.0, %v2164
  %2166 = vdwg.mxu0
  %v2167 = vadd.f32 %v2124, %v2145
  %v2168 = vadd.f32 %v2125, %v2165
  %v2169 = vxor.u32 %v2167, 2147483648
  %v2170 = vxor.u32 %v2168, 2147483648
  %v2171 = vmul.f32 %v2169, 1.442695
  %v2172 = vpow.pop %v2171
  %v2173 = vmul.f32 %v2170, 1.442695
  %v2174 = vpow.pop %v2173
  %v2175 = vadd.f32 %v2172, 1.0
  %v2176 = vadd.f32 %v2174, 1.0
  %v2177 = vrcp.pop %v2175
  %v2178 = vmul.f32 %v2175, %v2177
  %v2179 = vsub.f32 1.0, %v2178
  %v2180 = vmul.f32 %v2177, %v2179
  %v2181 = vadd.f32 %v2177, %v2180
  %vm2182 = vweird.f32 %v2175
  %vm2183 = vweird.f32 %v2177
  %vm2184 = vmor %vm2182, %vm2183
  %v2185 = vsel %vm2184, %v2177, %v2181
  %v2186 = vand.u32 2147483647, %v2175
  %vm2187 = vcmp.eq.f32.partialorder %v2186, 8.507059e+37
  %v2188 = vand.u32 %v2175, 2147483648
  %v2189 = vor.u32 1.1754944e-38, %v2188
  %v2190 = vsel %vm2187, %v2189, %v2185
  %v2191 = vmul.f32 1.0, %v2190
  %v2192 = vrcp.pop %v2176
  %v2193 = vmul.f32 %v2176, %v2192
  %v2194 = vsub.f32 1.0, %v2193
  %v2195 = vmul.f32 %v2192, %v2194
  %v2196 = vadd.f32 %v2192, %v2195
  %vm2197 = vweird.f32 %v2176
  %vm2198 = vweird.f32 %v2192
  %vm2199 = vmor %vm2197, %vm2198
  %v2200 = vsel %vm2199, %v2192, %v2196
  %v2201 = vand.u32 2147483647, %v2176
  %vm2202 = vcmp.eq.f32.partialorder %v2201, 8.507059e+37
  %v2203 = vand.u32 %v2176, 2147483648
  %v2204 = vor.u32 1.1754944e-38, %v2203
  %v2205 = vsel %vm2202, %v2204, %v2200
  %v2206 = vmul.f32 1.0, %v2205
  %v2207 = vmul.f32 %v2206, %v2123
  %2208 = vmatpush.msra.mxu0 %v1136
  %2209 = vmatpush.msra.mxu0 %v1135
  %2210 = vmatpush.msra.mxu0 %v1134
  %2211 = vmatpush.msra.mxu0 %v1133
  %2212 = vmatpush.msra.mxu0 %v1132
  %2213 = vmatpush.msra.mxu0 %v1131
  %2214 = vmatpush.msra.mxu0 %v1130
  %2215 = vmatpush.msra.mxu0 %v1129
  %2216 = vmatpush.msra.mxu0 %v1128
  %2217 = vmatpush.msra.mxu0 %v1127
  %2218 = vmatpush.msra.mxu0 %v1126
  %2219 = vmatpush.msra.mxu0 %v1125
  %2220 = vmatpush.msra.mxu0 %v1124
  %2221 = vmatpush.msra.mxu0 %v1123
  %2222 = vmatpush.msra.mxu0 %v1122
  %2223 = vmatpush.msra.mxu0 %v1121
  %2224 = vmatmul.f32.gmra.mxu0 %v2207
  %v2225 = vpop.f32.mrf.mxu0
  %v2226 = vadd.f32 0.0, %v2225
  %2227 = vdwg.mxu0
  %v2228 = vadd.f32 %v2126, %v2226
  %v2229 = vtanh.pop %v2228
  %v2230 = vsub.f32 1.0, %v2191
  %v2231 = vmul.f32 %v2230, %v2123
  %v2232 = vmul.f32 %v2191, %v2229
  %v2233 = vadd.f32 %v2231, %v2232
  %vm2234 = vcmp.eq.s32.totalorder %v1002, 9
  %v2235 = vsel %vm2234, 1, 0
  %2236 = vset.pattern.permute.xlu0 0
  %2237 = vperm.xlu0 %2236, %v2235
  %v2238 = vpop.permute.xlu0 %2237
  %vm2239 = vcmp.eq.s32.totalorder %v2238, 1
  %v2240 = vsel %vm2239, %v2233, %v2121
  %v2241 = vld [vmem:[#allocation2 + $0xa0] sm:$0xff]
  %v2242 = vmul.f32 %v2241, %v2233
  %v2243 = vld [vmem:[#allocation4 + $0xf0] sm:$0xff]
  %v2244 = vld [vmem:[#allocation4 + $0xf8] sm:$0xff]
  %v2245 = vld [vmem:[#allocation4 + $0x100] sm:$0xff]
  %2246 = vmatpush.msra.mxu0 %v1038
  %2247 = vmatpush.msra.mxu0 %v1036
  %2248 = vmatpush.msra.mxu0 %v1034
  %2249 = vmatpush.msra.mxu0 %v1032
  %2250 = vmatpush.msra.mxu0 %v1030
  %2251 = vmatpush.msra.mxu0 %v1028
  %2252 = vmatpush.msra.mxu0 %v1026
  %2253 = vmatpush.msra.mxu0 %v1024
  %2254 = vmatpush.msra.mxu0 %v1022
  %2255 = vmatpush.msra.mxu0 %v1020
  %2256 = vmatpush.msra.mxu0 %v1018
  %2257 = vmatpush.msra.mxu0 %v1016
  %2258 = vmatpush.msra.mxu0 %v1014
  %2259 = vmatpush.msra.mxu0 %v1012
  %2260 = vmatpush.msra.mxu0 %v1010
  %2261 = vmatpush.msra.mxu0 %v1008
  %2262 = vmatmul.f32.gmra.mxu0 %v2242
  %v2263 = vpop.f32.mrf.mxu0
  %v2264 = vadd.f32 0.0, %v2263
  %2265 = vdwg.mxu0
  %2266 = vmatpush.msra.mxu0 %v1039
  %2267 = vmatpush.msra.mxu0 %v1037
  %2268 = vmatpush.msra.mxu0 %v1035
  %2269 = vmatpush.msra.mxu0 %v1033
  %2270 = vmatpush.msra.mxu0 %v1031
  %2271 = vmatpush.msra.mxu0 %v1029
  %2272 = vmatpush.msra.mxu0 %v1027
  %2273 = vmatpush.msra.mxu0 %v1025
  %2274 = vmatpush.msra.mxu0 %v1023
  %2275 = vmatpush.msra.mxu0 %v1021
  %2276 = vmatpush.msra.mxu0 %v1019
  %2277 = vmatpush.msra.mxu0 %v1017
  %2278 = vmatpush.msra.mxu0 %v1015
  %2279 = vmatpush.msra.mxu0 %v1013
  %2280 = vmatpush.msra.mxu0 %v1011
  %2281 = vmatpush.msra.mxu0 %v1009
  %2282 = vmatmul.f32.gmra.mxu0 %v2242
  %v2283 = vpop.f32.mrf.mxu0
  %v2284 = vadd.f32 0.0, %v2283
  %2285 = vdwg.mxu0
  %v2286 = vadd.f32 %v2243, %v2264
  %v2287 = vadd.f32 %v2244, %v2284
  %v2288 = vxor.u32 %v2286, 2147483648
  %v2289 = vxor.u32 %v2287, 2147483648
  %v2290 = vmul.f32 %v2288, 1.442695
  %v2291 = vpow.pop %v2290
  %v2292 = vmul.f32 %v2289, 1.442695
  %v2293 = vpow.pop %v2292
  %v2294 = vadd.f32 %v2291, 1.0
  %v2295 = vadd.f32 %v2293, 1.0
  %v2296 = vrcp.pop %v2294
  %v2297 = vmul.f32 %v2294, %v2296
  %v2298 = vsub.f32 1.0, %v2297
  %v2299 = vmul.f32 %v2296, %v2298
  %v2300 = vadd.f32 %v2296, %v2299
  %vm2301 = vweird.f32 %v2294
  %vm2302 = vweird.f32 %v2296
  %vm2303 = vmor %vm2301, %vm2302
  %v2304 = vsel %vm2303, %v2296, %v2300
  %v2305 = vand.u32 2147483647, %v2294
  %vm2306 = vcmp.eq.f32.partialorder %v2305, 8.507059e+37
  %v2307 = vand.u32 %v2294, 2147483648
  %v2308 = vor.u32 1.1754944e-38, %v2307
  %v2309 = vsel %vm2306, %v2308, %v2304
  %v2310 = vmul.f32 1.0, %v2309
  %v2311 = vrcp.pop %v2295
  %v2312 = vmul.f32 %v2295, %v2311
  %v2313 = vsub.f32 1.0, %v2312
  %v2314 = vmul.f32 %v2311, %v2313
  %v2315 = vadd.f32 %v2311, %v2314
  %vm2316 = vweird.f32 %v2295
  %vm2317 = vweird.f32 %v2311
  %vm2318 = vmor %vm2316, %vm2317
  %v2319 = vsel %vm2318, %v2311, %v2315
  %v2320 = vand.u32 2147483647, %v2295
  %vm2321 = vcmp.eq.f32.partialorder %v2320, 8.507059e+37
  %v2322 = vand.u32 %v2295, 2147483648
  %v2323 = vor.u32 1.1754944e-38, %v2322
  %v2324 = vsel %vm2321, %v2323, %v2319
  %v2325 = vmul.f32 1.0, %v2324
  %v2326 = vmul.f32 %v2325, %v2242
  %2327 = vmatpush.msra.mxu0 %v1136
  %2328 = vmatpush.msra.mxu0 %v1135
  %2329 = vmatpush.msra.mxu0 %v1134
  %2330 = vmatpush.msra.mxu0 %v1133
  %2331 = vmatpush.msra.mxu0 %v1132
  %2332 = vmatpush.msra.mxu0 %v1131
  %2333 = vmatpush.msra.mxu0 %v1130
  %2334 = vmatpush.msra.mxu0 %v1129
  %2335 = vmatpush.msra.mxu0 %v1128
  %2336 = vmatpush.msra.mxu0 %v1127
  %2337 = vmatpush.msra.mxu0 %v1126
  %2338 = vmatpush.msra.mxu0 %v1125
  %2339 = vmatpush.msra.mxu0 %v1124
  %2340 = vmatpush.msra.mxu0 %v1123
  %2341 = vmatpush.msra.mxu0 %v1122
  %2342 = vmatpush.msra.mxu0 %v1121
  %2343 = vmatmul.f32.gmra.mxu0 %v2326
  %v2344 = vpop.f32.mrf.mxu0
  %v2345 = vadd.f32 0.0, %v2344
  %2346 = vdwg.mxu0
  %v2347 = vadd.f32 %v2245, %v2345
  %v2348 = vtanh.pop %v2347
  %v2349 = vsub.f32 1.0, %v2310
  %v2350 = vmul.f32 %v2349, %v2242
  %v2351 = vmul.f32 %v2310, %v2348
  %v2352 = vadd.f32 %v2350, %v2351
  %vm2353 = vcmp.eq.s32.totalorder %v1002, 10
  %v2354 = vsel %vm2353, 1, 0
  %2355 = vset.pattern.permute.xlu0 0
  %2356 = vperm.xlu0 %2355, %v2354
  %v2357 = vpop.permute.xlu0 %2356
  %vm2358 = vcmp.eq.s32.totalorder %v2357, 1
  %v2359 = vsel %vm2358, %v2352, %v2240
  %v2360 = vld [vmem:[#allocation2 + $0xb0] sm:$0xff]
  %v2361 = vmul.f32 %v2360, %v2352
  %v2362 = vld [vmem:[#allocation4 + $0x108] sm:$0xff]
  %v2363 = vld [vmem:[#allocation4 + $0x110] sm:$0xff]
  %v2364 = vld [vmem:[#allocation4 + $0x118] sm:$0xff]
  %2365 = vmatpush.msra.mxu0 %v1038
  %2366 = vmatpush.msra.mxu0 %v1036
  %2367 = vmatpush.msra.mxu0 %v1034
  %2368 = vmatpush.msra.mxu0 %v1032
  %2369 = vmatpush.msra.mxu0 %v1030
  %2370 = vmatpush.msra.mxu0 %v1028
  %2371 = vmatpush.msra.mxu0 %v1026
  %2372 = vmatpush.msra.mxu0 %v1024
  %2373 = vmatpush.msra.mxu0 %v1022
  %2374 = vmatpush.msra.mxu0 %v1020
  %2375 = vmatpush.msra.mxu0 %v1018
  %2376 = vmatpush.msra.mxu0 %v1016
  %2377 = vmatpush.msra.mxu0 %v1014
  %2378 = vmatpush.msra.mxu0 %v1012
  %2379 = vmatpush.msra.mxu0 %v1010
  %2380 = vmatpush.msra.mxu0 %v1008
  %2381 = vmatmul.f32.gmra.mxu0 %v2361
  %v2382 = vpop.f32.mrf.mxu0
  %v2383 = vadd.f32 0.0, %v2382
  %2384 = vdwg.mxu0
  %2385 = vmatpush.msra.mxu0 %v1039
  %2386 = vmatpush.msra.mxu0 %v1037
  %2387 = vmatpush.msra.mxu0 %v1035
  %2388 = vmatpush.msra.mxu0 %v1033
  %2389 = vmatpush.msra.mxu0 %v1031
  %2390 = vmatpush.msra.mxu0 %v1029
  %2391 = vmatpush.msra.mxu0 %v1027
  %2392 = vmatpush.msra.mxu0 %v1025
  %2393 = vmatpush.msra.mxu0 %v1023
  %2394 = vmatpush.msra.mxu0 %v1021
  %2395 = vmatpush.msra.mxu0 %v1019
  %2396 = vmatpush.msra.mxu0 %v1017
  %2397 = vmatpush.msra.mxu0 %v1015
  %2398 = vmatpush.msra.mxu0 %v1013
  %2399 = vmatpush.msra.mxu0 %v1011
  %2400 = vmatpush.msra.mxu0 %v1009
  %2401 = vmatmul.f32.gmra.mxu0 %v2361
  %v2402 = vpop.f32.mrf.mxu0
  %v2403 = vadd.f32 0.0, %v2402
  %2404 = vdwg.mxu0
  %v2405 = vadd.f32 %v2362, %v2383
  %v2406 = vadd.f32 %v2363, %v2403
  %v2407 = vxor.u32 %v2405, 2147483648
  %v2408 = vxor.u32 %v2406, 2147483648
  %v2409 = vmul.f32 %v2407, 1.442695
  %v2410 = vpow.pop %v2409
  %v2411 = vmul.f32 %v2408, 1.442695
  %v2412 = vpow.pop %v2411
  %v2413 = vadd.f32 %v2410, 1.0
  %v2414 = vadd.f32 %v2412, 1.0
  %v2415 = vrcp.pop %v2413
  %v2416 = vmul.f32 %v2413, %v2415
  %v2417 = vsub.f32 1.0, %v2416
  %v2418 = vmul.f32 %v2415, %v2417
  %v2419 = vadd.f32 %v2415, %v2418
  %vm2420 = vweird.f32 %v2413
  %vm2421 = vweird.f32 %v2415
  %vm2422 = vmor %vm2420, %vm2421
  %v2423 = vsel %vm2422, %v2415, %v2419
  %v2424 = vand.u32 2147483647, %v2413
  %vm2425 = vcmp.eq.f32.partialorder %v2424, 8.507059e+37
  %v2426 = vand.u32 %v2413, 2147483648
  %v2427 = vor.u32 1.1754944e-38, %v2426
  %v2428 = vsel %vm2425, %v2427, %v2423
  %v2429 = vmul.f32 1.0, %v2428
  %v2430 = vrcp.pop %v2414
  %v2431 = vmul.f32 %v2414, %v2430
  %v2432 = vsub.f32 1.0, %v2431
  %v2433 = vmul.f32 %v2430, %v2432
  %v2434 = vadd.f32 %v2430, %v2433
  %vm2435 = vweird.f32 %v2414
  %vm2436 = vweird.f32 %v2430
  %vm2437 = vmor %vm2435, %vm2436
  %v2438 = vsel %vm2437, %v2430, %v2434
  %v2439 = vand.u32 2147483647, %v2414
  %vm2440 = vcmp.eq.f32.partialorder %v2439, 8.507059e+37
  %v2441 = vand.u32 %v2414, 2147483648
  %v2442 = vor.u32 1.1754944e-38, %v2441
  %v2443 = vsel %vm2440, %v2442, %v2438
  %v2444 = vmul.f32 1.0, %v2443
  %v2445 = vmul.f32 %v2444, %v2361
  %2446 = vmatpush.msra.mxu0 %v1136
  %2447 = vmatpush.msra.mxu0 %v1135
  %2448 = vmatpush.msra.mxu0 %v1134
  %2449 = vmatpush.msra.mxu0 %v1133
  %2450 = vmatpush.msra.mxu0 %v1132
  %2451 = vmatpush.msra.mxu0 %v1131
  %2452 = vmatpush.msra.mxu0 %v1130
  %2453 = vmatpush.msra.mxu0 %v1129
  %2454 = vmatpush.msra.mxu0 %v1128
  %2455 = vmatpush.msra.mxu0 %v1127
  %2456 = vmatpush.msra.mxu0 %v1126
  %2457 = vmatpush.msra.mxu0 %v1125
  %2458 = vmatpush.msra.mxu0 %v1124
  %2459 = vmatpush.msra.mxu0 %v1123
  %2460 = vmatpush.msra.mxu0 %v1122
  %2461 = vmatpush.msra.mxu0 %v1121
  %2462 = vmatmul.f32.gmra.mxu0 %v2445
  %v2463 = vpop.f32.mrf.mxu0
  %v2464 = vadd.f32 0.0, %v2463
  %2465 = vdwg.mxu0
  %v2466 = vadd.f32 %v2364, %v2464
  %v2467 = vtanh.pop %v2466
  %v2468 = vsub.f32 1.0, %v2429
  %v2469 = vmul.f32 %v2468, %v2361
  %v2470 = vmul.f32 %v2429, %v2467
  %v2471 = vadd.f32 %v2469, %v2470
  %vm2472 = vcmp.eq.s32.totalorder %v1002, 11
  %v2473 = vsel %vm2472, 1, 0
  %2474 = vset.pattern.permute.xlu0 0
  %2475 = vperm.xlu0 %2474, %v2473
  %v2476 = vpop.permute.xlu0 %2475
  %vm2477 = vcmp.eq.s32.totalorder %v2476, 1
  %v2478 = vsel %vm2477, %v2471, %v2359
  %v2479 = vld [vmem:[%s9] sm:$0xff]
  %v2480 = vld [vmem:[%s9 + $0x8] sm:$0xff]
  %v2481 = vld [vmem:[%s9 + $0x10] sm:$0xff]
  %v2482 = vld [vmem:[%s9 + $0x18] sm:$0xff]
  %v2483 = vld [vmem:[%s9 + $0x20] sm:$0xff]
  %v2484 = vld [vmem:[%s9 + $0x28] sm:$0xff]
  %v2485 = vld [vmem:[%s9 + $0x30] sm:$0xff]
  %v2486 = vld [vmem:[%s9 + $0x38] sm:$0xff]
  %v2487 = vld [vmem:[%s9 + $0x40] sm:$0xff]
  %v2488 = vld [vmem:[%s9 + $0x48] sm:$0xff]
  %v2489 = vld [vmem:[%s9 + $0x50] sm:$0xff]
  %v2490 = vld [vmem:[%s9 + $0x58] sm:$0xff]
  %v2491 = vld [vmem:[%s9 + $0x60] sm:$0xff]
  %v2492 = vld [vmem:[%s9 + $0x68] sm:$0xff]
  %v2493 = vld [vmem:[%s9 + $0x70] sm:$0xff]
  %v2494 = vld [vmem:[%s9 + $0x78] sm:$0xff]
  %v2495 = vld [vmem:[%s10] sm:$0x1]
  %v2497 = vperm.slane %v2495, 0
  %2499 = vmatpush.msra.mxu0 %v2494
  %2500 = vmatpush.msra.mxu0 %v2493
  %2501 = vmatpush.msra.mxu0 %v2492
  %2502 = vmatpush.msra.mxu0 %v2491
  %2503 = vmatpush.msra.mxu0 %v2490
  %2504 = vmatpush.msra.mxu0 %v2489
  %2505 = vmatpush.msra.mxu0 %v2488
  %2506 = vmatpush.msra.mxu0 %v2487
  %2507 = vmatpush.msra.mxu0 %v2486
  %2508 = vmatpush.msra.mxu0 %v2485
  %2509 = vmatpush.msra.mxu0 %v2484
  %2510 = vmatpush.msra.mxu0 %v2483
  %2511 = vmatpush.msra.mxu0 %v2482
  %2512 = vmatpush.msra.mxu0 %v2481
  %2513 = vmatpush.msra.mxu0 %v2480
  %2514 = vmatpush.msra.mxu0 %v2479
  %2515 = vmatmul.f32.gmra.mxu0 %v2478
  %v2516 = vpop.f32.mrf.mxu0
  %v2517 = vadd.f32 %v2497, %v2516
  %2518 = vdwg.mxu0
  %2519 = vst [vmem:[%s11] sm:$0xff] %v2517
  // Predicated region
  $region46: #{grud_classifier_forward.1} parent=0 // pred_check
    _
  $region47: #{grud_classifier_forward.1} parent=0 // pred_check_branch
    %2521 = sbr.rel (0) target = $region49
  $region48: #{grud_classifier_forward.1} parent=0 // pred_region
    _
  $region49: #{grud_classifier_forward.1} parent=0 // pred_fallthru
    _
  // Predicated region
  $region50: #{grud_classifier_forward.1} parent=0 // pred_check
    _
  $region51: #{grud_classifier_forward.1} parent=0 // pred_check_branch
    %2523 = sbr.rel (0) target = $region53
  $region52: #{grud_classifier_forward.1} parent=0 // pred_region
    _
  $region53: #{grud_classifier_forward.1} parent=0 // pred_fallthru
    _

</llo_original>
